<compile_context>
chip_gen: v7x
topology: tpu7x:2x2x1
jax: 0.10.0
libtpu: 0.0.40
codegen_flags: <defaults>
</compile_context>

<pallas_src>
import functools

import jax
import jax.numpy as jnp
from jax.experimental import pallas as pl
from jax.experimental.pallas import tpu as pltpu


_VMEM_LIMIT = 32 * 1024 * 1024      # modest: kernels use a few MiB; safe on v7x
_TM_MAX = 512                       # GEMM M-tile cap
_TK_MAX = 2048                      # single-block K cap (all toy layers fit)
_TN_CANDIDATES = (256, 128)         # lane-dense output tile widths


def _round_up(x, m):
    return (x + m - 1) // m * m


def _pick_tn(cp):
    for t in _TN_CANDIDATES:
        if cp % t == 0:
            return t
    return cp


def _pick_tm(M, n_n):
    """M tile: multiple of 16 dividing (padded) M; prefer >= 2 grid blocks."""
    mp = _round_up(M, 16)
    cands = [c for c in (_TM_MAX, 256, 128, 64, 32, 16) if mp % c == 0]
    for c in cands:
        if n_n * (mp // c) >= 2:            # keep both v7x TensorCores busy
            return mp, c
    return mp, cands[0]


def _pick_stream_tm(mp):
    """Tile for the pure-streaming BN pass: big, but leaves >= 2 blocks."""
    best = None
    for c in (16, 32, 64, 128, 256, 512, 1024, 2048):
        if mp % c == 0 and mp // c >= 2:
            best = c
    return best if best is not None else mp


# ----------------------------------------------------------------------------
# Pass 1 kernels: conv-as-GEMM + bias (+ LeakyReLU or BN statistics).
# ----------------------------------------------------------------------------
def _gemm1_kernel(p_ref, w_ref, b_ref, *out_refs, act, emit_stats):
    # Single-K-block specialization: no scratch, no pl.when, no program_id.
    if emit_stats:
        o_ref, s_ref = out_refs
    else:
        (o_ref,) = out_refs
    y = jnp.dot(p_ref[...], w_ref[...], preferred_element_type=jnp.float32)
    y = y + b_ref[...]
    if emit_stats:
        s_ref[0, 0:1, :] = jnp.sum(y, axis=0, keepdims=True)
        s_ref[0, 1:2, :] = jnp.sum(y * y, axis=0, keepdims=True)
    if act == "leaky":
        y = jnp.where(y >= 0, y, 0.2 * y)                    # LeakyReLU(0.2)
    o_ref[...] = y.astype(o_ref.dtype)


def _gemmk_kernel(p_ref, w_ref, b_ref, *rest, n_k, act, emit_stats):
    # Generic K-tiled fallback (only used when K > _TK_MAX).  program_id is
    # read at the top level only — never inside a pl.when branch.
    if emit_stats:
        o_ref, s_ref, acc_ref = rest
    else:
        o_ref, acc_ref = rest
    k = pl.program_id(2)

    @pl.when(k == 0)
    def _():
        acc_ref[...] = jnp.zeros_like(acc_ref) + b_ref[...]   # bias folded in

    acc_ref[...] += jnp.dot(p_ref[...], w_ref[...],
                            preferred_element_type=jnp.float32)

    @pl.when(k == n_k - 1)
    def _():
        y = acc_ref[...]
        if emit_stats:
            s_ref[0, 0:1, :] = jnp.sum(y, axis=0, keepdims=True)
            s_ref[0, 1:2, :] = jnp.sum(y * y, axis=0, keepdims=True)
        if act == "leaky":
            y = jnp.where(y >= 0, y, 0.2 * y)
        o_ref[...] = y.astype(o_ref.dtype)


def conv_gemm(patches, w2d, bias, *, tm, tn, tk, act, emit_stats, out_dtype):
    mp, kp = patches.shape
    cp = w2d.shape[1]
    n_m, n_n, n_k = mp // tm, cp // tn, kp // tk

    y_shape = jax.ShapeDtypeStruct((mp, cp), out_dtype)
    s_shape = jax.ShapeDtypeStruct((n_m, 2, cp), jnp.float32)
    bytes_accessed = int(patches.size * patches.dtype.itemsize
                         + w2d.size * w2d.dtype.itemsize + cp * 4
                         + mp * cp * jnp.dtype(out_dtype).itemsize
                         + (n_m * 2 * cp * 4 if emit_stats else 0))
    cost = pl.CostEstimate(flops=2 * mp * kp * cp, transcendentals=0,
                           bytes_accessed=bytes_accessed)

    if n_k == 1:
        # Grid (Cout tiles, M tiles): weight/bias block indices are constant
        # along the inner M axis -> Pallas keeps them resident in VMEM.
        kern = functools.partial(_gemm1_kernel, act=act, emit_stats=emit_stats)
        in_specs = [
            pl.BlockSpec((tm, kp), lambda j, i: (i, 0)),     # patches (stream)
            pl.BlockSpec((kp, tn), lambda j, i: (0, j)),     # weights (resident)
            pl.BlockSpec((1, tn), lambda j, i: (0, j)),      # bias
        ]
        y_spec = pl.BlockSpec((tm, tn), lambda j, i: (i, j))
        s_spec = pl.BlockSpec((1, 2, tn), lambda j, i: (i, 0, j))
        grid = (n_n, n_m)
        scratch = []
        semantics = ("parallel", "parallel")
    else:
        kern = functools.partial(_gemmk_kernel, n_k=n_k, act=act,
                                 emit_stats=emit_stats)
        in_specs = [
            pl.BlockSpec((tm, tk), lambda i, j, k: (i, k)),
            pl.BlockSpec((tk, tn), lambda i, j, k: (k, j)),
            pl.BlockSpec((1, tn), lambda i, j, k: (0, j)),
        ]
        y_spec = pl.BlockSpec((tm, tn), lambda i, j, k: (i, j))
        s_spec = pl.BlockSpec((1, 2, tn), lambda i, j, k: (i, 0, j))
        grid = (n_m, n_n, n_k)
        scratch = [pltpu.VMEM((tm, tn), jnp.float32)]
        semantics = ("parallel", "parallel", "arbitrary")

    if emit_stats:
        out_shape, out_specs = (y_shape, s_shape), (y_spec, s_spec)
    else:
        out_shape, out_specs = y_shape, y_spec

    return pl.pallas_call(
        kern,
        out_shape=out_shape,
        grid_spec=pltpu.PrefetchScalarGridSpec(
            num_scalar_prefetch=0, grid=grid,
            in_specs=in_specs, out_specs=out_specs, scratch_shapes=scratch),
        compiler_params=pltpu.CompilerParams(
            dimension_semantics=semantics, vmem_limit_bytes=_VMEM_LIMIT),
        cost_estimate=cost,
    )(patches, w2d, bias)


# ----------------------------------------------------------------------------
# Pass 2 (BN layers): tiled per-channel affine (folded BN) + LeakyReLU.
# ----------------------------------------------------------------------------
def _bn_leaky_kernel(y_ref, sc_ref, sh_ref, o_ref):
    y = y_ref[...].astype(jnp.float32) * sc_ref[...] + sh_ref[...]
    o_ref[...] = jnp.where(y >= 0, y, 0.2 * y).astype(o_ref.dtype)


def bn_leaky(y, scale, shift, *, tm):
    mp, cp = y.shape
    cost = pl.CostEstimate(
        flops=3 * mp * cp, transcendentals=0,
        bytes_accessed=int(mp * cp * y.dtype.itemsize + 2 * cp * 4 + mp * cp * 2))
    return pl.pallas_call(
        _bn_leaky_kernel,
        out_shape=jax.ShapeDtypeStruct((mp, cp), jnp.bfloat16),
        grid_spec=pltpu.PrefetchScalarGridSpec(
            num_scalar_prefetch=0, grid=(mp // tm,),
            in_specs=[
                pl.BlockSpec((tm, cp), lambda i: (i, 0)),
                pl.BlockSpec((1, cp), lambda i: (0, 0)),
                pl.BlockSpec((1, cp), lambda i: (0, 0)),
            ],
            out_specs=pl.BlockSpec((tm, cp), lambda i: (i, 0))),
        compiler_params=pltpu.CompilerParams(
            dimension_semantics=("parallel",), vmem_limit_bytes=_VMEM_LIMIT),
        cost_estimate=cost,
    )(y, scale, shift)


# ----------------------------------------------------------------------------
# Glue: im2col patch extraction + per-layer / network wrappers.
# ----------------------------------------------------------------------------
def im2col(x_nhwc, ksize, stride, pad):
    # TODO(synk): fuse patch extraction into the Pallas pipeline (manual DMA of
    # overlapping input rows) so the im2col matrix is never materialized in HBM.
    if pad:
        x_nhwc = jnp.pad(x_nhwc, ((0, 0), (pad, pad), (pad, pad), (0, 0)))
    N, Hp, Wp, C = x_nhwc.shape
    Ho = (Hp - ksize) // stride + 1
    Wo = (Wp - ksize) // stride + 1
    cols = []
    for ky in range(ksize):
        for kx in range(ksize):
            cols.append(
                x_nhwc[:, ky:ky + stride * (Ho - 1) + 1:stride,
                       kx:kx + stride * (Wo - 1) + 1:stride, :])
    p = jnp.stack(cols, axis=3)                       # (N, Ho, Wo, K*K, C)
    return p.reshape(N * Ho * Wo, ksize * ksize * C), N, Ho, Wo


def disc_layer(x_nhwc, w_hwio, b, gamma, beta, *, stride, pad, use_bn, act):
    KH, KW, Cin, Cout = w_hwio.shape
    patches, N, Ho, Wo = im2col(x_nhwc.astype(jnp.bfloat16), KH, stride, pad)
    M, K = patches.shape
    w2d = w_hwio.reshape(KH * KW * Cin, Cout)

    if Cout < 8:
        # Degenerate GEMV head (Cout=1): XLA handles this better than a nearly
        # empty 128-padded Pallas GEMM (perf-review item).
        y = jnp.dot(patches, w2d.astype(jnp.bfloat16),
                    preferred_element_type=jnp.float32) + b
        y = jax.nn.sigmoid(y) if act == "sigmoid" else jnp.where(y >= 0, y, 0.2 * y)
        return y.reshape(N, Ho, Wo, Cout)

    assert act in ("leaky", "none")
    cp = _round_up(Cout, 128)                        # lane-dense output channels
    tn = _pick_tn(cp)
    mp, tm = _pick_tm(M, cp // tn)
    if K <= _TK_MAX:                                 # K = 16*Cin, multiple of 16:
        kp, tk = K, K                                # single full-K block, no pad
    else:
        tk = _TK_MAX
        kp = _round_up(K, tk)

    if mp != M or kp != K:
        patches = jnp.pad(patches, ((0, mp - M), (0, kp - K)))
    w2d = w2d.astype(jnp.bfloat16)
    if kp != K or cp != Cout:
        w2d = jnp.pad(w2d, ((0, kp - K), (0, cp - Cout)))
    b2 = jnp.pad(b, (0, cp - Cout)).reshape(1, cp).astype(jnp.float32)

    if use_bn:
        # Pass 1: conv + bias -> bf16 activations + per-M-tile f32 channel stats.
        y, stats = conv_gemm(patches, w2d, b2, tm=tm, tn=tn, tk=tk,
                             act="none", emit_stats=True, out_dtype=jnp.bfloat16)
        s = jnp.sum(stats, axis=0)                   # (2, cp) -- tiny reduction
        ssum, ssq = s[0], s[1]
        if mp > M:
            # Zero-padded rows contribute exactly `bias` each; correct in glue.
            pad_rows = float(mp - M)
            bvec = b2[0]
            ssum = ssum - pad_rows * bvec
            ssq = ssq - pad_rows * bvec * bvec
        mean = ssum / M
        var = jnp.maximum(ssq / M - mean * mean, 0.0)    # biased, torch-style
        g2 = jnp.pad(gamma, (0, cp - Cout)).astype(jnp.float32)
        bt2 = jnp.pad(beta, (0, cp - Cout)).astype(jnp.float32)
        scale = g2 * jax.lax.rsqrt(var + 1e-5)
        shift = bt2 - mean * scale
        # Pass 2: folded-BN affine + LeakyReLU (pure streaming, large tiles).
        y = bn_leaky(y, scale.reshape(1, cp), shift.reshape(1, cp),
                     tm=_pick_stream_tm(mp))
    else:
        y = conv_gemm(patches, w2d, b2, tm=tm, tn=tn, tk=tk,
                      act=act, emit_stats=False, out_dtype=jnp.bfloat16)

    if mp != M or cp != Cout:
        y = y[:M, :Cout]
    return y.reshape(N, Ho, Wo, Cout)


# (use_bn, activation, padding) for the 5 conv blocks of the Discriminator.
_LAYER_CFG = [
    (False, "leaky", 1),
    (True, "leaky", 1),
    (True, "leaky", 1),
    (True, "leaky", 1),
    (False, "sigmoid", 0),
]


def discriminator_forward(x_nchw, params):
    x = jnp.transpose(x_nchw, (0, 2, 3, 1))          # NCHW -> NHWC
    for (w, b, g, bt), (use_bn, act, pad) in zip(params, _LAYER_CFG):
        x = disc_layer(x, w, b, g, bt, stride=2, pad=pad,
                       use_bn=use_bn, act=act)
    return jnp.transpose(x, (0, 3, 1, 2))            # NHWC -> NCHW


# ----------------------------------------------------------------------------
# Pure-JAX reference mirroring the kernel's precision policy
# (bf16 MXU operands, f32 conv+BN stats, bf16 inter-layer activations).
# ----------------------------------------------------------------------------
def reference_forward(x_nchw, params):
    x = jnp.transpose(x_nchw, (0, 2, 3, 1))
    for (w, b, g, bt), (use_bn, act, pad) in zip(params, _LAYER_CFG):
        y = jax.lax.conv_general_dilated(
            x.astype(jnp.bfloat16), w.astype(jnp.bfloat16),
            window_strides=(2, 2), padding=[(pad, pad), (pad, pad)],
            dimension_numbers=("NHWC", "HWIO", "NHWC"),
            preferred_element_type=jnp.float32) + b
        if use_bn:
            yf = y.reshape(-1, y.shape[-1])
            mean = jnp.mean(yf, axis=0)
            var = jnp.maximum(jnp.mean(yf * yf, axis=0) - mean * mean, 0.0)
            scale = g * jax.lax.rsqrt(var + 1e-5)
            shift = bt - mean * scale
            y = y.astype(jnp.bfloat16).astype(jnp.float32) * scale + shift
            x = jnp.where(y >= 0, y, 0.2 * y).astype(jnp.bfloat16)
        elif act == "leaky":
            x = jnp.where(y >= 0, y, 0.2 * y).astype(jnp.bfloat16)
        else:
            x = jax.nn.sigmoid(y)
    return jnp.transpose(x, (0, 3, 1, 2))


# ----------------------------------------------------------------------------
# Deterministic parameter init (shapes from Discriminator(channels_img, f_d)).
# ----------------------------------------------------------------------------
def init_params(key, channels_img, features_d):
    dims = [
        (channels_img, features_d),
        (features_d, features_d * 4),
        (features_d * 4, features_d * 8),
        (features_d * 8, features_d * 16),
        (features_d * 16, 1),
    ]
    params = []
    for i, (cin, cout) in enumerate(dims):
        kw, kb = jax.random.split(jax.random.fold_in(key, i))
        w = 0.05 * jax.random.normal(kw, (4, 4, cin, cout), jnp.float32)
        b = 0.01 * jax.random.normal(kb, (cout,), jnp.float32)
        gamma = jnp.ones((cout,), jnp.float32)
        beta = jnp.zeros((cout,), jnp.float32)
        params.append((w, b, gamma, beta))
    return params


if __name__ == "__main__":
    # The architecture (five 4x4/stride-2 convs, final pad=0) needs a 64x64
    # input to end at a 1x1 output map.
    N, channels_img, features_d, H = 2, 3, 4, 64

    key = jax.random.PRNGKey(0)
    kx, k_par = jax.random.split(key)
    x = jax.random.normal(kx, (N, channels_img, H, H), jnp.float32)
    params = init_params(k_par, channels_img, features_d)

    out = jax.block_until_ready(jax.jit(discriminator_forward)(x, params))
    ref = jax.block_until_ready(reference_forward(x, params))

    assert out.shape == (N, 1, 1, 1), out.shape
    err = float(jnp.max(jnp.abs(out.astype(jnp.float32) - ref.astype(jnp.float32))))
    assert err < 1e-2, f"max abs error vs reference: {err}"
    print("KERNEL_OK")
</pallas_src>

<mosaic_0001>
module attributes {stable_mosaic.version = 11 : i64} {
  func.func @_gemm1_kernel(%arg0: i32, %arg1: i32, %arg2: memref<256x64xbf16, #tpu.memory_space<vmem>>, %arg3: memref<64x128xbf16, #tpu.memory_space<vmem>>, %arg4: memref<1x128xf32, #tpu.memory_space<vmem>>, %arg5: memref<256x128xbf16, #tpu.memory_space<vmem>>, %arg6: memref<1x2x128xf32, #tpu.memory_space<vmem>>) attributes {dimension_semantics = [#tpu.dimension_semantics<parallel>, #tpu.dimension_semantics<parallel>], iteration_bounds = array<i64: 1, 2>, scalar_prefetch = 0 : i64, scratch_operands = 0 : i64, tpu.core_type = #tpu.core_type<tc>, window_params = [{transform_indices = @transform_0, window_bounds = array<i64: 256, 64>}, {transform_indices = @transform_1, window_bounds = array<i64: 64, 128>}, {transform_indices = @transform_2, window_bounds = array<i64: 1, 128>}, {transform_indices = @transform_3, window_bounds = array<i64: 256, 128>}, {transform_indices = @transform_4, window_bounds = array<i64: 1, 2, 128>}]} {
    %c0 = arith.constant 0 : index
    %c0_0 = arith.constant 0 : index
    %0 = vector.load %arg2[%c0, %c0_0] : memref<256x64xbf16, #tpu.memory_space<vmem>>, vector<256x64xbf16>
    %c0_1 = arith.constant 0 : index
    %c0_2 = arith.constant 0 : index
    %1 = vector.load %arg3[%c0_1, %c0_2] : memref<64x128xbf16, #tpu.memory_space<vmem>>, vector<64x128xbf16>
    %cst = arith.constant dense<0.000000e+00> : vector<256x128xf32>
    %2 = tpu.matmul %0, %1, %cst {dimension_numbers = #tpu.dot_dimension_numbers<[1], [0], [0], [1], [0, 0, 1, 1], [], []>} : vector<256x64xbf16>, vector<64x128xbf16>, vector<256x128xf32> -> vector<256x128xf32>
    %c0_3 = arith.constant 0 : index
    %c0_4 = arith.constant 0 : index
    %3 = vector.load %arg4[%c0_3, %c0_4] : memref<1x128xf32, #tpu.memory_space<vmem>>, vector<1x128xf32>
    %4 = vector.broadcast %3 : vector<1x128xf32> to vector<256x128xf32>
    %5 = arith.addf %2, %4 : vector<256x128xf32>
    %cst_5 = arith.constant dense<0.000000e+00> : vector<128xf32>
    %6 = vector.multi_reduction <add>, %5, %cst_5 [0] : vector<256x128xf32> to vector<128xf32>
    %7 = vector.shape_cast %6 : vector<128xf32> to vector<1x128xf32>
    %c0_6 = arith.constant 0 : index
    %c0_7 = arith.constant 0 : index
    %c0_8 = arith.constant 0 : index
    %8 = vector.load %arg6[%c0_6, %c0_7, %c0_8] : memref<1x2x128xf32, #tpu.memory_space<vmem>>, vector<1x1x128xf32>
    %9 = vector.shape_cast %8 : vector<1x1x128xf32> to vector<1x128xf32>
    %10 = vector.shape_cast %7 : vector<1x128xf32> to vector<1x1x128xf32>
    tpu.vector_store %arg6[%c0_6, %c0_7, %c0_8], %10 {strides = array<i32>} : memref<1x2x128xf32, #tpu.memory_space<vmem>>, vector<1x1x128xf32>,
    %11 = arith.mulf %5, %5 : vector<256x128xf32>
    %cst_9 = arith.constant dense<0.000000e+00> : vector<128xf32>
    %12 = vector.multi_reduction <add>, %11, %cst_9 [0] : vector<256x128xf32> to vector<128xf32>
    %13 = vector.shape_cast %12 : vector<128xf32> to vector<1x128xf32>
    %c0_10 = arith.constant 0 : index
    %c1 = arith.constant 1 : index
    %c0_11 = arith.constant 0 : index
    %14 = vector.load %arg6[%c0_10, %c1, %c0_11] : memref<1x2x128xf32, #tpu.memory_space<vmem>>, vector<1x1x128xf32>
    %15 = vector.shape_cast %14 : vector<1x1x128xf32> to vector<1x128xf32>
    %16 = vector.shape_cast %13 : vector<1x128xf32> to vector<1x1x128xf32>
    tpu.vector_store %arg6[%c0_10, %c1, %c0_11], %16 {strides = array<i32>} : memref<1x2x128xf32, #tpu.memory_space<vmem>>, vector<1x1x128xf32>,
    %17 = arith.truncf %5 : vector<256x128xf32> to vector<256x128xbf16>
    %c0_12 = arith.constant 0 : index
    %c0_13 = arith.constant 0 : index
    %18 = vector.load %arg5[%c0_12, %c0_13] : memref<256x128xbf16, #tpu.memory_space<vmem>>, vector<256x128xbf16>
    tpu.vector_store %arg5[%c0_12, %c0_13], %17 {strides = array<i32>} : memref<256x128xbf16, #tpu.memory_space<vmem>>, vector<256x128xbf16>,
    return
  }
  func.func @transform_0(%arg0: i32, %arg1: i32) -> (i32, i32) {
    %c0_i32 = arith.constant 0 : i32
    %c0_i32_0 = arith.constant 0 : i32
    return %arg1, %c0_i32 : i32, i32
  }
  func.func @transform_1(%arg0: i32, %arg1: i32) -> (i32, i32) {
    %c0_i32 = arith.constant 0 : i32
    %c0_i32_0 = arith.constant 0 : i32
    return %c0_i32, %arg0 : i32, i32
  }
  func.func @transform_2(%arg0: i32, %arg1: i32) -> (i32, i32) {
    %c0_i32 = arith.constant 0 : i32
    %c0_i32_0 = arith.constant 0 : i32
    return %c0_i32, %arg0 : i32, i32
  }
  func.func @transform_3(%arg0: i32, %arg1: i32) -> (i32, i32) {
    %c0_i32 = arith.constant 0 : i32
    return %arg1, %arg0 : i32, i32
  }
  func.func @transform_4(%arg0: i32, %arg1: i32) -> (i32, i32, i32) {
    %c0_i32 = arith.constant 0 : i32
    %c0_i32_0 = arith.constant 0 : i32
    return %arg1, %c0_i32, %arg0 : i32, i32, i32
  }
}

module attributes {stable_mosaic.version = 11 : i64} {
  func.func @_bn_leaky_kernel(%arg0: i32, %arg1: memref<256x128xbf16, #tpu.memory_space<vmem>>, %arg2: memref<1x128xf32, #tpu.memory_space<vmem>>, %arg3: memref<1x128xf32, #tpu.memory_space<vmem>>, %arg4: memref<256x128xbf16, #tpu.memory_space<vmem>>) attributes {dimension_semantics = [#tpu.dimension_semantics<parallel>], iteration_bounds = array<i64: 2>, scalar_prefetch = 0 : i64, scratch_operands = 0 : i64, tpu.core_type = #tpu.core_type<tc>, window_params = [{transform_indices = @transform_0, window_bounds = array<i64: 256, 128>}, {pipeline_mode = #tpu.pipeline_mode<synchronous>, transform_indices = @transform_1, window_bounds = array<i64: 1, 128>}, {pipeline_mode = #tpu.pipeline_mode<synchronous>, transform_indices = @transform_2, window_bounds = array<i64: 1, 128>}, {transform_indices = @transform_3, window_bounds = array<i64: 256, 128>}]} {
    %c0 = arith.constant 0 : index
    %c0_0 = arith.constant 0 : index
    %0 = vector.load %arg1[%c0, %c0_0] : memref<256x128xbf16, #tpu.memory_space<vmem>>, vector<256x128xbf16>
    %1 = arith.extf %0 : vector<256x128xbf16> to vector<256x128xf32>
    %c0_1 = arith.constant 0 : index
    %c0_2 = arith.constant 0 : index
    %2 = vector.load %arg2[%c0_1, %c0_2] : memref<1x128xf32, #tpu.memory_space<vmem>>, vector<1x128xf32>
    %3 = vector.broadcast %2 : vector<1x128xf32> to vector<256x128xf32>
    %4 = arith.mulf %1, %3 : vector<256x128xf32>
    %c0_3 = arith.constant 0 : index
    %c0_4 = arith.constant 0 : index
    %5 = vector.load %arg3[%c0_3, %c0_4] : memref<1x128xf32, #tpu.memory_space<vmem>>, vector<1x128xf32>
    %6 = vector.broadcast %5 : vector<1x128xf32> to vector<256x128xf32>
    %7 = arith.addf %4, %6 : vector<256x128xf32>
    %cst = arith.constant 0.000000e+00 : f32
    %8 = vector.broadcast %cst : f32 to vector<256x128xf32>
    %9 = arith.cmpf oge, %7, %8 : vector<256x128xf32>
    %cst_5 = arith.constant 2.000000e-01 : f32
    %10 = vector.broadcast %cst_5 : f32 to vector<256x128xf32>
    %11 = arith.mulf %10, %7 : vector<256x128xf32>
    %12 = arith.select %9, %7, %11 : vector<256x128xi1>, vector<256x128xf32>
    %13 = arith.truncf %12 : vector<256x128xf32> to vector<256x128xbf16>
    %c0_6 = arith.constant 0 : index
    %c0_7 = arith.constant 0 : index
    %14 = vector.load %arg4[%c0_6, %c0_7] : memref<256x128xbf16, #tpu.memory_space<vmem>>, vector<256x128xbf16>
    tpu.vector_store %arg4[%c0_6, %c0_7], %13 {strides = array<i32>} : memref<256x128xbf16, #tpu.memory_space<vmem>>, vector<256x128xbf16>,
    return
  }
  func.func @transform_0(%arg0: i32) -> (i32, i32) {
    %c0_i32 = arith.constant 0 : i32
    %c0_i32_0 = arith.constant 0 : i32
    return %arg0, %c0_i32 : i32, i32
  }
  func.func @transform_1(%arg0: i32) -> (i32, i32) {
    %c0_i32 = arith.constant 0 : i32
    %c0_i32_0 = arith.constant 0 : i32
    %c0_i32_1 = arith.constant 0 : i32
    return %c0_i32, %c0_i32_0 : i32, i32
  }
  func.func @transform_2(%arg0: i32) -> (i32, i32) {
    %c0_i32 = arith.constant 0 : i32
    %c0_i32_0 = arith.constant 0 : i32
    %c0_i32_1 = arith.constant 0 : i32
    return %c0_i32, %c0_i32_0 : i32, i32
  }
  func.func @transform_3(%arg0: i32) -> (i32, i32) {
    %c0_i32 = arith.constant 0 : i32
    %c0_i32_0 = arith.constant 0 : i32
    return %arg0, %c0_i32 : i32, i32
  }
}

module attributes {stable_mosaic.version = 11 : i64} {
  func.func @_gemm1_kernel(%arg0: i32, %arg1: i32, %arg2: memref<64x256xbf16, #tpu.memory_space<vmem>>, %arg3: memref<256x128xbf16, #tpu.memory_space<vmem>>, %arg4: memref<1x128xf32, #tpu.memory_space<vmem>>, %arg5: memref<64x128xbf16, #tpu.memory_space<vmem>>, %arg6: memref<1x2x128xf32, #tpu.memory_space<vmem>>) attributes {dimension_semantics = [#tpu.dimension_semantics<parallel>, #tpu.dimension_semantics<parallel>], iteration_bounds = array<i64: 1, 2>, scalar_prefetch = 0 : i64, scratch_operands = 0 : i64, tpu.core_type = #tpu.core_type<tc>, window_params = [{transform_indices = @transform_0, window_bounds = array<i64: 64, 256>}, {transform_indices = @transform_1, window_bounds = array<i64: 256, 128>}, {transform_indices = @transform_2, window_bounds = array<i64: 1, 128>}, {transform_indices = @transform_3, window_bounds = array<i64: 64, 128>}, {transform_indices = @transform_4, window_bounds = array<i64: 1, 2, 128>}]} {
    %c0 = arith.constant 0 : index
    %c0_0 = arith.constant 0 : index
    %0 = vector.load %arg2[%c0, %c0_0] : memref<64x256xbf16, #tpu.memory_space<vmem>>, vector<64x256xbf16>
    %c0_1 = arith.constant 0 : index
    %c0_2 = arith.constant 0 : index
    %1 = vector.load %arg3[%c0_1, %c0_2] : memref<256x128xbf16, #tpu.memory_space<vmem>>, vector<256x128xbf16>
    %cst = arith.constant dense<0.000000e+00> : vector<64x128xf32>
    %2 = tpu.matmul %0, %1, %cst {dimension_numbers = #tpu.dot_dimension_numbers<[1], [0], [0], [1], [0, 0, 1, 1], [], []>} : vector<64x256xbf16>, vector<256x128xbf16>, vector<64x128xf32> -> vector<64x128xf32>
    %c0_3 = arith.constant 0 : index
    %c0_4 = arith.constant 0 : index
    %3 = vector.load %arg4[%c0_3, %c0_4] : memref<1x128xf32, #tpu.memory_space<vmem>>, vector<1x128xf32>
    %4 = vector.broadcast %3 : vector<1x128xf32> to vector<64x128xf32>
    %5 = arith.addf %2, %4 : vector<64x128xf32>
    %cst_5 = arith.constant dense<0.000000e+00> : vector<128xf32>
    %6 = vector.multi_reduction <add>, %5, %cst_5 [0] : vector<64x128xf32> to vector<128xf32>
    %7 = vector.shape_cast %6 : vector<128xf32> to vector<1x128xf32>
    %c0_6 = arith.constant 0 : index
    %c0_7 = arith.constant 0 : index
    %c0_8 = arith.constant 0 : index
    %8 = vector.load %arg6[%c0_6, %c0_7, %c0_8] : memref<1x2x128xf32, #tpu.memory_space<vmem>>, vector<1x1x128xf32>
    %9 = vector.shape_cast %8 : vector<1x1x128xf32> to vector<1x128xf32>
    %10 = vector.shape_cast %7 : vector<1x128xf32> to vector<1x1x128xf32>
    tpu.vector_store %arg6[%c0_6, %c0_7, %c0_8], %10 {strides = array<i32>} : memref<1x2x128xf32, #tpu.memory_space<vmem>>, vector<1x1x128xf32>,
    %11 = arith.mulf %5, %5 : vector<64x128xf32>
    %cst_9 = arith.constant dense<0.000000e+00> : vector<128xf32>
    %12 = vector.multi_reduction <add>, %11, %cst_9 [0] : vector<64x128xf32> to vector<128xf32>
    %13 = vector.shape_cast %12 : vector<128xf32> to vector<1x128xf32>
    %c0_10 = arith.constant 0 : index
    %c1 = arith.constant 1 : index
    %c0_11 = arith.constant 0 : index
    %14 = vector.load %arg6[%c0_10, %c1, %c0_11] : memref<1x2x128xf32, #tpu.memory_space<vmem>>, vector<1x1x128xf32>
    %15 = vector.shape_cast %14 : vector<1x1x128xf32> to vector<1x128xf32>
    %16 = vector.shape_cast %13 : vector<1x128xf32> to vector<1x1x128xf32>
    tpu.vector_store %arg6[%c0_10, %c1, %c0_11], %16 {strides = array<i32>} : memref<1x2x128xf32, #tpu.memory_space<vmem>>, vector<1x1x128xf32>,
    %17 = arith.truncf %5 : vector<64x128xf32> to vector<64x128xbf16>
    %c0_12 = arith.constant 0 : index
    %c0_13 = arith.constant 0 : index
    %18 = vector.load %arg5[%c0_12, %c0_13] : memref<64x128xbf16, #tpu.memory_space<vmem>>, vector<64x128xbf16>
    tpu.vector_store %arg5[%c0_12, %c0_13], %17 {strides = array<i32>} : memref<64x128xbf16, #tpu.memory_space<vmem>>, vector<64x128xbf16>,
    return
  }
  func.func @transform_0(%arg0: i32, %arg1: i32) -> (i32, i32) {
    %c0_i32 = arith.constant 0 : i32
    %c0_i32_0 = arith.constant 0 : i32
    return %arg1, %c0_i32 : i32, i32
  }
  func.func @transform_1(%arg0: i32, %arg1: i32) -> (i32, i32) {
    %c0_i32 = arith.constant 0 : i32
    %c0_i32_0 = arith.constant 0 : i32
    return %c0_i32, %arg0 : i32, i32
  }
  func.func @transform_2(%arg0: i32, %arg1: i32) -> (i32, i32) {
    %c0_i32 = arith.constant 0 : i32
    %c0_i32_0 = arith.constant 0 : i32
    return %c0_i32, %arg0 : i32, i32
  }
  func.func @transform_3(%arg0: i32, %arg1: i32) -> (i32, i32) {
    %c0_i32 = arith.constant 0 : i32
    return %arg1, %arg0 : i32, i32
  }
  func.func @transform_4(%arg0: i32, %arg1: i32) -> (i32, i32, i32) {
    %c0_i32 = arith.constant 0 : i32
    %c0_i32_0 = arith.constant 0 : i32
    return %arg1, %c0_i32, %arg0 : i32, i32, i32
  }
}

module attributes {stable_mosaic.version = 11 : i64} {
  func.func @_bn_leaky_kernel(%arg0: i32, %arg1: memref<64x128xbf16, #tpu.memory_space<vmem>>, %arg2: memref<1x128xf32, #tpu.memory_space<vmem>>, %arg3: memref<1x128xf32, #tpu.memory_space<vmem>>, %arg4: memref<64x128xbf16, #tpu.memory_space<vmem>>) attributes {dimension_semantics = [#tpu.dimension_semantics<parallel>], iteration_bounds = array<i64: 2>, scalar_prefetch = 0 : i64, scratch_operands = 0 : i64, tpu.core_type = #tpu.core_type<tc>, window_params = [{transform_indices = @transform_0, window_bounds = array<i64: 64, 128>}, {pipeline_mode = #tpu.pipeline_mode<synchronous>, transform_indices = @transform_1, window_bounds = array<i64: 1, 128>}, {pipeline_mode = #tpu.pipeline_mode<synchronous>, transform_indices = @transform_2, window_bounds = array<i64: 1, 128>}, {transform_indices = @transform_3, window_bounds = array<i64: 64, 128>}]} {
    %c0 = arith.constant 0 : index
    %c0_0 = arith.constant 0 : index
    %0 = vector.load %arg1[%c0, %c0_0] : memref<64x128xbf16, #tpu.memory_space<vmem>>, vector<64x128xbf16>
    %1 = arith.extf %0 : vector<64x128xbf16> to vector<64x128xf32>
    %c0_1 = arith.constant 0 : index
    %c0_2 = arith.constant 0 : index
    %2 = vector.load %arg2[%c0_1, %c0_2] : memref<1x128xf32, #tpu.memory_space<vmem>>, vector<1x128xf32>
    %3 = vector.broadcast %2 : vector<1x128xf32> to vector<64x128xf32>
    %4 = arith.mulf %1, %3 : vector<64x128xf32>
    %c0_3 = arith.constant 0 : index
    %c0_4 = arith.constant 0 : index
    %5 = vector.load %arg3[%c0_3, %c0_4] : memref<1x128xf32, #tpu.memory_space<vmem>>, vector<1x128xf32>
    %6 = vector.broadcast %5 : vector<1x128xf32> to vector<64x128xf32>
    %7 = arith.addf %4, %6 : vector<64x128xf32>
    %cst = arith.constant 0.000000e+00 : f32
    %8 = vector.broadcast %cst : f32 to vector<64x128xf32>
    %9 = arith.cmpf oge, %7, %8 : vector<64x128xf32>
    %cst_5 = arith.constant 2.000000e-01 : f32
    %10 = vector.broadcast %cst_5 : f32 to vector<64x128xf32>
    %11 = arith.mulf %10, %7 : vector<64x128xf32>
    %12 = arith.select %9, %7, %11 : vector<64x128xi1>, vector<64x128xf32>
    %13 = arith.truncf %12 : vector<64x128xf32> to vector<64x128xbf16>
    %c0_6 = arith.constant 0 : index
    %c0_7 = arith.constant 0 : index
    %14 = vector.load %arg4[%c0_6, %c0_7] : memref<64x128xbf16, #tpu.memory_space<vmem>>, vector<64x128xbf16>
    tpu.vector_store %arg4[%c0_6, %c0_7], %13 {strides = array<i32>} : memref<64x128xbf16, #tpu.memory_space<vmem>>, vector<64x128xbf16>,
    return
  }
  func.func @transform_0(%arg0: i32) -> (i32, i32) {
    %c0_i32 = arith.constant 0 : i32
    %c0_i32_0 = arith.constant 0 : i32
    return %arg0, %c0_i32 : i32, i32
  }
  func.func @transform_1(%arg0: i32) -> (i32, i32) {
    %c0_i32 = arith.constant 0 : i32
    %c0_i32_0 = arith.constant 0 : i32
    %c0_i32_1 = arith.constant 0 : i32
    return %c0_i32, %c0_i32_0 : i32, i32
  }
  func.func @transform_2(%arg0: i32) -> (i32, i32) {
    %c0_i32 = arith.constant 0 : i32
    %c0_i32_0 = arith.constant 0 : i32
    %c0_i32_1 = arith.constant 0 : i32
    return %c0_i32, %c0_i32_0 : i32, i32
  }
  func.func @transform_3(%arg0: i32) -> (i32, i32) {
    %c0_i32 = arith.constant 0 : i32
    %c0_i32_0 = arith.constant 0 : i32
    return %arg0, %c0_i32 : i32, i32
  }
}

module attributes {stable_mosaic.version = 11 : i64} {
  func.func @_gemm1_kernel(%arg0: i32, %arg1: i32, %arg2: memref<16x512xbf16, #tpu.memory_space<vmem>>, %arg3: memref<512x128xbf16, #tpu.memory_space<vmem>>, %arg4: memref<1x128xf32, #tpu.memory_space<vmem>>, %arg5: memref<16x128xbf16, #tpu.memory_space<vmem>>, %arg6: memref<1x2x128xf32, #tpu.memory_space<vmem>>) attributes {dimension_semantics = [#tpu.dimension_semantics<parallel>, #tpu.dimension_semantics<parallel>], iteration_bounds = array<i64: 1, 2>, scalar_prefetch = 0 : i64, scratch_operands = 0 : i64, tpu.core_type = #tpu.core_type<tc>, window_params = [{transform_indices = @transform_0, window_bounds = array<i64: 16, 512>}, {transform_indices = @transform_1, window_bounds = array<i64: 512, 128>}, {transform_indices = @transform_2, window_bounds = array<i64: 1, 128>}, {transform_indices = @transform_3, window_bounds = array<i64: 16, 128>}, {transform_indices = @transform_4, window_bounds = array<i64: 1, 2, 128>}]} {
    %c0 = arith.constant 0 : index
    %c0_0 = arith.constant 0 : index
    %0 = vector.load %arg2[%c0, %c0_0] : memref<16x512xbf16, #tpu.memory_space<vmem>>, vector<16x512xbf16>
    %c0_1 = arith.constant 0 : index
    %c0_2 = arith.constant 0 : index
    %1 = vector.load %arg3[%c0_1, %c0_2] : memref<512x128xbf16, #tpu.memory_space<vmem>>, vector<512x128xbf16>
    %cst = arith.constant dense<0.000000e+00> : vector<16x128xf32>
    %2 = tpu.matmul %0, %1, %cst {dimension_numbers = #tpu.dot_dimension_numbers<[1], [0], [0], [1], [0, 0, 1, 1], [], []>} : vector<16x512xbf16>, vector<512x128xbf16>, vector<16x128xf32> -> vector<16x128xf32>
    %c0_3 = arith.constant 0 : index
    %c0_4 = arith.constant 0 : index
    %3 = vector.load %arg4[%c0_3, %c0_4] : memref<1x128xf32, #tpu.memory_space<vmem>>, vector<1x128xf32>
    %4 = vector.broadcast %3 : vector<1x128xf32> to vector<16x128xf32>
    %5 = arith.addf %2, %4 : vector<16x128xf32>
    %cst_5 = arith.constant dense<0.000000e+00> : vector<128xf32>
    %6 = vector.multi_reduction <add>, %5, %cst_5 [0] : vector<16x128xf32> to vector<128xf32>
    %7 = vector.shape_cast %6 : vector<128xf32> to vector<1x128xf32>
    %c0_6 = arith.constant 0 : index
    %c0_7 = arith.constant 0 : index
    %c0_8 = arith.constant 0 : index
    %8 = vector.load %arg6[%c0_6, %c0_7, %c0_8] : memref<1x2x128xf32, #tpu.memory_space<vmem>>, vector<1x1x128xf32>
    %9 = vector.shape_cast %8 : vector<1x1x128xf32> to vector<1x128xf32>
    %10 = vector.shape_cast %7 : vector<1x128xf32> to vector<1x1x128xf32>
    tpu.vector_store %arg6[%c0_6, %c0_7, %c0_8], %10 {strides = array<i32>} : memref<1x2x128xf32, #tpu.memory_space<vmem>>, vector<1x1x128xf32>,
    %11 = arith.mulf %5, %5 : vector<16x128xf32>
    %cst_9 = arith.constant dense<0.000000e+00> : vector<128xf32>
    %12 = vector.multi_reduction <add>, %11, %cst_9 [0] : vector<16x128xf32> to vector<128xf32>
    %13 = vector.shape_cast %12 : vector<128xf32> to vector<1x128xf32>
    %c0_10 = arith.constant 0 : index
    %c1 = arith.constant 1 : index
    %c0_11 = arith.constant 0 : index
    %14 = vector.load %arg6[%c0_10, %c1, %c0_11] : memref<1x2x128xf32, #tpu.memory_space<vmem>>, vector<1x1x128xf32>
    %15 = vector.shape_cast %14 : vector<1x1x128xf32> to vector<1x128xf32>
    %16 = vector.shape_cast %13 : vector<1x128xf32> to vector<1x1x128xf32>
    tpu.vector_store %arg6[%c0_10, %c1, %c0_11], %16 {strides = array<i32>} : memref<1x2x128xf32, #tpu.memory_space<vmem>>, vector<1x1x128xf32>,
    %17 = arith.truncf %5 : vector<16x128xf32> to vector<16x128xbf16>
    %c0_12 = arith.constant 0 : index
    %c0_13 = arith.constant 0 : index
    %18 = vector.load %arg5[%c0_12, %c0_13] : memref<16x128xbf16, #tpu.memory_space<vmem>>, vector<16x128xbf16>
    tpu.vector_store %arg5[%c0_12, %c0_13], %17 {strides = array<i32>} : memref<16x128xbf16, #tpu.memory_space<vmem>>, vector<16x128xbf16>,
    return
  }
  func.func @transform_0(%arg0: i32, %arg1: i32) -> (i32, i32) {
    %c0_i32 = arith.constant 0 : i32
    %c0_i32_0 = arith.constant 0 : i32
    return %arg1, %c0_i32 : i32, i32
  }
  func.func @transform_1(%arg0: i32, %arg1: i32) -> (i32, i32) {
    %c0_i32 = arith.constant 0 : i32
    %c0_i32_0 = arith.constant 0 : i32
    return %c0_i32, %arg0 : i32, i32
  }
  func.func @transform_2(%arg0: i32, %arg1: i32) -> (i32, i32) {
    %c0_i32 = arith.constant 0 : i32
    %c0_i32_0 = arith.constant 0 : i32
    return %c0_i32, %arg0 : i32, i32
  }
  func.func @transform_3(%arg0: i32, %arg1: i32) -> (i32, i32) {
    %c0_i32 = arith.constant 0 : i32
    return %arg1, %arg0 : i32, i32
  }
  func.func @transform_4(%arg0: i32, %arg1: i32) -> (i32, i32, i32) {
    %c0_i32 = arith.constant 0 : i32
    %c0_i32_0 = arith.constant 0 : i32
    return %arg1, %c0_i32, %arg0 : i32, i32, i32
  }
}

module attributes {stable_mosaic.version = 11 : i64} {
  func.func @_bn_leaky_kernel(%arg0: i32, %arg1: memref<16x128xbf16, #tpu.memory_space<vmem>>, %arg2: memref<1x128xf32, #tpu.memory_space<vmem>>, %arg3: memref<1x128xf32, #tpu.memory_space<vmem>>, %arg4: memref<16x128xbf16, #tpu.memory_space<vmem>>) attributes {dimension_semantics = [#tpu.dimension_semantics<parallel>], iteration_bounds = array<i64: 2>, scalar_prefetch = 0 : i64, scratch_operands = 0 : i64, tpu.core_type = #tpu.core_type<tc>, window_params = [{transform_indices = @transform_0, window_bounds = array<i64: 16, 128>}, {pipeline_mode = #tpu.pipeline_mode<synchronous>, transform_indices = @transform_1, window_bounds = array<i64: 1, 128>}, {pipeline_mode = #tpu.pipeline_mode<synchronous>, transform_indices = @transform_2, window_bounds = array<i64: 1, 128>}, {transform_indices = @transform_3, window_bounds = array<i64: 16, 128>}]} {
    %c0 = arith.constant 0 : index
    %c0_0 = arith.constant 0 : index
    %0 = vector.load %arg1[%c0, %c0_0] : memref<16x128xbf16, #tpu.memory_space<vmem>>, vector<16x128xbf16>
    %1 = arith.extf %0 : vector<16x128xbf16> to vector<16x128xf32>
    %c0_1 = arith.constant 0 : index
    %c0_2 = arith.constant 0 : index
    %2 = vector.load %arg2[%c0_1, %c0_2] : memref<1x128xf32, #tpu.memory_space<vmem>>, vector<1x128xf32>
    %3 = vector.broadcast %2 : vector<1x128xf32> to vector<16x128xf32>
    %4 = arith.mulf %1, %3 : vector<16x128xf32>
    %c0_3 = arith.constant 0 : index
    %c0_4 = arith.constant 0 : index
    %5 = vector.load %arg3[%c0_3, %c0_4] : memref<1x128xf32, #tpu.memory_space<vmem>>, vector<1x128xf32>
    %6 = vector.broadcast %5 : vector<1x128xf32> to vector<16x128xf32>
    %7 = arith.addf %4, %6 : vector<16x128xf32>
    %cst = arith.constant 0.000000e+00 : f32
    %8 = vector.broadcast %cst : f32 to vector<16x128xf32>
    %9 = arith.cmpf oge, %7, %8 : vector<16x128xf32>
    %cst_5 = arith.constant 2.000000e-01 : f32
    %10 = vector.broadcast %cst_5 : f32 to vector<16x128xf32>
    %11 = arith.mulf %10, %7 : vector<16x128xf32>
    %12 = arith.select %9, %7, %11 : vector<16x128xi1>, vector<16x128xf32>
    %13 = arith.truncf %12 : vector<16x128xf32> to vector<16x128xbf16>
    %c0_6 = arith.constant 0 : index
    %c0_7 = arith.constant 0 : index
    %14 = vector.load %arg4[%c0_6, %c0_7] : memref<16x128xbf16, #tpu.memory_space<vmem>>, vector<16x128xbf16>
    tpu.vector_store %arg4[%c0_6, %c0_7], %13 {strides = array<i32>} : memref<16x128xbf16, #tpu.memory_space<vmem>>, vector<16x128xbf16>,
    return
  }
  func.func @transform_0(%arg0: i32) -> (i32, i32) {
    %c0_i32 = arith.constant 0 : i32
    %c0_i32_0 = arith.constant 0 : i32
    return %arg0, %c0_i32 : i32, i32
  }
  func.func @transform_1(%arg0: i32) -> (i32, i32) {
    %c0_i32 = arith.constant 0 : i32
    %c0_i32_0 = arith.constant 0 : i32
    %c0_i32_1 = arith.constant 0 : i32
    return %c0_i32, %c0_i32_0 : i32, i32
  }
  func.func @transform_2(%arg0: i32) -> (i32, i32) {
    %c0_i32 = arith.constant 0 : i32
    %c0_i32_0 = arith.constant 0 : i32
    %c0_i32_1 = arith.constant 0 : i32
    return %c0_i32, %c0_i32_0 : i32, i32
  }
  func.func @transform_3(%arg0: i32) -> (i32, i32) {
    %c0_i32 = arith.constant 0 : i32
    %c0_i32_0 = arith.constant 0 : i32
    return %arg0, %c0_i32 : i32, i32
  }
}

</mosaic_0001>

<llo_original>
// kernel: discriminator_forward.7
$region0: #{discriminator_forward.7}
  #allocation0 [shape = 'u32[]', space=smem, size = 0x4, offset = 0x4, fixed_abs, tag = 'smem constant byte address 0x4 - core index']
  #allocation1 [shape = 'u32[144,128]{1,0:T(1,128)}', space=vmem, size = 0x12000, scoped, tag = 'internal scratch']
  %s0 = inlined_call_operand.vmem [shape: bf16[512,128], index: 0, kind: input, shape index: {}]
  %s1 = inlined_call_operand.vmem [shape: f32[1,128], index: 1, kind: input, shape index: {}]
  %s2 = inlined_call_operand.vmem [shape: f32[1,128], index: 2, kind: input, shape index: {}]
  %s3 = inlined_call_operand.vmem [shape: bf16[512,128], index: 3, kind: output, shape index: {}]
  %s4 = sld [smem:[#allocation0]]
  $region45: #{discriminator_forward.7} parent=0
    _
  %s6 = ssub.s32 1, %s4
  %s7 = scalar_select 0, %s6, %s4
  loop: start=0, step=1, limit=4
  $region2: #{discriminator_forward.7} parent=0 // loop_pre_header
    _
  $region3: #{discriminator_forward.7} parent=0 // loop_header
    %s9 = sphi 0, %s13
    %p10 = scmp.ge.s32.totalorder %s9, 4
    %s19 = sphi 0, %s21
    %s22 = sphi 0, %s19
    %s23 = sphi 0, %s22
    %s39 = sphi 0, %s23
    %s43 = sphi 0, %s43
    %s45 = sphi 0, %s43
    %s46 = sphi 0, %s45
    %s60 = sphi 0, %s46
    %s64 = sphi 0, %s64
    %s66 = sphi 0, %s64
    %s67 = sphi 0, %s66
    %s81 = sphi 0, %s67
    %s87 = sphi 0, %s89
    %s90 = sphi 0, %s87
    %s91 = sphi 0, %s90
    %s107 = sphi 0, %s91
  $region4: #{discriminator_forward.7} parent=0 // loop_header_branch
    %12 = sbr.rel (%p10) target = $region8
  $region5: #{discriminator_forward.7} parent=0 // loop_body
    %s14 = ssub.s32 %s9, 1
    %s15 = ssub.s32 %s9, 2
    %s16 = sadd.s32 %s9, 1
    %s17 = ssub.s32 %s9, %s16
    %p18 = scmp.eq.s32.totalorder %s17, 0
    %s20 = sadd.s32 %s19, 1
    %s21 = scalar_select %p18, %s19, %s20
    %p24 = pneg %p18
    %p25 = scmp.eq.s32.totalorder %s9, 1
    %p26 = por %p24, %p25
    %p27 = scmp.ne.s32.totalorder %s19, %s22
    %p28 = scmp.eq.s32.totalorder %s9, 0
    %p29 = por %p27, %p28
    %p30 = scmp.ne.s32.totalorder %s19, %s22
    %p31 = scmp.eq.s32.totalorder %s14, 1
    %p32 = por %p30, %p31
    %p33 = scmp.ne.s32.totalorder %s22, %s23
    %p34 = scmp.eq.s32.totalorder %s14, 0
    %p35 = por %p33, %p34
    %p36 = scmp.ne.s32.totalorder %s22, %s23
    %p37 = scmp.eq.s32.totalorder %s15, 1
    %p38 = por %p36, %p37
    %p40 = scmp.ne.s32.totalorder %s23, %s39
    %p41 = scmp.eq.s32.totalorder %s15, 0
    %p42 = por %p40, %p41
    %s44 = sadd.s32 %s43, 1
    %p47 = scmp.eq.s32.totalorder %s9, 1
    %p48 = scmp.ne.s32.totalorder %s43, %s45
    %p49 = scmp.eq.s32.totalorder %s9, 0
    %p50 = por %p48, %p49
    %p51 = scmp.ne.s32.totalorder %s43, %s45
    %p52 = scmp.eq.s32.totalorder %s14, 1
    %p53 = por %p51, %p52
    %p54 = scmp.ne.s32.totalorder %s45, %s46
    %p55 = scmp.eq.s32.totalorder %s14, 0
    %p56 = por %p54, %p55
    %p57 = scmp.ne.s32.totalorder %s45, %s46
    %p58 = scmp.eq.s32.totalorder %s15, 1
    %p59 = por %p57, %p58
    %p61 = scmp.ne.s32.totalorder %s46, %s60
    %p62 = scmp.eq.s32.totalorder %s15, 0
    %p63 = por %p61, %p62
    %s65 = sadd.s32 %s64, 1
    %p68 = scmp.eq.s32.totalorder %s9, 1
    %p69 = scmp.ne.s32.totalorder %s64, %s66
    %p70 = scmp.eq.s32.totalorder %s9, 0
    %p71 = por %p69, %p70
    %p72 = scmp.ne.s32.totalorder %s64, %s66
    %p73 = scmp.eq.s32.totalorder %s14, 1
    %p74 = por %p72, %p73
    %p75 = scmp.ne.s32.totalorder %s66, %s67
    %p76 = scmp.eq.s32.totalorder %s14, 0
    %p77 = por %p75, %p76
    %p78 = scmp.ne.s32.totalorder %s66, %s67
    %p79 = scmp.eq.s32.totalorder %s15, 1
    %p80 = por %p78, %p79
    %p82 = scmp.ne.s32.totalorder %s67, %s81
    %p83 = scmp.eq.s32.totalorder %s15, 0
    %p84 = por %p82, %p83
    %s85 = ssub.s32 %s9, %s16
    %p86 = scmp.eq.s32.totalorder %s85, 0
    %s88 = sadd.s32 %s87, 1
    %s89 = scalar_select %p86, %s87, %s88
    %p92 = pneg %p86
    %p93 = scmp.eq.s32.totalorder %s9, 1
    %p94 = por %p92, %p93
    %p95 = scmp.ne.s32.totalorder %s87, %s90
    %p96 = scmp.eq.s32.totalorder %s9, 0
    %p97 = por %p95, %p96
    %p98 = scmp.ne.s32.totalorder %s87, %s90
    %p99 = scmp.eq.s32.totalorder %s14, 1
    %p100 = por %p98, %p99
    %p101 = scmp.ne.s32.totalorder %s90, %s91
    %p102 = scmp.eq.s32.totalorder %s14, 0
    %p103 = por %p101, %p102
    %p104 = scmp.ne.s32.totalorder %s90, %s91
    %p105 = scmp.eq.s32.totalorder %s15, 1
    %p106 = por %p104, %p105
    %p108 = scmp.ne.s32.totalorder %s91, %s107
    %p109 = scmp.eq.s32.totalorder %s15, 0
    %p110 = por %p108, %p109
    %p111 = scmp.le.s32.totalorder 1, %s9
    %p112 = scmp.lt.s32.totalorder %s9, 3
    %p113 = pnand %p111, %p112
    %p114 = pneg %p113
    // Predicated region
    $region9: #{discriminator_forward.7} parent=5 // pred_check
      _
    $region10: #{discriminator_forward.7} parent=5 // pred_check_branch
      %116 = sbr.rel (%p113) target = $region12
    $region11: #{discriminator_forward.7} parent=5 // pred_region
      %s117 = ssub.s32 %s9, 1
      // Predicated region
      $region13: #{discriminator_forward.7} parent=11 // pred_check
        %p118 = pneg %p56
      $region14: #{discriminator_forward.7} parent=11 // pred_check_branch
        %120 = sbr.rel (%p118) target = $region16
      $region15: #{discriminator_forward.7} parent=11 // pred_region
        _
      $region16: #{discriminator_forward.7} parent=11 // pred_fallthru
        _
      // Predicated region
      $region17: #{discriminator_forward.7} parent=11 // pred_check
        %p121 = pneg %p77
      $region18: #{discriminator_forward.7} parent=11 // pred_check_branch
        %123 = sbr.rel (%p121) target = $region20
      $region19: #{discriminator_forward.7} parent=11 // pred_region
        _
      $region20: #{discriminator_forward.7} parent=11 // pred_fallthru
        _
    $region12: #{discriminator_forward.7} parent=5 // pred_fallthru
      _
    %p124 = scmp.lt.s32.totalorder %s9, 2
    // Predicated region
    $region21: #{discriminator_forward.7} parent=5 // pred_check
      %p125 = pneg %p124
    $region22: #{discriminator_forward.7} parent=5 // pred_check_branch
      %127 = sbr.rel (%p125) target = $region24
    $region23: #{discriminator_forward.7} parent=5 // pred_region
      // Predicated region
      $region25: #{discriminator_forward.7} parent=23 // pred_check
        %p128 = pneg %p29
      $region26: #{discriminator_forward.7} parent=23 // pred_check_branch
        %130 = sbr.rel (%p128) target = $region28
      $region27: #{discriminator_forward.7} parent=23 // pred_region
        %s131 = smul.u32 32, %s9
        %p132 = scmp.lt.s32.totalorder %s131, 63
        %s133 = scalar_select %p132, %s131, 63
        %s134 = smul.addr %s133, 4
        %s135 = scalar_lea.vmem %s0, %s134
        %s136 = smul.u32 32, %s9
      $region28: #{discriminator_forward.7} parent=23 // pred_fallthru
        _
    $region24: #{discriminator_forward.7} parent=5 // pred_fallthru
      _
    %p137 = scmp.le.s32.totalorder 1, %s9
    %p138 = scmp.lt.s32.totalorder %s9, 3
    %p139 = pnand %p137, %p138
    %p140 = pneg %p139
    // Predicated region
    $region29: #{discriminator_forward.7} parent=5 // pred_check
      _
    $region30: #{discriminator_forward.7} parent=5 // pred_check_branch
      %142 = sbr.rel (%p139) target = $region32
    $region31: #{discriminator_forward.7} parent=5 // pred_region
      %s143 = ssub.s32 %s9, 1
      %s144 = smul.u32 32, %s14
      %p145 = scmp.lt.s32.totalorder %s144, 63
      %s146 = scalar_select %p145, %s144, 63
      %s147 = smul.addr %s146, 4
      %s148 = scalar_lea.vmem %s0, %s147
      %p149 = pneg %p35
      %p150 = pneg %p32
      %p151 = pneg %p56
      %p152 = pneg %p53
      %p153 = pneg %p77
      %p154 = pneg %p74
      %p155 = pneg %p103
      %p156 = pneg %p100
      %s157 = smul.u32 32, %s14
      %p158 = scmp.lt.s32.totalorder %s157, 63
      %s159 = scalar_select %p158, %s157, 63
      %s160 = smul.addr %s159, 4
      %s161 = scalar_lea.vmem %s3, %s160
      %s162 = smul.u32 32, %s14
      %p163 = scmp.lt.s32.totalorder %s162, 63
      %s164 = scalar_select %p163, %s162, 63
      %s165 = smul.addr %s164, 4
      %s166 = scalar_lea.vmem %s0, %s165
      %s167 = smul.u32 32, %s14
      %s168 = smul.u32 32, %s14
      %p169 = scmp.lt.s32.totalorder %s168, 63
      %s170 = scalar_select %p169, %s168, 63
      %s171 = smul.addr %s170, 4
      %s172 = scalar_lea.vmem %s3, %s171
      %s173 = smul.u32 32, %s14
      %v174 = vld [vmem:[%s166] sm:$0xf]
      %v175 = vld [vmem:[%s166 + $0x4] sm:$0xf]
      %v176 = vld [vmem:[%s166 + $0x8] sm:$0xf]
      %v177 = vld [vmem:[%s166 + $0xc] sm:$0xf]
      %v178 = vld [vmem:[%s166 + $0x10] sm:$0xf]
      %v179 = vld [vmem:[%s166 + $0x14] sm:$0xf]
      %v180 = vld [vmem:[%s166 + $0x18] sm:$0xf]
      %v181 = vld [vmem:[%s166 + $0x1c] sm:$0xf]
      %v182 = vld [vmem:[%s166 + $0x20] sm:$0xf]
      %v183 = vld [vmem:[%s166 + $0x24] sm:$0xf]
      %v184 = vld [vmem:[%s166 + $0x28] sm:$0xf]
      %v185 = vld [vmem:[%s166 + $0x2c] sm:$0xf]
      %v186 = vld [vmem:[%s166 + $0x30] sm:$0xf]
      %v187 = vld [vmem:[%s166 + $0x34] sm:$0xf]
      %v188 = vld [vmem:[%s166 + $0x38] sm:$0xf]
      %v189 = vld [vmem:[%s166 + $0x3c] sm:$0xf]
      %v190 = vld [vmem:[%s166 + $0x40] sm:$0xf]
      %v191 = vld [vmem:[%s166 + $0x44] sm:$0xf]
      %v192 = vld [vmem:[%s166 + $0x48] sm:$0xf]
      %v193 = vld [vmem:[%s166 + $0x4c] sm:$0xf]
      %v194 = vld [vmem:[%s166 + $0x50] sm:$0xf]
      %v195 = vld [vmem:[%s166 + $0x54] sm:$0xf]
      %v196 = vld [vmem:[%s166 + $0x58] sm:$0xf]
      %v197 = vld [vmem:[%s166 + $0x5c] sm:$0xf]
      %v198 = vld [vmem:[%s166 + $0x60] sm:$0xf]
      %v199 = vld [vmem:[%s166 + $0x64] sm:$0xf]
      %v200 = vld [vmem:[%s166 + $0x68] sm:$0xf]
      %v201 = vld [vmem:[%s166 + $0x6c] sm:$0xf]
      %v202 = vld [vmem:[%s166 + $0x70] sm:$0xf]
      %v203 = vld [vmem:[%s166 + $0x74] sm:$0xf]
      %v204 = vld [vmem:[%s166 + $0x78] sm:$0xf]
      %v205 = vld [vmem:[%s166 + $0x7c] sm:$0xf]
      %v206 = vunpack.c.l.bf16 %v174
      %v207 = vunpack.c.l.bf16 %v175
      %v208 = vunpack.c.l.bf16 %v176
      %v209 = vunpack.c.l.bf16 %v177
      %v210 = vunpack.c.l.bf16 %v178
      %v211 = vunpack.c.l.bf16 %v179
      %v212 = vunpack.c.l.bf16 %v180
      %v213 = vunpack.c.l.bf16 %v181
      %v214 = vunpack.c.l.bf16 %v182
      %v215 = vunpack.c.l.bf16 %v183
      %v216 = vunpack.c.l.bf16 %v184
      %v217 = vunpack.c.l.bf16 %v185
      %v218 = vunpack.c.l.bf16 %v186
      %v219 = vunpack.c.l.bf16 %v187
      %v220 = vunpack.c.l.bf16 %v188
      %v221 = vunpack.c.l.bf16 %v189
      %v222 = vunpack.c.l.bf16 %v190
      %v223 = vunpack.c.l.bf16 %v191
      %v224 = vunpack.c.l.bf16 %v192
      %v225 = vunpack.c.l.bf16 %v193
      %v226 = vunpack.c.l.bf16 %v194
      %v227 = vunpack.c.l.bf16 %v195
      %v228 = vunpack.c.l.bf16 %v196
      %v229 = vunpack.c.l.bf16 %v197
      %v230 = vunpack.c.l.bf16 %v198
      %v231 = vunpack.c.l.bf16 %v199
      %v232 = vunpack.c.l.bf16 %v200
      %v233 = vunpack.c.l.bf16 %v201
      %v234 = vunpack.c.l.bf16 %v202
      %v235 = vunpack.c.l.bf16 %v203
      %v236 = vunpack.c.l.bf16 %v204
      %v237 = vunpack.c.l.bf16 %v205
      %v238 = vld [vmem:[%s1] sm:$0x1]
      %v240 = vlaneseq
      %v241 = vshrl.u32 %v240, 7
      %v242 = vsub.s32 0, %v241
      %v243 = vrot.slane %v238, %v242
      %v245 = vmul.f32 %v206, %v243
      %v246 = vmul.f32 %v207, %v243
      %v247 = vmul.f32 %v208, %v243
      %v248 = vmul.f32 %v209, %v243
      %v249 = vmul.f32 %v210, %v243
      %v250 = vmul.f32 %v211, %v243
      %v251 = vmul.f32 %v212, %v243
      %v252 = vmul.f32 %v213, %v243
      %v253 = vmul.f32 %v214, %v243
      %v254 = vmul.f32 %v215, %v243
      %v255 = vmul.f32 %v216, %v243
      %v256 = vmul.f32 %v217, %v243
      %v257 = vmul.f32 %v218, %v243
      %v258 = vmul.f32 %v219, %v243
      %v259 = vmul.f32 %v220, %v243
      %v260 = vmul.f32 %v221, %v243
      %v261 = vmul.f32 %v222, %v243
      %v262 = vmul.f32 %v223, %v243
      %v263 = vmul.f32 %v224, %v243
      %v264 = vmul.f32 %v225, %v243
      %v265 = vmul.f32 %v226, %v243
      %v266 = vmul.f32 %v227, %v243
      %v267 = vmul.f32 %v228, %v243
      %v268 = vmul.f32 %v229, %v243
      %v269 = vmul.f32 %v230, %v243
      %v270 = vmul.f32 %v231, %v243
      %v271 = vmul.f32 %v232, %v243
      %v272 = vmul.f32 %v233, %v243
      %v273 = vmul.f32 %v234, %v243
      %v274 = vmul.f32 %v235, %v243
      %v275 = vmul.f32 %v236, %v243
      %v276 = vmul.f32 %v237, %v243
      %v277 = vld [vmem:[%s2] sm:$0x1]
      %v279 = vlaneseq
      %v280 = vshrl.u32 %v279, 7
      %v281 = vsub.s32 0, %v280
      %v282 = vrot.slane %v277, %v281
      %v284 = vadd.f32 %v245, %v282
      %v285 = vadd.f32 %v246, %v282
      %v286 = vadd.f32 %v247, %v282
      %v287 = vadd.f32 %v248, %v282
      %v288 = vadd.f32 %v249, %v282
      %v289 = vadd.f32 %v250, %v282
      %v290 = vadd.f32 %v251, %v282
      %v291 = vadd.f32 %v252, %v282
      %v292 = vadd.f32 %v253, %v282
      %v293 = vadd.f32 %v254, %v282
      %v294 = vadd.f32 %v255, %v282
      %v295 = vadd.f32 %v256, %v282
      %v296 = vadd.f32 %v257, %v282
      %v297 = vadd.f32 %v258, %v282
      %v298 = vadd.f32 %v259, %v282
      %v299 = vadd.f32 %v260, %v282
      %v300 = vadd.f32 %v261, %v282
      %v301 = vadd.f32 %v262, %v282
      %v302 = vadd.f32 %v263, %v282
      %v303 = vadd.f32 %v264, %v282
      %v304 = vadd.f32 %v265, %v282
      %v305 = vadd.f32 %v266, %v282
      %v306 = vadd.f32 %v267, %v282
      %v307 = vadd.f32 %v268, %v282
      %v308 = vadd.f32 %v269, %v282
      %v309 = vadd.f32 %v270, %v282
      %v310 = vadd.f32 %v271, %v282
      %v311 = vadd.f32 %v272, %v282
      %v312 = vadd.f32 %v273, %v282
      %v313 = vadd.f32 %v274, %v282
      %v314 = vadd.f32 %v275, %v282
      %v315 = vadd.f32 %v276, %v282
      %vm316 = vcmp.ge.f32.partialorder %v284, 0.0
      %vm317 = vcmp.ge.f32.partialorder %v285, 0.0
      %vm318 = vcmp.ge.f32.partialorder %v286, 0.0
      %vm319 = vcmp.ge.f32.partialorder %v287, 0.0
      %vm320 = vcmp.ge.f32.partialorder %v288, 0.0
      %vm321 = vcmp.ge.f32.partialorder %v289, 0.0
      %vm322 = vcmp.ge.f32.partialorder %v290, 0.0
      %vm323 = vcmp.ge.f32.partialorder %v291, 0.0
      %vm324 = vcmp.ge.f32.partialorder %v292, 0.0
      %vm325 = vcmp.ge.f32.partialorder %v293, 0.0
      %vm326 = vcmp.ge.f32.partialorder %v294, 0.0
      %vm327 = vcmp.ge.f32.partialorder %v295, 0.0
      %vm328 = vcmp.ge.f32.partialorder %v296, 0.0
      %vm329 = vcmp.ge.f32.partialorder %v297, 0.0
      %vm330 = vcmp.ge.f32.partialorder %v298, 0.0
      %vm331 = vcmp.ge.f32.partialorder %v299, 0.0
      %vm332 = vcmp.ge.f32.partialorder %v300, 0.0
      %vm333 = vcmp.ge.f32.partialorder %v301, 0.0
      %vm334 = vcmp.ge.f32.partialorder %v302, 0.0
      %vm335 = vcmp.ge.f32.partialorder %v303, 0.0
      %vm336 = vcmp.ge.f32.partialorder %v304, 0.0
      %vm337 = vcmp.ge.f32.partialorder %v305, 0.0
      %vm338 = vcmp.ge.f32.partialorder %v306, 0.0
      %vm339 = vcmp.ge.f32.partialorder %v307, 0.0
      %vm340 = vcmp.ge.f32.partialorder %v308, 0.0
      %vm341 = vcmp.ge.f32.partialorder %v309, 0.0
      %vm342 = vcmp.ge.f32.partialorder %v310, 0.0
      %vm343 = vcmp.ge.f32.partialorder %v311, 0.0
      %vm344 = vcmp.ge.f32.partialorder %v312, 0.0
      %vm345 = vcmp.ge.f32.partialorder %v313, 0.0
      %vm346 = vcmp.ge.f32.partialorder %v314, 0.0
      %vm347 = vcmp.ge.f32.partialorder %v315, 0.0
      %v348 = vmul.f32 %v284, 0.2
      %v349 = vmul.f32 %v285, 0.2
      %v350 = vmul.f32 %v286, 0.2
      %v351 = vmul.f32 %v287, 0.2
      %v352 = vmul.f32 %v288, 0.2
      %v353 = vmul.f32 %v289, 0.2
      %v354 = vmul.f32 %v290, 0.2
      %v355 = vmul.f32 %v291, 0.2
      %v356 = vmul.f32 %v292, 0.2
      %v357 = vmul.f32 %v293, 0.2
      %v358 = vmul.f32 %v294, 0.2
      %v359 = vmul.f32 %v295, 0.2
      %v360 = vmul.f32 %v296, 0.2
      %v361 = vmul.f32 %v297, 0.2
      %v362 = vmul.f32 %v298, 0.2
      %v363 = vmul.f32 %v299, 0.2
      %v364 = vmul.f32 %v300, 0.2
      %v365 = vmul.f32 %v301, 0.2
      %v366 = vmul.f32 %v302, 0.2
      %v367 = vmul.f32 %v303, 0.2
      %v368 = vmul.f32 %v304, 0.2
      %v369 = vmul.f32 %v305, 0.2
      %v370 = vmul.f32 %v306, 0.2
      %v371 = vmul.f32 %v307, 0.2
      %v372 = vmul.f32 %v308, 0.2
      %v373 = vmul.f32 %v309, 0.2
      %v374 = vmul.f32 %v310, 0.2
      %v375 = vmul.f32 %v311, 0.2
      %v376 = vmul.f32 %v312, 0.2
      %v377 = vmul.f32 %v313, 0.2
      %v378 = vmul.f32 %v314, 0.2
      %v379 = vmul.f32 %v315, 0.2
      %v380 = vsel %vm316, %v284, %v348
      %v381 = vsel %vm317, %v285, %v349
      %v382 = vsel %vm318, %v286, %v350
      %v383 = vsel %vm319, %v287, %v351
      %v384 = vsel %vm320, %v288, %v352
      %v385 = vsel %vm321, %v289, %v353
      %v386 = vsel %vm322, %v290, %v354
      %v387 = vsel %vm323, %v291, %v355
      %v388 = vsel %vm324, %v292, %v356
      %v389 = vsel %vm325, %v293, %v357
      %v390 = vsel %vm326, %v294, %v358
      %v391 = vsel %vm327, %v295, %v359
      %v392 = vsel %vm328, %v296, %v360
      %v393 = vsel %vm329, %v297, %v361
      %v394 = vsel %vm330, %v298, %v362
      %v395 = vsel %vm331, %v299, %v363
      %v396 = vsel %vm332, %v300, %v364
      %v397 = vsel %vm333, %v301, %v365
      %v398 = vsel %vm334, %v302, %v366
      %v399 = vsel %vm335, %v303, %v367
      %v400 = vsel %vm336, %v304, %v368
      %v401 = vsel %vm337, %v305, %v369
      %v402 = vsel %vm338, %v306, %v370
      %v403 = vsel %vm339, %v307, %v371
      %v404 = vsel %vm340, %v308, %v372
      %v405 = vsel %vm341, %v309, %v373
      %v406 = vsel %vm342, %v310, %v374
      %v407 = vsel %vm343, %v311, %v375
      %v408 = vsel %vm344, %v312, %v376
      %v409 = vsel %vm345, %v313, %v377
      %v410 = vsel %vm346, %v314, %v378
      %v411 = vsel %vm347, %v315, %v379
      %v412 = vpack.c.bf16 %v381, %v380
      %v413 = vpack.c.bf16 %v383, %v382
      %v414 = vpack.c.bf16 %v385, %v384
      %v415 = vpack.c.bf16 %v387, %v386
      %v416 = vpack.c.bf16 %v389, %v388
      %v417 = vpack.c.bf16 %v391, %v390
      %v418 = vpack.c.bf16 %v393, %v392
      %v419 = vpack.c.bf16 %v395, %v394
      %v420 = vpack.c.bf16 %v397, %v396
      %v421 = vpack.c.bf16 %v399, %v398
      %v422 = vpack.c.bf16 %v401, %v400
      %v423 = vpack.c.bf16 %v403, %v402
      %v424 = vpack.c.bf16 %v405, %v404
      %v425 = vpack.c.bf16 %v407, %v406
      %v426 = vpack.c.bf16 %v409, %v408
      %v427 = vpack.c.bf16 %v411, %v410
      %v444 = vunpack.c.l.b16 %v412
      %v445 = vunpack.c.h.b16 %v412
      %v446 = vunpack.c.l.b16 %v413
      %v447 = vunpack.c.h.b16 %v413
      %v448 = vunpack.c.l.b16 %v414
      %v449 = vunpack.c.h.b16 %v414
      %v450 = vunpack.c.l.b16 %v415
      %v451 = vunpack.c.h.b16 %v415
      %v452 = vunpack.c.l.b16 %v416
      %v453 = vunpack.c.h.b16 %v416
      %v454 = vunpack.c.l.b16 %v417
      %v455 = vunpack.c.h.b16 %v417
      %v456 = vunpack.c.l.b16 %v418
      %v457 = vunpack.c.h.b16 %v418
      %v458 = vunpack.c.l.b16 %v419
      %v459 = vunpack.c.h.b16 %v419
      %v460 = vunpack.c.l.b16 %v420
      %v461 = vunpack.c.h.b16 %v420
      %v462 = vunpack.c.l.b16 %v421
      %v463 = vunpack.c.h.b16 %v421
      %v464 = vunpack.c.l.b16 %v422
      %v465 = vunpack.c.h.b16 %v422
      %v466 = vunpack.c.l.b16 %v423
      %v467 = vunpack.c.h.b16 %v423
      %v468 = vunpack.c.l.b16 %v424
      %v469 = vunpack.c.h.b16 %v424
      %v470 = vunpack.c.l.b16 %v425
      %v471 = vunpack.c.h.b16 %v425
      %v472 = vunpack.c.l.b16 %v426
      %v473 = vunpack.c.h.b16 %v426
      %v474 = vunpack.c.l.b16 %v427
      %v475 = vunpack.c.h.b16 %v427
      %v476 = vpack.c.b16 %v444, %v444
      %v477 = vpack.c.b16 %v445, %v445
      %v478 = vpack.c.b16 %v446, %v446
      %v479 = vpack.c.b16 %v447, %v447
      %v480 = vpack.c.b16 %v448, %v448
      %v481 = vpack.c.b16 %v449, %v449
      %v482 = vpack.c.b16 %v450, %v450
      %v483 = vpack.c.b16 %v451, %v451
      %v484 = vpack.c.b16 %v452, %v452
      %v485 = vpack.c.b16 %v453, %v453
      %v486 = vpack.c.b16 %v454, %v454
      %v487 = vpack.c.b16 %v455, %v455
      %v488 = vpack.c.b16 %v456, %v456
      %v489 = vpack.c.b16 %v457, %v457
      %v490 = vpack.c.b16 %v458, %v458
      %v491 = vpack.c.b16 %v459, %v459
      %v492 = vpack.c.b16 %v460, %v460
      %v493 = vpack.c.b16 %v461, %v461
      %v494 = vpack.c.b16 %v462, %v462
      %v495 = vpack.c.b16 %v463, %v463
      %v496 = vpack.c.b16 %v464, %v464
      %v497 = vpack.c.b16 %v465, %v465
      %v498 = vpack.c.b16 %v466, %v466
      %v499 = vpack.c.b16 %v467, %v467
      %v500 = vpack.c.b16 %v468, %v468
      %v501 = vpack.c.b16 %v469, %v469
      %v502 = vpack.c.b16 %v470, %v470
      %v503 = vpack.c.b16 %v471, %v471
      %v504 = vpack.c.b16 %v472, %v472
      %v505 = vpack.c.b16 %v473, %v473
      %v506 = vpack.c.b16 %v474, %v474
      %v507 = vpack.c.b16 %v475, %v475
      %540 = vst [vmem:[%s172] sm:$0xf] %v476
      %541 = vst [vmem:[%s172 + $0x4] sm:$0xf] %v477
      %542 = vst [vmem:[%s172 + $0x8] sm:$0xf] %v478
      %543 = vst [vmem:[%s172 + $0xc] sm:$0xf] %v479
      %544 = vst [vmem:[%s172 + $0x10] sm:$0xf] %v480
      %545 = vst [vmem:[%s172 + $0x14] sm:$0xf] %v481
      %546 = vst [vmem:[%s172 + $0x18] sm:$0xf] %v482
      %547 = vst [vmem:[%s172 + $0x1c] sm:$0xf] %v483
      %548 = vst [vmem:[%s172 + $0x20] sm:$0xf] %v484
      %549 = vst [vmem:[%s172 + $0x24] sm:$0xf] %v485
      %550 = vst [vmem:[%s172 + $0x28] sm:$0xf] %v486
      %551 = vst [vmem:[%s172 + $0x2c] sm:$0xf] %v487
      %552 = vst [vmem:[%s172 + $0x30] sm:$0xf] %v488
      %553 = vst [vmem:[%s172 + $0x34] sm:$0xf] %v489
      %554 = vst [vmem:[%s172 + $0x38] sm:$0xf] %v490
      %555 = vst [vmem:[%s172 + $0x3c] sm:$0xf] %v491
      %556 = vst [vmem:[%s172 + $0x40] sm:$0xf] %v492
      %557 = vst [vmem:[%s172 + $0x44] sm:$0xf] %v493
      %558 = vst [vmem:[%s172 + $0x48] sm:$0xf] %v494
      %559 = vst [vmem:[%s172 + $0x4c] sm:$0xf] %v495
      %560 = vst [vmem:[%s172 + $0x50] sm:$0xf] %v496
      %561 = vst [vmem:[%s172 + $0x54] sm:$0xf] %v497
      %562 = vst [vmem:[%s172 + $0x58] sm:$0xf] %v498
      %563 = vst [vmem:[%s172 + $0x5c] sm:$0xf] %v499
      %564 = vst [vmem:[%s172 + $0x60] sm:$0xf] %v500
      %565 = vst [vmem:[%s172 + $0x64] sm:$0xf] %v501
      %566 = vst [vmem:[%s172 + $0x68] sm:$0xf] %v502
      %567 = vst [vmem:[%s172 + $0x6c] sm:$0xf] %v503
      %568 = vst [vmem:[%s172 + $0x70] sm:$0xf] %v504
      %569 = vst [vmem:[%s172 + $0x74] sm:$0xf] %v505
      %570 = vst [vmem:[%s172 + $0x78] sm:$0xf] %v506
      %571 = vst [vmem:[%s172 + $0x7c] sm:$0xf] %v507
      %s572 = smul.u32 32, %s14
      %p573 = scmp.lt.s32.totalorder %s572, 63
      %s574 = scalar_select %p573, %s572, 63
      %s575 = smul.addr %s574, 4
      %s576 = scalar_lea.vmem %s3, %s575
      // Predicated region
      $region33: #{discriminator_forward.7} parent=31 // pred_check
        %p577 = pneg %p100
      $region34: #{discriminator_forward.7} parent=31 // pred_check_branch
        %579 = sbr.rel (%p577) target = $region36
      $region35: #{discriminator_forward.7} parent=31 // pred_region
        %s580 = smul.u32 32, %s14
      $region36: #{discriminator_forward.7} parent=31 // pred_fallthru
        _
    $region32: #{discriminator_forward.7} parent=5 // pred_fallthru
      _
    %p581 = scmp.le.s32.totalorder 2, %s9
    // Predicated region
    $region37: #{discriminator_forward.7} parent=5 // pred_check
      %p582 = pneg %p581
    $region38: #{discriminator_forward.7} parent=5 // pred_check_branch
      %584 = sbr.rel (%p582) target = $region40
    $region39: #{discriminator_forward.7} parent=5 // pred_region
      %s585 = ssub.s32 %s9, 2
      // Predicated region
      $region41: #{discriminator_forward.7} parent=39 // pred_check
        %p586 = pneg %p106
      $region42: #{discriminator_forward.7} parent=39 // pred_check_branch
        %588 = sbr.rel (%p586) target = $region44
      $region43: #{discriminator_forward.7} parent=39 // pred_region
        %s589 = smul.u32 32, %s15
        %p590 = scmp.lt.s32.totalorder %s589, 63
        %s591 = scalar_select %p590, %s589, 63
        %s592 = smul.addr %s591, 4
        %s593 = scalar_lea.vmem %s3, %s592
      $region44: #{discriminator_forward.7} parent=39 // pred_fallthru
        _
    $region40: #{discriminator_forward.7} parent=5 // pred_fallthru
      _
  $region6: #{discriminator_forward.7} parent=0 // loop_footer
    %s13 = sadd.s32 1, %s9
  $region7: #{discriminator_forward.7} parent=0 // loop_footer_branch
    %8 = sbr.rel target = $region3
  $region8: #{discriminator_forward.7} parent=0 // loop_exit
    _

// kernel: discriminator_forward.6
$region0: #{discriminator_forward.6}
  #allocation0 [shape = 'u32[]', space=smem, size = 0x4, offset = 0x4, fixed_abs, tag = 'smem constant byte address 0x4 - core index']
  #allocation1 [shape = 'u32[144,128]{1,0:T(1,128)}', space=vmem, size = 0x12000, scoped, tag = 'internal scratch']
  %s0 = inlined_call_operand.vmem [shape: bf16[512,64], index: 0, kind: input, shape index: {}]
  %s1 = inlined_call_operand.vmem [shape: bf16[64,128], index: 1, kind: input, shape index: {}]
  %s2 = inlined_call_operand.vmem [shape: f32[1,128], index: 2, kind: input, shape index: {}]
  %s3 = inlined_call_operand.vmem [shape: bf16[512,128], index: 3, kind: output, shape index: {0}]
  %s4 = inlined_call_operand.vmem [shape: f32[2,2,128], index: 4, kind: output, shape index: {1}]
  %5 = xla_tuple %s3, %s4
  %s6 = sld [smem:[#allocation0]]
  $region53: #{discriminator_forward.6} parent=0
    _
  %s8 = ssub.s32 1, %s6
  %s9 = scalar_select 0, %s8, %s6
  loop: start=0, step=1, limit=4
  $region2: #{discriminator_forward.6} parent=0 // loop_pre_header
    _
  $region3: #{discriminator_forward.6} parent=0 // loop_header
    %s11 = sphi 0, %s15
    %p12 = scmp.ge.s32.totalorder %s11, 4
    %s18 = sphi 0, %s30
    %s19 = sphi 0, %s26
    %s20 = sphi 0, %s18
    %s21 = sphi 0, %s19
    %s22 = sphi 0, %s20
    %s23 = sphi 0, %s21
    %s33 = sphi 0, %s35
    %s36 = sphi 0, %s33
    %s37 = sphi 0, %s36
    %s53 = sphi 0, %s37
    %s59 = sphi 0, %s61
    %s62 = sphi 0, %s59
    %s63 = sphi 0, %s62
    %s79 = sphi 0, %s63
    %s85 = sphi 0, %s87
    %s88 = sphi 0, %s85
    %s89 = sphi 0, %s88
    %s105 = sphi 0, %s89
    %s113 = sphi 0, %s115
    %s116 = sphi 0, %s113
    %s117 = sphi 0, %s116
    %s133 = sphi 0, %s117
    %s141 = sphi 0, %s143
    %s144 = sphi 0, %s141
    %s145 = sphi 0, %s144
    %s161 = sphi 0, %s145
  $region4: #{discriminator_forward.6} parent=0 // loop_header_branch
    %14 = sbr.rel (%p12) target = $region8
  $region5: #{discriminator_forward.6} parent=0 // loop_body
    %s16 = ssub.s32 %s11, 1
    %s17 = ssub.s32 %s11, 2
    %s24 = sadd.s32 1, %s19
    %p25 = scmp.ge.s32.totalorder %s24, 2
    %s26 = scalar_select %p25, 0, %s24
    %s27 = sadd.s32 1, %s18
    %s28 = scalar_select %p25, %s27, %s18
    %p29 = scmp.ge.s32.totalorder %s28, 1
    %s30 = scalar_select %p29, 0, %s28
    %s31 = ssub.s32 %s19, %s26
    %p32 = scmp.eq.s32.totalorder %s31, 0
    %s34 = sadd.s32 %s33, 1
    %s35 = scalar_select %p32, %s33, %s34
    %p38 = pneg %p32
    %p39 = scmp.eq.s32.totalorder %s11, 1
    %p40 = por %p38, %p39
    %p41 = scmp.ne.s32.totalorder %s33, %s36
    %p42 = scmp.eq.s32.totalorder %s11, 0
    %p43 = por %p41, %p42
    %p44 = scmp.ne.s32.totalorder %s33, %s36
    %p45 = scmp.eq.s32.totalorder %s16, 1
    %p46 = por %p44, %p45
    %p47 = scmp.ne.s32.totalorder %s36, %s37
    %p48 = scmp.eq.s32.totalorder %s16, 0
    %p49 = por %p47, %p48
    %p50 = scmp.ne.s32.totalorder %s36, %s37
    %p51 = scmp.eq.s32.totalorder %s17, 1
    %p52 = por %p50, %p51
    %p54 = scmp.ne.s32.totalorder %s37, %s53
    %p55 = scmp.eq.s32.totalorder %s17, 0
    %p56 = por %p54, %p55
    %s57 = ssub.s32 %s18, %s30
    %p58 = scmp.eq.s32.totalorder %s57, 0
    %s60 = sadd.s32 %s59, 1
    %s61 = scalar_select %p58, %s59, %s60
    %p64 = pneg %p58
    %p65 = scmp.eq.s32.totalorder %s11, 1
    %p66 = por %p64, %p65
    %p67 = scmp.ne.s32.totalorder %s59, %s62
    %p68 = scmp.eq.s32.totalorder %s11, 0
    %p69 = por %p67, %p68
    %p70 = scmp.ne.s32.totalorder %s59, %s62
    %p71 = scmp.eq.s32.totalorder %s16, 1
    %p72 = por %p70, %p71
    %p73 = scmp.ne.s32.totalorder %s62, %s63
    %p74 = scmp.eq.s32.totalorder %s16, 0
    %p75 = por %p73, %p74
    %p76 = scmp.ne.s32.totalorder %s62, %s63
    %p77 = scmp.eq.s32.totalorder %s17, 1
    %p78 = por %p76, %p77
    %p80 = scmp.ne.s32.totalorder %s63, %s79
    %p81 = scmp.eq.s32.totalorder %s17, 0
    %p82 = por %p80, %p81
    %s83 = ssub.s32 %s18, %s30
    %p84 = scmp.eq.s32.totalorder %s83, 0
    %s86 = sadd.s32 %s85, 1
    %s87 = scalar_select %p84, %s85, %s86
    %p90 = pneg %p84
    %p91 = scmp.eq.s32.totalorder %s11, 1
    %p92 = por %p90, %p91
    %p93 = scmp.ne.s32.totalorder %s85, %s88
    %p94 = scmp.eq.s32.totalorder %s11, 0
    %p95 = por %p93, %p94
    %p96 = scmp.ne.s32.totalorder %s85, %s88
    %p97 = scmp.eq.s32.totalorder %s16, 1
    %p98 = por %p96, %p97
    %p99 = scmp.ne.s32.totalorder %s88, %s89
    %p100 = scmp.eq.s32.totalorder %s16, 0
    %p101 = por %p99, %p100
    %p102 = scmp.ne.s32.totalorder %s88, %s89
    %p103 = scmp.eq.s32.totalorder %s17, 1
    %p104 = por %p102, %p103
    %p106 = scmp.ne.s32.totalorder %s89, %s105
    %p107 = scmp.eq.s32.totalorder %s17, 0
    %p108 = por %p106, %p107
    %s109 = ssub.s32 %s19, %s26
    %s110 = ssub.s32 %s18, %s30
    %s111 = sor.u32 %s109, %s110
    %p112 = scmp.eq.s32.totalorder %s111, 0
    %s114 = sadd.s32 %s113, 1
    %s115 = scalar_select %p112, %s113, %s114
    %p118 = pneg %p112
    %p119 = scmp.eq.s32.totalorder %s11, 1
    %p120 = por %p118, %p119
    %p121 = scmp.ne.s32.totalorder %s113, %s116
    %p122 = scmp.eq.s32.totalorder %s11, 0
    %p123 = por %p121, %p122
    %p124 = scmp.ne.s32.totalorder %s113, %s116
    %p125 = scmp.eq.s32.totalorder %s16, 1
    %p126 = por %p124, %p125
    %p127 = scmp.ne.s32.totalorder %s116, %s117
    %p128 = scmp.eq.s32.totalorder %s16, 0
    %p129 = por %p127, %p128
    %p130 = scmp.ne.s32.totalorder %s116, %s117
    %p131 = scmp.eq.s32.totalorder %s17, 1
    %p132 = por %p130, %p131
    %p134 = scmp.ne.s32.totalorder %s117, %s133
    %p135 = scmp.eq.s32.totalorder %s17, 0
    %p136 = por %p134, %p135
    %s137 = ssub.s32 %s19, %s26
    %s138 = ssub.s32 %s18, %s30
    %s139 = sor.u32 %s137, %s138
    %p140 = scmp.eq.s32.totalorder %s139, 0
    %s142 = sadd.s32 %s141, 1
    %s143 = scalar_select %p140, %s141, %s142
    %p146 = pneg %p140
    %p147 = scmp.eq.s32.totalorder %s11, 1
    %p148 = por %p146, %p147
    %p149 = scmp.ne.s32.totalorder %s141, %s144
    %p150 = scmp.eq.s32.totalorder %s11, 0
    %p151 = por %p149, %p150
    %p152 = scmp.ne.s32.totalorder %s141, %s144
    %p153 = scmp.eq.s32.totalorder %s16, 1
    %p154 = por %p152, %p153
    %p155 = scmp.ne.s32.totalorder %s144, %s145
    %p156 = scmp.eq.s32.totalorder %s16, 0
    %p157 = por %p155, %p156
    %p158 = scmp.ne.s32.totalorder %s144, %s145
    %p159 = scmp.eq.s32.totalorder %s17, 1
    %p160 = por %p158, %p159
    %p162 = scmp.ne.s32.totalorder %s145, %s161
    %p163 = scmp.eq.s32.totalorder %s17, 0
    %p164 = por %p162, %p163
    %p165 = scmp.le.s32.totalorder 1, %s11
    %p166 = scmp.lt.s32.totalorder %s11, 3
    %p167 = pnand %p165, %p166
    %p168 = pneg %p167
    // Predicated region
    $region9: #{discriminator_forward.6} parent=5 // pred_check
      _
    $region10: #{discriminator_forward.6} parent=5 // pred_check_branch
      %170 = sbr.rel (%p167) target = $region12
    $region11: #{discriminator_forward.6} parent=5 // pred_region
      %s171 = ssub.s32 %s11, 1
      // Predicated region
      $region13: #{discriminator_forward.6} parent=11 // pred_check
        %p172 = pneg %p75
      $region14: #{discriminator_forward.6} parent=11 // pred_check_branch
        %174 = sbr.rel (%p172) target = $region16
      $region15: #{discriminator_forward.6} parent=11 // pred_region
        %p175 = scmp.lt.s32.totalorder %s20, 0
        %s176 = scalar_select %p175, %s20, 0
        %s177 = smul.addr %s176, 4
        %s178 = scalar_lea.vmem %s1, %s177
      $region16: #{discriminator_forward.6} parent=11 // pred_fallthru
        _
      // Predicated region
      $region17: #{discriminator_forward.6} parent=11 // pred_check
        %p179 = pneg %p101
      $region18: #{discriminator_forward.6} parent=11 // pred_check_branch
        %181 = sbr.rel (%p179) target = $region20
      $region19: #{discriminator_forward.6} parent=11 // pred_region
        %p182 = scmp.lt.s32.totalorder %s20, 0
        %s183 = scalar_select %p182, %s20, 0
        %s184 = scalar_lea.vmem %s2, %s183
      $region20: #{discriminator_forward.6} parent=11 // pred_fallthru
        _
    $region12: #{discriminator_forward.6} parent=5 // pred_fallthru
      _
    %p185 = scmp.lt.s32.totalorder %s11, 2
    // Predicated region
    $region21: #{discriminator_forward.6} parent=5 // pred_check
      %p186 = pneg %p185
    $region22: #{discriminator_forward.6} parent=5 // pred_check_branch
      %188 = sbr.rel (%p186) target = $region24
    $region23: #{discriminator_forward.6} parent=5 // pred_region
      // Predicated region
      $region25: #{discriminator_forward.6} parent=23 // pred_check
        %p189 = pneg %p43
      $region26: #{discriminator_forward.6} parent=23 // pred_check_branch
        %191 = sbr.rel (%p189) target = $region28
      $region27: #{discriminator_forward.6} parent=23 // pred_region
        %s192 = smul.u32 32, %s19
        %p193 = scmp.lt.s32.totalorder %s192, 63
        %s194 = scalar_select %p193, %s192, 63
        %s195 = smul.addr %s194, 4
        %s196 = scalar_lea.vmem %s0, %s195
        %s197 = smul.u32 32, %s19
      $region28: #{discriminator_forward.6} parent=23 // pred_fallthru
        _
    $region24: #{discriminator_forward.6} parent=5 // pred_fallthru
      _
    %p198 = scmp.le.s32.totalorder 1, %s11
    %p199 = scmp.lt.s32.totalorder %s11, 3
    %p200 = pnand %p198, %p199
    %p201 = pneg %p200
    // Predicated region
    $region29: #{discriminator_forward.6} parent=5 // pred_check
      _
    $region30: #{discriminator_forward.6} parent=5 // pred_check_branch
      %203 = sbr.rel (%p200) target = $region32
    $region31: #{discriminator_forward.6} parent=5 // pred_region
      %s204 = ssub.s32 %s11, 1
      %s205 = smul.u32 32, %s21
      %p206 = scmp.lt.s32.totalorder %s205, 63
      %s207 = scalar_select %p206, %s205, 63
      %s208 = smul.addr %s207, 4
      %s209 = scalar_lea.vmem %s0, %s208
      %p210 = pneg %p49
      %p211 = pneg %p46
      %p212 = scmp.lt.s32.totalorder %s20, 0
      %s213 = scalar_select %p212, %s20, 0
      %s214 = smul.addr %s213, 4
      %s215 = scalar_lea.vmem %s1, %s214
      %p216 = pneg %p75
      %p217 = pneg %p72
      %p218 = scmp.lt.s32.totalorder %s20, 0
      %s219 = scalar_select %p218, %s20, 0
      %s220 = scalar_lea.vmem %s2, %s219
      %p221 = pneg %p101
      %p222 = pneg %p98
      %p223 = pneg %p129
      %p224 = pneg %p126
      %s225 = smul.u32 32, %s21
      %p226 = scmp.lt.s32.totalorder %s225, 63
      %s227 = scalar_select %p226, %s225, 63
      %p228 = scmp.lt.s32.totalorder %s20, 0
      %s229 = scalar_select %p228, %s20, 0
      %s230 = sadd.s32 %s229, %s227
      %s231 = smul.addr %s230, 4
      %s232 = scalar_lea.vmem %s3, %s231
      %p233 = pneg %p157
      %p234 = pneg %p154
      %p235 = scmp.lt.s32.totalorder %s21, 1
      %s236 = scalar_select %p235, %s21, 1
      %p237 = scmp.lt.s32.totalorder %s20, 0
      %s238 = scalar_select %p237, %s20, 0
      %s239 = sadd.s32 %s238, %s236
      %s240 = smul.addr %s239, 2
      %s241 = scalar_lea.vmem %s4, %s240
      %s242 = smul.u32 32, %s21
      %p243 = scmp.lt.s32.totalorder %s242, 63
      %s244 = scalar_select %p243, %s242, 63
      %s245 = smul.addr %s244, 4
      %s246 = scalar_lea.vmem %s0, %s245
      %s247 = smul.u32 32, %s21
      %p248 = scmp.lt.s32.totalorder %s20, 0
      %s249 = scalar_select %p248, %s20, 0
      %s250 = smul.addr %s249, 4
      %s251 = scalar_lea.vmem %s1, %s250
      %p252 = scmp.lt.s32.totalorder %s20, 0
      %s253 = scalar_select %p252, %s20, 0
      %s254 = scalar_lea.vmem %s2, %s253
      %s255 = smul.u32 32, %s21
      %p256 = scmp.lt.s32.totalorder %s255, 63
      %s257 = scalar_select %p256, %s255, 63
      %p258 = scmp.lt.s32.totalorder %s20, 0
      %s259 = scalar_select %p258, %s20, 0
      %s260 = sadd.s32 %s259, %s257
      %s261 = smul.addr %s260, 4
      %s262 = scalar_lea.vmem %s3, %s261
      %s263 = smul.u32 32, %s21
      %p264 = scmp.lt.s32.totalorder %s21, 1
      %s265 = scalar_select %p264, %s21, 1
      %p266 = scmp.lt.s32.totalorder %s20, 0
      %s267 = scalar_select %p266, %s20, 0
      %s268 = sadd.s32 %s267, %s265
      %s269 = smul.addr %s268, 2
      %s270 = scalar_lea.vmem %s4, %s269
      %v272 = vld [vmem:[%s246] sm:$0xf]
      %v273 = vld [vmem:[%s246 + $0x4] sm:$0xf]
      %v274 = vld [vmem:[%s246 + $0x8] sm:$0xf]
      %v275 = vld [vmem:[%s246 + $0xc] sm:$0xf]
      %v276 = vld [vmem:[%s246 + $0x10] sm:$0xf]
      %v277 = vld [vmem:[%s246 + $0x14] sm:$0xf]
      %v278 = vld [vmem:[%s246 + $0x18] sm:$0xf]
      %v279 = vld [vmem:[%s246 + $0x1c] sm:$0xf]
      %v280 = vld [vmem:[%s246 + $0x20] sm:$0xf]
      %v281 = vld [vmem:[%s246 + $0x24] sm:$0xf]
      %v282 = vld [vmem:[%s246 + $0x28] sm:$0xf]
      %v283 = vld [vmem:[%s246 + $0x2c] sm:$0xf]
      %v284 = vld [vmem:[%s246 + $0x30] sm:$0xf]
      %v285 = vld [vmem:[%s246 + $0x34] sm:$0xf]
      %v286 = vld [vmem:[%s246 + $0x38] sm:$0xf]
      %v287 = vld [vmem:[%s246 + $0x3c] sm:$0xf]
      %v288 = vld [vmem:[%s246 + $0x40] sm:$0xf]
      %v289 = vld [vmem:[%s246 + $0x44] sm:$0xf]
      %v290 = vld [vmem:[%s246 + $0x48] sm:$0xf]
      %v291 = vld [vmem:[%s246 + $0x4c] sm:$0xf]
      %v292 = vld [vmem:[%s246 + $0x50] sm:$0xf]
      %v293 = vld [vmem:[%s246 + $0x54] sm:$0xf]
      %v294 = vld [vmem:[%s246 + $0x58] sm:$0xf]
      %v295 = vld [vmem:[%s246 + $0x5c] sm:$0xf]
      %v296 = vld [vmem:[%s246 + $0x60] sm:$0xf]
      %v297 = vld [vmem:[%s246 + $0x64] sm:$0xf]
      %v298 = vld [vmem:[%s246 + $0x68] sm:$0xf]
      %v299 = vld [vmem:[%s246 + $0x6c] sm:$0xf]
      %v300 = vld [vmem:[%s246 + $0x70] sm:$0xf]
      %v301 = vld [vmem:[%s246 + $0x74] sm:$0xf]
      %v302 = vld [vmem:[%s246 + $0x78] sm:$0xf]
      %v303 = vld [vmem:[%s246 + $0x7c] sm:$0xf]
      %v304 = vld [vmem:[%s251] sm:$0xf]
      %v305 = vld [vmem:[%s251 + $0x4] sm:$0xf]
      %v306 = vld [vmem:[%s251 + $0x8] sm:$0xf]
      %v307 = vld [vmem:[%s251 + $0xc] sm:$0xf]
      %v308 = vld [vmem:[%s251 + $0x10] sm:$0xf]
      %v309 = vld [vmem:[%s251 + $0x14] sm:$0xf]
      %v310 = vld [vmem:[%s251 + $0x18] sm:$0xf]
      %v311 = vld [vmem:[%s251 + $0x1c] sm:$0xf]
      %v312 = vld [vmem:[%s254] sm:$0x1]
      %v314 = vlaneseq
      %v315 = vshrl.u32 %v314, 7
      %v316 = vsub.s32 0, %v315
      %v317 = vrot.slane %v312, %v316
      %v351 = vunpack.c.l.b16 %v272
      %v352 = vunpack.c.l.b16 %v273
      %v353 = vunpack.c.l.b16 %v274
      %v354 = vunpack.c.l.b16 %v275
      %v355 = vunpack.c.l.b16 %v276
      %v356 = vunpack.c.l.b16 %v277
      %v357 = vunpack.c.l.b16 %v278
      %v358 = vunpack.c.l.b16 %v279
      %v359 = vunpack.c.l.b16 %v280
      %v360 = vunpack.c.l.b16 %v281
      %v361 = vunpack.c.l.b16 %v282
      %v362 = vunpack.c.l.b16 %v283
      %v363 = vunpack.c.l.b16 %v284
      %v364 = vunpack.c.l.b16 %v285
      %v365 = vunpack.c.l.b16 %v286
      %v366 = vunpack.c.l.b16 %v287
      %v367 = vunpack.c.l.b16 %v288
      %v368 = vunpack.c.l.b16 %v289
      %v369 = vunpack.c.l.b16 %v290
      %v370 = vunpack.c.l.b16 %v291
      %v371 = vunpack.c.l.b16 %v292
      %v372 = vunpack.c.l.b16 %v293
      %v373 = vunpack.c.l.b16 %v294
      %v374 = vunpack.c.l.b16 %v295
      %v375 = vunpack.c.l.b16 %v296
      %v376 = vunpack.c.l.b16 %v297
      %v377 = vunpack.c.l.b16 %v298
      %v378 = vunpack.c.l.b16 %v299
      %v379 = vunpack.c.l.b16 %v300
      %v380 = vunpack.c.l.b16 %v301
      %v381 = vunpack.c.l.b16 %v302
      %v382 = vunpack.c.l.b16 %v303
      %v383 = vpack.c.b16 %v352, %v351
      %v384 = vpack.c.b16 %v354, %v353
      %v385 = vpack.c.b16 %v356, %v355
      %v386 = vpack.c.b16 %v358, %v357
      %v387 = vpack.c.b16 %v360, %v359
      %v388 = vpack.c.b16 %v362, %v361
      %v389 = vpack.c.b16 %v364, %v363
      %v390 = vpack.c.b16 %v366, %v365
      %v391 = vpack.c.b16 %v368, %v367
      %v392 = vpack.c.b16 %v370, %v369
      %v393 = vpack.c.b16 %v372, %v371
      %v394 = vpack.c.b16 %v374, %v373
      %v395 = vpack.c.b16 %v376, %v375
      %v396 = vpack.c.b16 %v378, %v377
      %v397 = vpack.c.b16 %v380, %v379
      %v398 = vpack.c.b16 %v382, %v381
      %v407 = vunpack.c.l.b16 %v304
      %v408 = vunpack.c.l.b16 %v305
      %v409 = vunpack.c.l.b16 %v306
      %v410 = vunpack.c.l.b16 %v307
      %v411 = vunpack.c.l.b16 %v308
      %v412 = vunpack.c.l.b16 %v309
      %v413 = vunpack.c.l.b16 %v310
      %v414 = vunpack.c.l.b16 %v311
      %v415 = vpack.c.b16 %v408, %v407
      %v416 = vpack.c.b16 %v410, %v409
      %v417 = vpack.c.b16 %v412, %v411
      %v418 = vpack.c.b16 %v414, %v413
      %vm423 = vcmask 523264
      %v425 = vsel %vm423, %v383, 0
      %v428 = vsel %vm423, %v384, 0
      %v431 = vsel %vm423, %v385, 0
      %v434 = vsel %vm423, %v386, 0
      %v437 = vsel %vm423, %v387, 0
      %v440 = vsel %vm423, %v388, 0
      %v443 = vsel %vm423, %v389, 0
      %v446 = vsel %vm423, %v390, 0
      %v449 = vsel %vm423, %v391, 0
      %v452 = vsel %vm423, %v392, 0
      %v455 = vsel %vm423, %v393, 0
      %v458 = vsel %vm423, %v394, 0
      %v461 = vsel %vm423, %v395, 0
      %v464 = vsel %vm423, %v396, 0
      %v467 = vsel %vm423, %v397, 0
      %v470 = vsel %vm423, %v398, 0
      %472 = vmatprep.subr.bf16.mxu0 0
      %473 = vmatpush1.bf16.msra.mxu0 %v415
      %474 = vmatprep.subr.bf16.mxu0 0
      %475 = vmatpush1.bf16.msra.mxu0 %v416
      %476 = vmatprep.subr.bf16.mxu0 0
      %477 = vmatpush1.bf16.msra.mxu0 %v417
      %478 = vmatprep.subr.bf16.mxu0 0
      %479 = vmatpush1.bf16.msra.mxu0 %v418
      %480 = vmatprep.subr.bf16.mxu0 0
      %481 = vmatpush1.bf16.msra.mxu0 0
      %482 = vmatprep.subr.bf16.mxu0 0
      %483 = vmatpush1.bf16.msra.mxu0 0
      %484 = vmatprep.subr.bf16.mxu0 0
      %485 = vmatpush1.bf16.msra.mxu0 0
      %486 = vmatprep.subr.bf16.mxu0 0
      %487 = vmatpush1.bf16.msra.mxu0 0
      %488 = vmatprep.subr.bf16.mxu0 0
      %489 = vmatpush1.bf16.msra.mxu0 0
      %490 = vmatprep.subr.bf16.mxu0 0
      %491 = vmatpush1.bf16.msra.mxu0 0
      %492 = vmatprep.subr.bf16.mxu0 0
      %493 = vmatpush1.bf16.msra.mxu0 0
      %494 = vmatprep.subr.bf16.mxu0 0
      %495 = vmatpush1.bf16.msra.mxu0 0
      %496 = vmatprep.subr.bf16.mxu0 0
      %497 = vmatpush1.bf16.msra.mxu0 0
      %498 = vmatprep.subr.bf16.mxu0 0
      %499 = vmatpush1.bf16.msra.mxu0 0
      %500 = vmatprep.subr.bf16.mxu0 0
      %501 = vmatpush1.bf16.msra.mxu0 0
      %502 = vmatprep.subr.bf16.mxu0 0
      %503 = vmatpush1.bf16.msra.mxu0 0
      %504 = vmatprep.mubr.bf16.mxu0 0
      %505 = vmatmul.mubr.bf16.gmra.mrb[0].mxu0 %v425
      %v506 = vpop.f32.mrb[0].mxu0
      %v507 = vadd.f32 %v317, %v506
      %v508 = vpop.f32.mrb[0].mxu0
      %v509 = vpop.f32.mrb[0].mxu0
      %v510 = vadd.f32 %v317, %v509
      %v511 = vpop.f32.mrb[0].mxu0
      %512 = vmatprep.mubr.bf16.mxu0 0
      %513 = vmatmul.mubr.bf16.gmra.mrb[0].mxu0 %v428
      %v514 = vpop.f32.mrb[0].mxu0
      %v515 = vadd.f32 %v317, %v514
      %v516 = vpop.f32.mrb[0].mxu0
      %v517 = vpop.f32.mrb[0].mxu0
      %v518 = vadd.f32 %v317, %v517
      %v519 = vpop.f32.mrb[0].mxu0
      %520 = vmatprep.mubr.bf16.mxu0 0
      %521 = vmatmul.mubr.bf16.gmra.mrb[0].mxu0 %v431
      %v522 = vpop.f32.mrb[0].mxu0
      %v523 = vadd.f32 %v317, %v522
      %v524 = vpop.f32.mrb[0].mxu0
      %v525 = vpop.f32.mrb[0].mxu0
      %v526 = vadd.f32 %v317, %v525
      %v527 = vpop.f32.mrb[0].mxu0
      %528 = vmatprep.mubr.bf16.mxu0 0
      %529 = vmatmul.mubr.bf16.gmra.mrb[0].mxu0 %v434
      %v530 = vpop.f32.mrb[0].mxu0
      %v531 = vadd.f32 %v317, %v530
      %v532 = vpop.f32.mrb[0].mxu0
      %v533 = vpop.f32.mrb[0].mxu0
      %v534 = vadd.f32 %v317, %v533
      %v535 = vpop.f32.mrb[0].mxu0
      %536 = vmatprep.mubr.bf16.mxu0 0
      %537 = vmatmul.mubr.bf16.gmra.mrb[0].mxu0 %v437
      %v538 = vpop.f32.mrb[0].mxu0
      %v539 = vadd.f32 %v317, %v538
      %v540 = vpop.f32.mrb[0].mxu0
      %v541 = vpop.f32.mrb[0].mxu0
      %v542 = vadd.f32 %v317, %v541
      %v543 = vpop.f32.mrb[0].mxu0
      %544 = vmatprep.mubr.bf16.mxu0 0
      %545 = vmatmul.mubr.bf16.gmra.mrb[0].mxu0 %v440
      %v546 = vpop.f32.mrb[0].mxu0
      %v547 = vadd.f32 %v317, %v546
      %v548 = vpop.f32.mrb[0].mxu0
      %v549 = vpop.f32.mrb[0].mxu0
      %v550 = vadd.f32 %v317, %v549
      %v551 = vpop.f32.mrb[0].mxu0
      %552 = vmatprep.mubr.bf16.mxu0 0
      %553 = vmatmul.mubr.bf16.gmra.mrb[0].mxu0 %v443
      %v554 = vpop.f32.mrb[0].mxu0
      %v555 = vadd.f32 %v317, %v554
      %v556 = vpop.f32.mrb[0].mxu0
      %v557 = vpop.f32.mrb[0].mxu0
      %v558 = vadd.f32 %v317, %v557
      %v559 = vpop.f32.mrb[0].mxu0
      %560 = vmatprep.mubr.bf16.mxu0 0
      %561 = vmatmul.mubr.bf16.gmra.mrb[0].mxu0 %v446
      %v562 = vpop.f32.mrb[0].mxu0
      %v563 = vadd.f32 %v317, %v562
      %v564 = vpop.f32.mrb[0].mxu0
      %v565 = vpop.f32.mrb[0].mxu0
      %v566 = vadd.f32 %v317, %v565
      %v567 = vpop.f32.mrb[0].mxu0
      %568 = vmatprep.mubr.bf16.mxu0 0
      %569 = vmatmul.mubr.bf16.gmra.mrb[0].mxu0 %v449
      %v570 = vpop.f32.mrb[0].mxu0
      %v571 = vadd.f32 %v317, %v570
      %v572 = vpop.f32.mrb[0].mxu0
      %v573 = vpop.f32.mrb[0].mxu0
      %v574 = vadd.f32 %v317, %v573
      %v575 = vpop.f32.mrb[0].mxu0
      %576 = vmatprep.mubr.bf16.mxu0 0
      %577 = vmatmul.mubr.bf16.gmra.mrb[0].mxu0 %v452
      %v578 = vpop.f32.mrb[0].mxu0
      %v579 = vadd.f32 %v317, %v578
      %v580 = vpop.f32.mrb[0].mxu0
      %v581 = vpop.f32.mrb[0].mxu0
      %v582 = vadd.f32 %v317, %v581
      %v583 = vpop.f32.mrb[0].mxu0
      %584 = vmatprep.mubr.bf16.mxu0 0
      %585 = vmatmul.mubr.bf16.gmra.mrb[0].mxu0 %v455
      %v586 = vpop.f32.mrb[0].mxu0
      %v587 = vadd.f32 %v317, %v586
      %v588 = vpop.f32.mrb[0].mxu0
      %v589 = vpop.f32.mrb[0].mxu0
      %v590 = vadd.f32 %v317, %v589
      %v591 = vpop.f32.mrb[0].mxu0
      %592 = vmatprep.mubr.bf16.mxu0 0
      %593 = vmatmul.mubr.bf16.gmra.mrb[0].mxu0 %v458
      %v594 = vpop.f32.mrb[0].mxu0
      %v595 = vadd.f32 %v317, %v594
      %v596 = vpop.f32.mrb[0].mxu0
      %v597 = vpop.f32.mrb[0].mxu0
      %v598 = vadd.f32 %v317, %v597
      %v599 = vpop.f32.mrb[0].mxu0
      %600 = vmatprep.mubr.bf16.mxu0 0
      %601 = vmatmul.mubr.bf16.gmra.mrb[0].mxu0 %v461
      %v602 = vpop.f32.mrb[0].mxu0
      %v603 = vadd.f32 %v317, %v602
      %v604 = vpop.f32.mrb[0].mxu0
      %v605 = vpop.f32.mrb[0].mxu0
      %v606 = vadd.f32 %v317, %v605
      %v607 = vpop.f32.mrb[0].mxu0
      %608 = vmatprep.mubr.bf16.mxu0 0
      %609 = vmatmul.mubr.bf16.gmra.mrb[0].mxu0 %v464
      %v610 = vpop.f32.mrb[0].mxu0
      %v611 = vadd.f32 %v317, %v610
      %v612 = vpop.f32.mrb[0].mxu0
      %v613 = vpop.f32.mrb[0].mxu0
      %v614 = vadd.f32 %v317, %v613
      %v615 = vpop.f32.mrb[0].mxu0
      %616 = vmatprep.mubr.bf16.mxu0 0
      %617 = vmatmul.mubr.bf16.gmra.mrb[0].mxu0 %v467
      %v618 = vpop.f32.mrb[0].mxu0
      %v619 = vadd.f32 %v317, %v618
      %v620 = vpop.f32.mrb[0].mxu0
      %v621 = vpop.f32.mrb[0].mxu0
      %v622 = vadd.f32 %v317, %v621
      %v623 = vpop.f32.mrb[0].mxu0
      %624 = vmatprep.mubr.bf16.mxu0 0
      %625 = vmatmul.mubr.bf16.gmra.mrb[0].mxu0 %v470
      %v626 = vpop.f32.mrb[0].mxu0
      %v627 = vadd.f32 %v317, %v626
      %v628 = vpop.f32.mrb[0].mxu0
      %v629 = vpop.f32.mrb[0].mxu0
      %v630 = vadd.f32 %v317, %v629
      %v631 = vpop.f32.mrb[0].mxu0
      %632 = vdwg.mxu0
      %v633 = vadd.f32 %v507, %v510
      %v634 = vadd.f32 %v633, %v515
      %v635 = vadd.f32 %v634, %v518
      %v636 = vadd.f32 %v635, %v523
      %v637 = vadd.f32 %v636, %v526
      %v638 = vadd.f32 %v637, %v531
      %v639 = vadd.f32 %v638, %v534
      %v640 = vadd.f32 %v639, %v539
      %v641 = vadd.f32 %v640, %v542
      %v642 = vadd.f32 %v641, %v547
      %v643 = vadd.f32 %v642, %v550
      %v644 = vadd.f32 %v643, %v555
      %v645 = vadd.f32 %v644, %v558
      %v646 = vadd.f32 %v645, %v563
      %v647 = vadd.f32 %v646, %v566
      %v648 = vadd.f32 %v647, %v571
      %v649 = vadd.f32 %v648, %v574
      %v650 = vadd.f32 %v649, %v579
      %v651 = vadd.f32 %v650, %v582
      %v652 = vadd.f32 %v651, %v587
      %v653 = vadd.f32 %v652, %v590
      %v654 = vadd.f32 %v653, %v595
      %v655 = vadd.f32 %v654, %v598
      %v656 = vadd.f32 %v655, %v603
      %v657 = vadd.f32 %v656, %v606
      %v658 = vadd.f32 %v657, %v611
      %v659 = vadd.f32 %v658, %v614
      %v660 = vadd.f32 %v659, %v619
      %v661 = vadd.f32 %v660, %v622
      %v662 = vadd.f32 %v661, %v627
      %v663 = vadd.f32 %v662, %v630
      %v664 = vrot.slane %v663, 4
      %v665 = vadd.f32 %v663, %v664
      %v666 = vrot.slane %v665, 2
      %v667 = vadd.f32 %v665, %v666
      %v668 = vrot.slane %v667, 1
      %v669 = vadd.f32 %v667, %v668
      %670 = vst [vmem:[%s270] sm:$0x1] %v669
      %v671 = vmul.f32 %v507, %v507
      %v672 = vmul.f32 %v510, %v510
      %v673 = vmul.f32 %v515, %v515
      %v674 = vmul.f32 %v518, %v518
      %v675 = vmul.f32 %v523, %v523
      %v676 = vmul.f32 %v526, %v526
      %v677 = vmul.f32 %v531, %v531
      %v678 = vmul.f32 %v534, %v534
      %v679 = vmul.f32 %v539, %v539
      %v680 = vmul.f32 %v542, %v542
      %v681 = vmul.f32 %v547, %v547
      %v682 = vmul.f32 %v550, %v550
      %v683 = vmul.f32 %v555, %v555
      %v684 = vmul.f32 %v558, %v558
      %v685 = vmul.f32 %v563, %v563
      %v686 = vmul.f32 %v566, %v566
      %v687 = vmul.f32 %v571, %v571
      %v688 = vmul.f32 %v574, %v574
      %v689 = vmul.f32 %v579, %v579
      %v690 = vmul.f32 %v582, %v582
      %v691 = vmul.f32 %v587, %v587
      %v692 = vmul.f32 %v590, %v590
      %v693 = vmul.f32 %v595, %v595
      %v694 = vmul.f32 %v598, %v598
      %v695 = vmul.f32 %v603, %v603
      %v696 = vmul.f32 %v606, %v606
      %v697 = vmul.f32 %v611, %v611
      %v698 = vmul.f32 %v614, %v614
      %v699 = vmul.f32 %v619, %v619
      %v700 = vmul.f32 %v622, %v622
      %v701 = vmul.f32 %v627, %v627
      %v702 = vmul.f32 %v630, %v630
      %v703 = vadd.f32 %v671, %v672
      %v704 = vadd.f32 %v703, %v673
      %v705 = vadd.f32 %v704, %v674
      %v706 = vadd.f32 %v705, %v675
      %v707 = vadd.f32 %v706, %v676
      %v708 = vadd.f32 %v707, %v677
      %v709 = vadd.f32 %v708, %v678
      %v710 = vadd.f32 %v709, %v679
      %v711 = vadd.f32 %v710, %v680
      %v712 = vadd.f32 %v711, %v681
      %v713 = vadd.f32 %v712, %v682
      %v714 = vadd.f32 %v713, %v683
      %v715 = vadd.f32 %v714, %v684
      %v716 = vadd.f32 %v715, %v685
      %v717 = vadd.f32 %v716, %v686
      %v718 = vadd.f32 %v717, %v687
      %v719 = vadd.f32 %v718, %v688
      %v720 = vadd.f32 %v719, %v689
      %v721 = vadd.f32 %v720, %v690
      %v722 = vadd.f32 %v721, %v691
      %v723 = vadd.f32 %v722, %v692
      %v724 = vadd.f32 %v723, %v693
      %v725 = vadd.f32 %v724, %v694
      %v726 = vadd.f32 %v725, %v695
      %v727 = vadd.f32 %v726, %v696
      %v728 = vadd.f32 %v727, %v697
      %v729 = vadd.f32 %v728, %v698
      %v730 = vadd.f32 %v729, %v699
      %v731 = vadd.f32 %v730, %v700
      %v732 = vadd.f32 %v731, %v701
      %v733 = vadd.f32 %v732, %v702
      %v734 = vrot.slane %v733, 4
      %v735 = vadd.f32 %v733, %v734
      %v736 = vrot.slane %v735, 2
      %v737 = vadd.f32 %v735, %v736
      %v738 = vrot.slane %v737, 1
      %v739 = vadd.f32 %v737, %v738
      %740 = vst [vmem:[%s270 + $0x1] sm:$0x1] %v739
      %v741 = vpack.c.bf16 %v510, %v507
      %v742 = vpack.c.bf16 %v518, %v515
      %v743 = vpack.c.bf16 %v526, %v523
      %v744 = vpack.c.bf16 %v534, %v531
      %v745 = vpack.c.bf16 %v542, %v539
      %v746 = vpack.c.bf16 %v550, %v547
      %v747 = vpack.c.bf16 %v558, %v555
      %v748 = vpack.c.bf16 %v566, %v563
      %v749 = vpack.c.bf16 %v574, %v571
      %v750 = vpack.c.bf16 %v582, %v579
      %v751 = vpack.c.bf16 %v590, %v587
      %v752 = vpack.c.bf16 %v598, %v595
      %v753 = vpack.c.bf16 %v606, %v603
      %v754 = vpack.c.bf16 %v614, %v611
      %v755 = vpack.c.bf16 %v622, %v619
      %v756 = vpack.c.bf16 %v630, %v627
      %v773 = vunpack.c.l.b16 %v741
      %v774 = vunpack.c.h.b16 %v741
      %v775 = vunpack.c.l.b16 %v742
      %v776 = vunpack.c.h.b16 %v742
      %v777 = vunpack.c.l.b16 %v743
      %v778 = vunpack.c.h.b16 %v743
      %v779 = vunpack.c.l.b16 %v744
      %v780 = vunpack.c.h.b16 %v744
      %v781 = vunpack.c.l.b16 %v745
      %v782 = vunpack.c.h.b16 %v745
      %v783 = vunpack.c.l.b16 %v746
      %v784 = vunpack.c.h.b16 %v746
      %v785 = vunpack.c.l.b16 %v747
      %v786 = vunpack.c.h.b16 %v747
      %v787 = vunpack.c.l.b16 %v748
      %v788 = vunpack.c.h.b16 %v748
      %v789 = vunpack.c.l.b16 %v749
      %v790 = vunpack.c.h.b16 %v749
      %v791 = vunpack.c.l.b16 %v750
      %v792 = vunpack.c.h.b16 %v750
      %v793 = vunpack.c.l.b16 %v751
      %v794 = vunpack.c.h.b16 %v751
      %v795 = vunpack.c.l.b16 %v752
      %v796 = vunpack.c.h.b16 %v752
      %v797 = vunpack.c.l.b16 %v753
      %v798 = vunpack.c.h.b16 %v753
      %v799 = vunpack.c.l.b16 %v754
      %v800 = vunpack.c.h.b16 %v754
      %v801 = vunpack.c.l.b16 %v755
      %v802 = vunpack.c.h.b16 %v755
      %v803 = vunpack.c.l.b16 %v756
      %v804 = vunpack.c.h.b16 %v756
      %v805 = vpack.c.b16 %v773, %v773
      %v806 = vpack.c.b16 %v774, %v774
      %v807 = vpack.c.b16 %v775, %v775
      %v808 = vpack.c.b16 %v776, %v776
      %v809 = vpack.c.b16 %v777, %v777
      %v810 = vpack.c.b16 %v778, %v778
      %v811 = vpack.c.b16 %v779, %v779
      %v812 = vpack.c.b16 %v780, %v780
      %v813 = vpack.c.b16 %v781, %v781
      %v814 = vpack.c.b16 %v782, %v782
      %v815 = vpack.c.b16 %v783, %v783
      %v816 = vpack.c.b16 %v784, %v784
      %v817 = vpack.c.b16 %v785, %v785
      %v818 = vpack.c.b16 %v786, %v786
      %v819 = vpack.c.b16 %v787, %v787
      %v820 = vpack.c.b16 %v788, %v788
      %v821 = vpack.c.b16 %v789, %v789
      %v822 = vpack.c.b16 %v790, %v790
      %v823 = vpack.c.b16 %v791, %v791
      %v824 = vpack.c.b16 %v792, %v792
      %v825 = vpack.c.b16 %v793, %v793
      %v826 = vpack.c.b16 %v794, %v794
      %v827 = vpack.c.b16 %v795, %v795
      %v828 = vpack.c.b16 %v796, %v796
      %v829 = vpack.c.b16 %v797, %v797
      %v830 = vpack.c.b16 %v798, %v798
      %v831 = vpack.c.b16 %v799, %v799
      %v832 = vpack.c.b16 %v800, %v800
      %v833 = vpack.c.b16 %v801, %v801
      %v834 = vpack.c.b16 %v802, %v802
      %v835 = vpack.c.b16 %v803, %v803
      %v836 = vpack.c.b16 %v804, %v804
      %869 = vst [vmem:[%s262] sm:$0xf] %v805
      %870 = vst [vmem:[%s262 + $0x4] sm:$0xf] %v806
      %871 = vst [vmem:[%s262 + $0x8] sm:$0xf] %v807
      %872 = vst [vmem:[%s262 + $0xc] sm:$0xf] %v808
      %873 = vst [vmem:[%s262 + $0x10] sm:$0xf] %v809
      %874 = vst [vmem:[%s262 + $0x14] sm:$0xf] %v810
      %875 = vst [vmem:[%s262 + $0x18] sm:$0xf] %v811
      %876 = vst [vmem:[%s262 + $0x1c] sm:$0xf] %v812
      %877 = vst [vmem:[%s262 + $0x20] sm:$0xf] %v813
      %878 = vst [vmem:[%s262 + $0x24] sm:$0xf] %v814
      %879 = vst [vmem:[%s262 + $0x28] sm:$0xf] %v815
      %880 = vst [vmem:[%s262 + $0x2c] sm:$0xf] %v816
      %881 = vst [vmem:[%s262 + $0x30] sm:$0xf] %v817
      %882 = vst [vmem:[%s262 + $0x34] sm:$0xf] %v818
      %883 = vst [vmem:[%s262 + $0x38] sm:$0xf] %v819
      %884 = vst [vmem:[%s262 + $0x3c] sm:$0xf] %v820
      %885 = vst [vmem:[%s262 + $0x40] sm:$0xf] %v821
      %886 = vst [vmem:[%s262 + $0x44] sm:$0xf] %v822
      %887 = vst [vmem:[%s262 + $0x48] sm:$0xf] %v823
      %888 = vst [vmem:[%s262 + $0x4c] sm:$0xf] %v824
      %889 = vst [vmem:[%s262 + $0x50] sm:$0xf] %v825
      %890 = vst [vmem:[%s262 + $0x54] sm:$0xf] %v826
      %891 = vst [vmem:[%s262 + $0x58] sm:$0xf] %v827
      %892 = vst [vmem:[%s262 + $0x5c] sm:$0xf] %v828
      %893 = vst [vmem:[%s262 + $0x60] sm:$0xf] %v829
      %894 = vst [vmem:[%s262 + $0x64] sm:$0xf] %v830
      %895 = vst [vmem:[%s262 + $0x68] sm:$0xf] %v831
      %896 = vst [vmem:[%s262 + $0x6c] sm:$0xf] %v832
      %897 = vst [vmem:[%s262 + $0x70] sm:$0xf] %v833
      %898 = vst [vmem:[%s262 + $0x74] sm:$0xf] %v834
      %899 = vst [vmem:[%s262 + $0x78] sm:$0xf] %v835
      %900 = vst [vmem:[%s262 + $0x7c] sm:$0xf] %v836
      %s901 = smul.u32 32, %s21
      %p902 = scmp.lt.s32.totalorder %s901, 63
      %s903 = scalar_select %p902, %s901, 63
      %p904 = scmp.lt.s32.totalorder %s20, 0
      %s905 = scalar_select %p904, %s20, 0
      %s906 = sadd.s32 %s905, %s903
      %s907 = smul.addr %s906, 4
      %s908 = scalar_lea.vmem %s3, %s907
      %p909 = scmp.lt.s32.totalorder %s21, 1
      %s910 = scalar_select %p909, %s21, 1
      %p911 = scmp.lt.s32.totalorder %s20, 0
      %s912 = scalar_select %p911, %s20, 0
      %s913 = sadd.s32 %s912, %s910
      %s914 = smul.addr %s913, 2
      %s915 = scalar_lea.vmem %s4, %s914
      // Predicated region
      $region33: #{discriminator_forward.6} parent=31 // pred_check
        %p916 = pneg %p126
      $region34: #{discriminator_forward.6} parent=31 // pred_check_branch
        %918 = sbr.rel (%p916) target = $region36
      $region35: #{discriminator_forward.6} parent=31 // pred_region
        %s919 = smul.u32 32, %s21
      $region36: #{discriminator_forward.6} parent=31 // pred_fallthru
        _
      // Predicated region
      $region37: #{discriminator_forward.6} parent=31 // pred_check
        %p920 = pneg %p154
      $region38: #{discriminator_forward.6} parent=31 // pred_check_branch
        %922 = sbr.rel (%p920) target = $region40
      $region39: #{discriminator_forward.6} parent=31 // pred_region
        _
      $region40: #{discriminator_forward.6} parent=31 // pred_fallthru
        _
    $region32: #{discriminator_forward.6} parent=5 // pred_fallthru
      _
    %p923 = scmp.le.s32.totalorder 2, %s11
    // Predicated region
    $region41: #{discriminator_forward.6} parent=5 // pred_check
      %p924 = pneg %p923
    $region42: #{discriminator_forward.6} parent=5 // pred_check_branch
      %926 = sbr.rel (%p924) target = $region44
    $region43: #{discriminator_forward.6} parent=5 // pred_region
      %s927 = ssub.s32 %s11, 2
      // Predicated region
      $region45: #{discriminator_forward.6} parent=43 // pred_check
        %p928 = pneg %p132
      $region46: #{discriminator_forward.6} parent=43 // pred_check_branch
        %930 = sbr.rel (%p928) target = $region48
      $region47: #{discriminator_forward.6} parent=43 // pred_region
        %s931 = smul.u32 32, %s23
        %p932 = scmp.lt.s32.totalorder %s931, 63
        %s933 = scalar_select %p932, %s931, 63
        %p934 = scmp.lt.s32.totalorder %s22, 0
        %s935 = scalar_select %p934, %s22, 0
        %s936 = sadd.s32 %s935, %s933
        %s937 = smul.addr %s936, 4
        %s938 = scalar_lea.vmem %s3, %s937
      $region48: #{discriminator_forward.6} parent=43 // pred_fallthru
        _
      // Predicated region
      $region49: #{discriminator_forward.6} parent=43 // pred_check
        %p939 = pneg %p160
      $region50: #{discriminator_forward.6} parent=43 // pred_check_branch
        %941 = sbr.rel (%p939) target = $region52
      $region51: #{discriminator_forward.6} parent=43 // pred_region
        %p942 = scmp.lt.s32.totalorder %s23, 1
        %s943 = scalar_select %p942, %s23, 1
        %p944 = scmp.lt.s32.totalorder %s22, 0
        %s945 = scalar_select %p944, %s22, 0
        %s946 = sadd.s32 %s945, %s943
        %s947 = smul.addr %s946, 2
        %s948 = scalar_lea.vmem %s4, %s947
      $region52: #{discriminator_forward.6} parent=43 // pred_fallthru
        _
    $region44: #{discriminator_forward.6} parent=5 // pred_fallthru
      _
  $region6: #{discriminator_forward.6} parent=0 // loop_footer
    %s15 = sadd.s32 1, %s11
  $region7: #{discriminator_forward.6} parent=0 // loop_footer_branch
    %10 = sbr.rel target = $region3
  $region8: #{discriminator_forward.6} parent=0 // loop_exit
    _

// kernel: discriminator_forward.8
$region0: #{discriminator_forward.8}
  #allocation0 [shape = 'u32[]', space=smem, size = 0x4, offset = 0x4, fixed_abs, tag = 'smem constant byte address 0x4 - core index']
  #allocation1 [shape = 'u32[144,128]{1,0:T(1,128)}', space=vmem, size = 0x12000, scoped, tag = 'internal scratch']
  %s0 = inlined_call_operand.vmem [shape: bf16[128,256], index: 0, kind: input, shape index: {}]
  %s1 = inlined_call_operand.vmem [shape: bf16[256,128], index: 1, kind: input, shape index: {}]
  %s2 = inlined_call_operand.vmem [shape: f32[1,128], index: 2, kind: input, shape index: {}]
  %s3 = inlined_call_operand.vmem [shape: bf16[128,128], index: 3, kind: output, shape index: {0}]
  %s4 = inlined_call_operand.vmem [shape: f32[2,2,128], index: 4, kind: output, shape index: {1}]
  %5 = xla_tuple %s3, %s4
  %s6 = sld [smem:[#allocation0]]
  $region53: #{discriminator_forward.8} parent=0
    _
  %s8 = ssub.s32 1, %s6
  %s9 = scalar_select 0, %s8, %s6
  loop: start=0, step=1, limit=4
  $region2: #{discriminator_forward.8} parent=0 // loop_pre_header
    _
  $region3: #{discriminator_forward.8} parent=0 // loop_header
    %s11 = sphi 0, %s15
    %p12 = scmp.ge.s32.totalorder %s11, 4
    %s18 = sphi 0, %s30
    %s19 = sphi 0, %s26
    %s20 = sphi 0, %s18
    %s21 = sphi 0, %s19
    %s22 = sphi 0, %s20
    %s23 = sphi 0, %s21
    %s33 = sphi 0, %s35
    %s36 = sphi 0, %s33
    %s37 = sphi 0, %s36
    %s53 = sphi 0, %s37
    %s59 = sphi 0, %s61
    %s62 = sphi 0, %s59
    %s63 = sphi 0, %s62
    %s79 = sphi 0, %s63
    %s85 = sphi 0, %s87
    %s88 = sphi 0, %s85
    %s89 = sphi 0, %s88
    %s105 = sphi 0, %s89
    %s113 = sphi 0, %s115
    %s116 = sphi 0, %s113
    %s117 = sphi 0, %s116
    %s133 = sphi 0, %s117
    %s141 = sphi 0, %s143
    %s144 = sphi 0, %s141
    %s145 = sphi 0, %s144
    %s161 = sphi 0, %s145
  $region4: #{discriminator_forward.8} parent=0 // loop_header_branch
    %14 = sbr.rel (%p12) target = $region8
  $region5: #{discriminator_forward.8} parent=0 // loop_body
    %s16 = ssub.s32 %s11, 1
    %s17 = ssub.s32 %s11, 2
    %s24 = sadd.s32 1, %s19
    %p25 = scmp.ge.s32.totalorder %s24, 2
    %s26 = scalar_select %p25, 0, %s24
    %s27 = sadd.s32 1, %s18
    %s28 = scalar_select %p25, %s27, %s18
    %p29 = scmp.ge.s32.totalorder %s28, 1
    %s30 = scalar_select %p29, 0, %s28
    %s31 = ssub.s32 %s19, %s26
    %p32 = scmp.eq.s32.totalorder %s31, 0
    %s34 = sadd.s32 %s33, 1
    %s35 = scalar_select %p32, %s33, %s34
    %p38 = pneg %p32
    %p39 = scmp.eq.s32.totalorder %s11, 1
    %p40 = por %p38, %p39
    %p41 = scmp.ne.s32.totalorder %s33, %s36
    %p42 = scmp.eq.s32.totalorder %s11, 0
    %p43 = por %p41, %p42
    %p44 = scmp.ne.s32.totalorder %s33, %s36
    %p45 = scmp.eq.s32.totalorder %s16, 1
    %p46 = por %p44, %p45
    %p47 = scmp.ne.s32.totalorder %s36, %s37
    %p48 = scmp.eq.s32.totalorder %s16, 0
    %p49 = por %p47, %p48
    %p50 = scmp.ne.s32.totalorder %s36, %s37
    %p51 = scmp.eq.s32.totalorder %s17, 1
    %p52 = por %p50, %p51
    %p54 = scmp.ne.s32.totalorder %s37, %s53
    %p55 = scmp.eq.s32.totalorder %s17, 0
    %p56 = por %p54, %p55
    %s57 = ssub.s32 %s18, %s30
    %p58 = scmp.eq.s32.totalorder %s57, 0
    %s60 = sadd.s32 %s59, 1
    %s61 = scalar_select %p58, %s59, %s60
    %p64 = pneg %p58
    %p65 = scmp.eq.s32.totalorder %s11, 1
    %p66 = por %p64, %p65
    %p67 = scmp.ne.s32.totalorder %s59, %s62
    %p68 = scmp.eq.s32.totalorder %s11, 0
    %p69 = por %p67, %p68
    %p70 = scmp.ne.s32.totalorder %s59, %s62
    %p71 = scmp.eq.s32.totalorder %s16, 1
    %p72 = por %p70, %p71
    %p73 = scmp.ne.s32.totalorder %s62, %s63
    %p74 = scmp.eq.s32.totalorder %s16, 0
    %p75 = por %p73, %p74
    %p76 = scmp.ne.s32.totalorder %s62, %s63
    %p77 = scmp.eq.s32.totalorder %s17, 1
    %p78 = por %p76, %p77
    %p80 = scmp.ne.s32.totalorder %s63, %s79
    %p81 = scmp.eq.s32.totalorder %s17, 0
    %p82 = por %p80, %p81
    %s83 = ssub.s32 %s18, %s30
    %p84 = scmp.eq.s32.totalorder %s83, 0
    %s86 = sadd.s32 %s85, 1
    %s87 = scalar_select %p84, %s85, %s86
    %p90 = pneg %p84
    %p91 = scmp.eq.s32.totalorder %s11, 1
    %p92 = por %p90, %p91
    %p93 = scmp.ne.s32.totalorder %s85, %s88
    %p94 = scmp.eq.s32.totalorder %s11, 0
    %p95 = por %p93, %p94
    %p96 = scmp.ne.s32.totalorder %s85, %s88
    %p97 = scmp.eq.s32.totalorder %s16, 1
    %p98 = por %p96, %p97
    %p99 = scmp.ne.s32.totalorder %s88, %s89
    %p100 = scmp.eq.s32.totalorder %s16, 0
    %p101 = por %p99, %p100
    %p102 = scmp.ne.s32.totalorder %s88, %s89
    %p103 = scmp.eq.s32.totalorder %s17, 1
    %p104 = por %p102, %p103
    %p106 = scmp.ne.s32.totalorder %s89, %s105
    %p107 = scmp.eq.s32.totalorder %s17, 0
    %p108 = por %p106, %p107
    %s109 = ssub.s32 %s19, %s26
    %s110 = ssub.s32 %s18, %s30
    %s111 = sor.u32 %s109, %s110
    %p112 = scmp.eq.s32.totalorder %s111, 0
    %s114 = sadd.s32 %s113, 1
    %s115 = scalar_select %p112, %s113, %s114
    %p118 = pneg %p112
    %p119 = scmp.eq.s32.totalorder %s11, 1
    %p120 = por %p118, %p119
    %p121 = scmp.ne.s32.totalorder %s113, %s116
    %p122 = scmp.eq.s32.totalorder %s11, 0
    %p123 = por %p121, %p122
    %p124 = scmp.ne.s32.totalorder %s113, %s116
    %p125 = scmp.eq.s32.totalorder %s16, 1
    %p126 = por %p124, %p125
    %p127 = scmp.ne.s32.totalorder %s116, %s117
    %p128 = scmp.eq.s32.totalorder %s16, 0
    %p129 = por %p127, %p128
    %p130 = scmp.ne.s32.totalorder %s116, %s117
    %p131 = scmp.eq.s32.totalorder %s17, 1
    %p132 = por %p130, %p131
    %p134 = scmp.ne.s32.totalorder %s117, %s133
    %p135 = scmp.eq.s32.totalorder %s17, 0
    %p136 = por %p134, %p135
    %s137 = ssub.s32 %s19, %s26
    %s138 = ssub.s32 %s18, %s30
    %s139 = sor.u32 %s137, %s138
    %p140 = scmp.eq.s32.totalorder %s139, 0
    %s142 = sadd.s32 %s141, 1
    %s143 = scalar_select %p140, %s141, %s142
    %p146 = pneg %p140
    %p147 = scmp.eq.s32.totalorder %s11, 1
    %p148 = por %p146, %p147
    %p149 = scmp.ne.s32.totalorder %s141, %s144
    %p150 = scmp.eq.s32.totalorder %s11, 0
    %p151 = por %p149, %p150
    %p152 = scmp.ne.s32.totalorder %s141, %s144
    %p153 = scmp.eq.s32.totalorder %s16, 1
    %p154 = por %p152, %p153
    %p155 = scmp.ne.s32.totalorder %s144, %s145
    %p156 = scmp.eq.s32.totalorder %s16, 0
    %p157 = por %p155, %p156
    %p158 = scmp.ne.s32.totalorder %s144, %s145
    %p159 = scmp.eq.s32.totalorder %s17, 1
    %p160 = por %p158, %p159
    %p162 = scmp.ne.s32.totalorder %s145, %s161
    %p163 = scmp.eq.s32.totalorder %s17, 0
    %p164 = por %p162, %p163
    %p165 = scmp.le.s32.totalorder 1, %s11
    %p166 = scmp.lt.s32.totalorder %s11, 3
    %p167 = pnand %p165, %p166
    %p168 = pneg %p167
    // Predicated region
    $region9: #{discriminator_forward.8} parent=5 // pred_check
      _
    $region10: #{discriminator_forward.8} parent=5 // pred_check_branch
      %170 = sbr.rel (%p167) target = $region12
    $region11: #{discriminator_forward.8} parent=5 // pred_region
      %s171 = ssub.s32 %s11, 1
      // Predicated region
      $region13: #{discriminator_forward.8} parent=11 // pred_check
        %p172 = pneg %p75
      $region14: #{discriminator_forward.8} parent=11 // pred_check_branch
        %174 = sbr.rel (%p172) target = $region16
      $region15: #{discriminator_forward.8} parent=11 // pred_region
        %p175 = scmp.lt.s32.totalorder %s20, 0
        %s176 = scalar_select %p175, %s20, 0
        %s177 = smul.addr %s176, 4
        %s178 = scalar_lea.vmem %s1, %s177
      $region16: #{discriminator_forward.8} parent=11 // pred_fallthru
        _
      // Predicated region
      $region17: #{discriminator_forward.8} parent=11 // pred_check
        %p179 = pneg %p101
      $region18: #{discriminator_forward.8} parent=11 // pred_check_branch
        %181 = sbr.rel (%p179) target = $region20
      $region19: #{discriminator_forward.8} parent=11 // pred_region
        %p182 = scmp.lt.s32.totalorder %s20, 0
        %s183 = scalar_select %p182, %s20, 0
        %s184 = scalar_lea.vmem %s2, %s183
      $region20: #{discriminator_forward.8} parent=11 // pred_fallthru
        _
    $region12: #{discriminator_forward.8} parent=5 // pred_fallthru
      _
    %p185 = scmp.lt.s32.totalorder %s11, 2
    // Predicated region
    $region21: #{discriminator_forward.8} parent=5 // pred_check
      %p186 = pneg %p185
    $region22: #{discriminator_forward.8} parent=5 // pred_check_branch
      %188 = sbr.rel (%p186) target = $region24
    $region23: #{discriminator_forward.8} parent=5 // pred_region
      // Predicated region
      $region25: #{discriminator_forward.8} parent=23 // pred_check
        %p189 = pneg %p43
      $region26: #{discriminator_forward.8} parent=23 // pred_check_branch
        %191 = sbr.rel (%p189) target = $region28
      $region27: #{discriminator_forward.8} parent=23 // pred_region
        %s192 = smul.u32 8, %s19
        %p193 = scmp.lt.s32.totalorder %s192, 15
        %s194 = scalar_select %p193, %s192, 15
        %s195 = smul.addr %s194, 2
        %s196 = smul.addr %s195, 4
        %s197 = scalar_lea.vmem %s0, %s196
        %s198 = smul.u32 8, %s19
      $region28: #{discriminator_forward.8} parent=23 // pred_fallthru
        _
    $region24: #{discriminator_forward.8} parent=5 // pred_fallthru
      _
    %p199 = scmp.le.s32.totalorder 1, %s11
    %p200 = scmp.lt.s32.totalorder %s11, 3
    %p201 = pnand %p199, %p200
    %p202 = pneg %p201
    // Predicated region
    $region29: #{discriminator_forward.8} parent=5 // pred_check
      _
    $region30: #{discriminator_forward.8} parent=5 // pred_check_branch
      %204 = sbr.rel (%p201) target = $region32
    $region31: #{discriminator_forward.8} parent=5 // pred_region
      %s205 = ssub.s32 %s11, 1
      %s206 = smul.u32 8, %s21
      %p207 = scmp.lt.s32.totalorder %s206, 15
      %s208 = scalar_select %p207, %s206, 15
      %s209 = smul.addr %s208, 2
      %s210 = smul.addr %s209, 4
      %s211 = scalar_lea.vmem %s0, %s210
      %p212 = pneg %p49
      %p213 = pneg %p46
      %p214 = scmp.lt.s32.totalorder %s20, 0
      %s215 = scalar_select %p214, %s20, 0
      %s216 = smul.addr %s215, 4
      %s217 = scalar_lea.vmem %s1, %s216
      %p218 = pneg %p75
      %p219 = pneg %p72
      %p220 = scmp.lt.s32.totalorder %s20, 0
      %s221 = scalar_select %p220, %s20, 0
      %s222 = scalar_lea.vmem %s2, %s221
      %p223 = pneg %p101
      %p224 = pneg %p98
      %p225 = pneg %p129
      %p226 = pneg %p126
      %s227 = smul.u32 8, %s21
      %p228 = scmp.lt.s32.totalorder %s227, 15
      %s229 = scalar_select %p228, %s227, 15
      %p230 = scmp.lt.s32.totalorder %s20, 0
      %s231 = scalar_select %p230, %s20, 0
      %s232 = sadd.s32 %s231, %s229
      %s233 = smul.addr %s232, 4
      %s234 = scalar_lea.vmem %s3, %s233
      %p235 = pneg %p157
      %p236 = pneg %p154
      %p237 = scmp.lt.s32.totalorder %s21, 1
      %s238 = scalar_select %p237, %s21, 1
      %p239 = scmp.lt.s32.totalorder %s20, 0
      %s240 = scalar_select %p239, %s20, 0
      %s241 = sadd.s32 %s240, %s238
      %s242 = smul.addr %s241, 2
      %s243 = scalar_lea.vmem %s4, %s242
      %s244 = smul.u32 8, %s21
      %p245 = scmp.lt.s32.totalorder %s244, 15
      %s246 = scalar_select %p245, %s244, 15
      %s247 = smul.addr %s246, 2
      %s248 = smul.addr %s247, 4
      %s249 = scalar_lea.vmem %s0, %s248
      %s250 = smul.u32 8, %s21
      %p251 = scmp.lt.s32.totalorder %s20, 0
      %s252 = scalar_select %p251, %s20, 0
      %s253 = smul.addr %s252, 4
      %s254 = scalar_lea.vmem %s1, %s253
      %p255 = scmp.lt.s32.totalorder %s20, 0
      %s256 = scalar_select %p255, %s20, 0
      %s257 = scalar_lea.vmem %s2, %s256
      %s258 = smul.u32 8, %s21
      %p259 = scmp.lt.s32.totalorder %s258, 15
      %s260 = scalar_select %p259, %s258, 15
      %p261 = scmp.lt.s32.totalorder %s20, 0
      %s262 = scalar_select %p261, %s20, 0
      %s263 = sadd.s32 %s262, %s260
      %s264 = smul.addr %s263, 4
      %s265 = scalar_lea.vmem %s3, %s264
      %s266 = smul.u32 8, %s21
      %p267 = scmp.lt.s32.totalorder %s21, 1
      %s268 = scalar_select %p267, %s21, 1
      %p269 = scmp.lt.s32.totalorder %s20, 0
      %s270 = scalar_select %p269, %s20, 0
      %s271 = sadd.s32 %s270, %s268
      %s272 = smul.addr %s271, 2
      %s273 = scalar_lea.vmem %s4, %s272
      %v275 = vld [vmem:[%s249] sm:$0xff]
      %v276 = vld [vmem:[%s249 + $0x8] sm:$0xff]
      %v277 = vld [vmem:[%s249 + $0x10] sm:$0xff]
      %v278 = vld [vmem:[%s249 + $0x18] sm:$0xff]
      %v279 = vld [vmem:[%s249 + $0x20] sm:$0xff]
      %v280 = vld [vmem:[%s249 + $0x28] sm:$0xff]
      %v281 = vld [vmem:[%s249 + $0x30] sm:$0xff]
      %v282 = vld [vmem:[%s249 + $0x38] sm:$0xff]
      %v283 = vld [vmem:[%s254] sm:$0xf]
      %v284 = vld [vmem:[%s254 + $0x4] sm:$0xf]
      %v285 = vld [vmem:[%s254 + $0x8] sm:$0xf]
      %v286 = vld [vmem:[%s254 + $0xc] sm:$0xf]
      %v287 = vld [vmem:[%s254 + $0x10] sm:$0xf]
      %v288 = vld [vmem:[%s254 + $0x14] sm:$0xf]
      %v289 = vld [vmem:[%s254 + $0x18] sm:$0xf]
      %v290 = vld [vmem:[%s254 + $0x1c] sm:$0xf]
      %v291 = vld [vmem:[%s254 + $0x20] sm:$0xf]
      %v292 = vld [vmem:[%s254 + $0x24] sm:$0xf]
      %v293 = vld [vmem:[%s254 + $0x28] sm:$0xf]
      %v294 = vld [vmem:[%s254 + $0x2c] sm:$0xf]
      %v295 = vld [vmem:[%s254 + $0x30] sm:$0xf]
      %v296 = vld [vmem:[%s254 + $0x34] sm:$0xf]
      %v297 = vld [vmem:[%s254 + $0x38] sm:$0xf]
      %v298 = vld [vmem:[%s254 + $0x3c] sm:$0xf]
      %v299 = vld [vmem:[%s254 + $0x40] sm:$0xf]
      %v300 = vld [vmem:[%s254 + $0x44] sm:$0xf]
      %v301 = vld [vmem:[%s254 + $0x48] sm:$0xf]
      %v302 = vld [vmem:[%s254 + $0x4c] sm:$0xf]
      %v303 = vld [vmem:[%s254 + $0x50] sm:$0xf]
      %v304 = vld [vmem:[%s254 + $0x54] sm:$0xf]
      %v305 = vld [vmem:[%s254 + $0x58] sm:$0xf]
      %v306 = vld [vmem:[%s254 + $0x5c] sm:$0xf]
      %v307 = vld [vmem:[%s254 + $0x60] sm:$0xf]
      %v308 = vld [vmem:[%s254 + $0x64] sm:$0xf]
      %v309 = vld [vmem:[%s254 + $0x68] sm:$0xf]
      %v310 = vld [vmem:[%s254 + $0x6c] sm:$0xf]
      %v311 = vld [vmem:[%s254 + $0x70] sm:$0xf]
      %v312 = vld [vmem:[%s254 + $0x74] sm:$0xf]
      %v313 = vld [vmem:[%s254 + $0x78] sm:$0xf]
      %v314 = vld [vmem:[%s254 + $0x7c] sm:$0xf]
      %v315 = vld [vmem:[%s257] sm:$0x1]
      %v317 = vlaneseq
      %v318 = vshrl.u32 %v317, 7
      %v319 = vsub.s32 0, %v318
      %v320 = vrot.slane %v315, %v319
      %v330 = vunpack.c.l.b16 %v275
      %v331 = vunpack.c.h.b16 %v275
      %v332 = vunpack.c.l.b16 %v276
      %v333 = vunpack.c.h.b16 %v276
      %v334 = vunpack.c.l.b16 %v277
      %v335 = vunpack.c.h.b16 %v277
      %v336 = vunpack.c.l.b16 %v278
      %v337 = vunpack.c.h.b16 %v278
      %v338 = vunpack.c.l.b16 %v279
      %v339 = vunpack.c.h.b16 %v279
      %v340 = vunpack.c.l.b16 %v280
      %v341 = vunpack.c.h.b16 %v280
      %v342 = vunpack.c.l.b16 %v281
      %v343 = vunpack.c.h.b16 %v281
      %v344 = vunpack.c.l.b16 %v282
      %v345 = vunpack.c.h.b16 %v282
      %v346 = vpack.c.b16 %v332, %v330
      %v347 = vpack.c.b16 %v333, %v331
      %v348 = vpack.c.b16 %v336, %v334
      %v349 = vpack.c.b16 %v337, %v335
      %v350 = vpack.c.b16 %v340, %v338
      %v351 = vpack.c.b16 %v341, %v339
      %v352 = vpack.c.b16 %v344, %v342
      %v353 = vpack.c.b16 %v345, %v343
      %v394 = vunpack.c.l.b16 %v283
      %v395 = vunpack.c.l.b16 %v284
      %v396 = vunpack.c.l.b16 %v285
      %v397 = vunpack.c.l.b16 %v286
      %v398 = vunpack.c.l.b16 %v287
      %v399 = vunpack.c.l.b16 %v288
      %v400 = vunpack.c.l.b16 %v289
      %v401 = vunpack.c.l.b16 %v290
      %v402 = vunpack.c.l.b16 %v291
      %v403 = vunpack.c.l.b16 %v292
      %v404 = vunpack.c.l.b16 %v293
      %v405 = vunpack.c.l.b16 %v294
      %v406 = vunpack.c.l.b16 %v295
      %v407 = vunpack.c.l.b16 %v296
      %v408 = vunpack.c.l.b16 %v297
      %v409 = vunpack.c.l.b16 %v298
      %v410 = vunpack.c.l.b16 %v299
      %v411 = vunpack.c.l.b16 %v300
      %v412 = vunpack.c.l.b16 %v301
      %v413 = vunpack.c.l.b16 %v302
      %v414 = vunpack.c.l.b16 %v303
      %v415 = vunpack.c.l.b16 %v304
      %v416 = vunpack.c.l.b16 %v305
      %v417 = vunpack.c.l.b16 %v306
      %v418 = vunpack.c.l.b16 %v307
      %v419 = vunpack.c.l.b16 %v308
      %v420 = vunpack.c.l.b16 %v309
      %v421 = vunpack.c.l.b16 %v310
      %v422 = vunpack.c.l.b16 %v311
      %v423 = vunpack.c.l.b16 %v312
      %v424 = vunpack.c.l.b16 %v313
      %v425 = vunpack.c.l.b16 %v314
      %v426 = vpack.c.b16 %v395, %v394
      %v427 = vpack.c.b16 %v397, %v396
      %v428 = vpack.c.b16 %v399, %v398
      %v429 = vpack.c.b16 %v401, %v400
      %v430 = vpack.c.b16 %v403, %v402
      %v431 = vpack.c.b16 %v405, %v404
      %v432 = vpack.c.b16 %v407, %v406
      %v433 = vpack.c.b16 %v409, %v408
      %v434 = vpack.c.b16 %v411, %v410
      %v435 = vpack.c.b16 %v413, %v412
      %v436 = vpack.c.b16 %v415, %v414
      %v437 = vpack.c.b16 %v417, %v416
      %v438 = vpack.c.b16 %v419, %v418
      %v439 = vpack.c.b16 %v421, %v420
      %v440 = vpack.c.b16 %v423, %v422
      %v441 = vpack.c.b16 %v425, %v424
      %458 = vmatprep.subr.bf16.mxu0 0
      %459 = vmatpush1.bf16.msra.mxu0 %v426
      %460 = vmatprep.subr.bf16.mxu0 0
      %461 = vmatpush1.bf16.msra.mxu0 %v427
      %462 = vmatprep.subr.bf16.mxu0 0
      %463 = vmatpush1.bf16.msra.mxu0 %v428
      %464 = vmatprep.subr.bf16.mxu0 0
      %465 = vmatpush1.bf16.msra.mxu0 %v429
      %466 = vmatprep.subr.bf16.mxu0 0
      %467 = vmatpush1.bf16.msra.mxu0 %v430
      %468 = vmatprep.subr.bf16.mxu0 0
      %469 = vmatpush1.bf16.msra.mxu0 %v431
      %470 = vmatprep.subr.bf16.mxu0 0
      %471 = vmatpush1.bf16.msra.mxu0 %v432
      %472 = vmatprep.subr.bf16.mxu0 0
      %473 = vmatpush1.bf16.msra.mxu0 %v433
      %474 = vmatprep.subr.bf16.mxu0 0
      %475 = vmatpush1.bf16.msra.mxu0 %v434
      %476 = vmatprep.subr.bf16.mxu0 0
      %477 = vmatpush1.bf16.msra.mxu0 %v435
      %478 = vmatprep.subr.bf16.mxu0 0
      %479 = vmatpush1.bf16.msra.mxu0 %v436
      %480 = vmatprep.subr.bf16.mxu0 0
      %481 = vmatpush1.bf16.msra.mxu0 %v437
      %482 = vmatprep.subr.bf16.mxu0 0
      %483 = vmatpush1.bf16.msra.mxu0 %v438
      %484 = vmatprep.subr.bf16.mxu0 0
      %485 = vmatpush1.bf16.msra.mxu0 %v439
      %486 = vmatprep.subr.bf16.mxu0 0
      %487 = vmatpush1.bf16.msra.mxu0 %v440
      %488 = vmatprep.subr.bf16.mxu0 0
      %489 = vmatpush1.bf16.msra.mxu0 %v441
      %490 = vmatprep.mubr.bf16.mxu0 %v347
      %491 = vmatmul.mubr.bf16.gmra.mrb[0].mxu0 %v346
      %v492 = vpop.f32.mrb[0].mxu0
      %v493 = vadd.f32 %v320, %v492
      %v494 = vpop.f32.mrb[0].mxu0
      %v495 = vpop.f32.mrb[0].mxu0
      %v496 = vadd.f32 %v320, %v495
      %v497 = vpop.f32.mrb[0].mxu0
      %498 = vmatprep.mubr.bf16.mxu0 %v349
      %499 = vmatmul.mubr.bf16.gmra.mrb[0].mxu0 %v348
      %v500 = vpop.f32.mrb[0].mxu0
      %v501 = vadd.f32 %v320, %v500
      %v502 = vpop.f32.mrb[0].mxu0
      %v503 = vpop.f32.mrb[0].mxu0
      %v504 = vadd.f32 %v320, %v503
      %v505 = vpop.f32.mrb[0].mxu0
      %506 = vmatprep.mubr.bf16.mxu0 %v351
      %507 = vmatmul.mubr.bf16.gmra.mrb[0].mxu0 %v350
      %v508 = vpop.f32.mrb[0].mxu0
      %v509 = vadd.f32 %v320, %v508
      %v510 = vpop.f32.mrb[0].mxu0
      %v511 = vpop.f32.mrb[0].mxu0
      %v512 = vadd.f32 %v320, %v511
      %v513 = vpop.f32.mrb[0].mxu0
      %514 = vmatprep.mubr.bf16.mxu0 %v353
      %515 = vmatmul.mubr.bf16.gmra.mrb[0].mxu0 %v352
      %v516 = vpop.f32.mrb[0].mxu0
      %v517 = vadd.f32 %v320, %v516
      %v518 = vpop.f32.mrb[0].mxu0
      %v519 = vpop.f32.mrb[0].mxu0
      %v520 = vadd.f32 %v320, %v519
      %v521 = vpop.f32.mrb[0].mxu0
      %522 = vdwg.mxu0
      %v523 = vadd.f32 %v493, %v496
      %v524 = vadd.f32 %v523, %v501
      %v525 = vadd.f32 %v524, %v504
      %v526 = vadd.f32 %v525, %v509
      %v527 = vadd.f32 %v526, %v512
      %v528 = vadd.f32 %v527, %v517
      %v529 = vadd.f32 %v528, %v520
      %v530 = vrot.slane %v529, 4
      %v531 = vadd.f32 %v529, %v530
      %v532 = vrot.slane %v531, 2
      %v533 = vadd.f32 %v531, %v532
      %v534 = vrot.slane %v533, 1
      %v535 = vadd.f32 %v533, %v534
      %536 = vst [vmem:[%s273] sm:$0x1] %v535
      %v537 = vmul.f32 %v493, %v493
      %v538 = vmul.f32 %v496, %v496
      %v539 = vmul.f32 %v501, %v501
      %v540 = vmul.f32 %v504, %v504
      %v541 = vmul.f32 %v509, %v509
      %v542 = vmul.f32 %v512, %v512
      %v543 = vmul.f32 %v517, %v517
      %v544 = vmul.f32 %v520, %v520
      %v545 = vadd.f32 %v537, %v538
      %v546 = vadd.f32 %v545, %v539
      %v547 = vadd.f32 %v546, %v540
      %v548 = vadd.f32 %v547, %v541
      %v549 = vadd.f32 %v548, %v542
      %v550 = vadd.f32 %v549, %v543
      %v551 = vadd.f32 %v550, %v544
      %v552 = vrot.slane %v551, 4
      %v553 = vadd.f32 %v551, %v552
      %v554 = vrot.slane %v553, 2
      %v555 = vadd.f32 %v553, %v554
      %v556 = vrot.slane %v555, 1
      %v557 = vadd.f32 %v555, %v556
      %558 = vst [vmem:[%s273 + $0x1] sm:$0x1] %v557
      %v559 = vpack.c.bf16 %v496, %v493
      %v560 = vpack.c.bf16 %v504, %v501
      %v561 = vpack.c.bf16 %v512, %v509
      %v562 = vpack.c.bf16 %v520, %v517
      %v567 = vunpack.c.l.b16 %v559
      %v568 = vunpack.c.h.b16 %v559
      %v569 = vunpack.c.l.b16 %v560
      %v570 = vunpack.c.h.b16 %v560
      %v571 = vunpack.c.l.b16 %v561
      %v572 = vunpack.c.h.b16 %v561
      %v573 = vunpack.c.l.b16 %v562
      %v574 = vunpack.c.h.b16 %v562
      %v575 = vpack.c.b16 %v567, %v567
      %v576 = vpack.c.b16 %v568, %v568
      %v577 = vpack.c.b16 %v569, %v569
      %v578 = vpack.c.b16 %v570, %v570
      %v579 = vpack.c.b16 %v571, %v571
      %v580 = vpack.c.b16 %v572, %v572
      %v581 = vpack.c.b16 %v573, %v573
      %v582 = vpack.c.b16 %v574, %v574
      %591 = vst [vmem:[%s265] sm:$0xf] %v575
      %592 = vst [vmem:[%s265 + $0x4] sm:$0xf] %v576
      %593 = vst [vmem:[%s265 + $0x8] sm:$0xf] %v577
      %594 = vst [vmem:[%s265 + $0xc] sm:$0xf] %v578
      %595 = vst [vmem:[%s265 + $0x10] sm:$0xf] %v579
      %596 = vst [vmem:[%s265 + $0x14] sm:$0xf] %v580
      %597 = vst [vmem:[%s265 + $0x18] sm:$0xf] %v581
      %598 = vst [vmem:[%s265 + $0x1c] sm:$0xf] %v582
      %s599 = smul.u32 8, %s21
      %p600 = scmp.lt.s32.totalorder %s599, 15
      %s601 = scalar_select %p600, %s599, 15
      %p602 = scmp.lt.s32.totalorder %s20, 0
      %s603 = scalar_select %p602, %s20, 0
      %s604 = sadd.s32 %s603, %s601
      %s605 = smul.addr %s604, 4
      %s606 = scalar_lea.vmem %s3, %s605
      %p607 = scmp.lt.s32.totalorder %s21, 1
      %s608 = scalar_select %p607, %s21, 1
      %p609 = scmp.lt.s32.totalorder %s20, 0
      %s610 = scalar_select %p609, %s20, 0
      %s611 = sadd.s32 %s610, %s608
      %s612 = smul.addr %s611, 2
      %s613 = scalar_lea.vmem %s4, %s612
      // Predicated region
      $region33: #{discriminator_forward.8} parent=31 // pred_check
        %p614 = pneg %p126
      $region34: #{discriminator_forward.8} parent=31 // pred_check_branch
        %616 = sbr.rel (%p614) target = $region36
      $region35: #{discriminator_forward.8} parent=31 // pred_region
        %s617 = smul.u32 8, %s21
      $region36: #{discriminator_forward.8} parent=31 // pred_fallthru
        _
      // Predicated region
      $region37: #{discriminator_forward.8} parent=31 // pred_check
        %p618 = pneg %p154
      $region38: #{discriminator_forward.8} parent=31 // pred_check_branch
        %620 = sbr.rel (%p618) target = $region40
      $region39: #{discriminator_forward.8} parent=31 // pred_region
        _
      $region40: #{discriminator_forward.8} parent=31 // pred_fallthru
        _
    $region32: #{discriminator_forward.8} parent=5 // pred_fallthru
      _
    %p621 = scmp.le.s32.totalorder 2, %s11
    // Predicated region
    $region41: #{discriminator_forward.8} parent=5 // pred_check
      %p622 = pneg %p621
    $region42: #{discriminator_forward.8} parent=5 // pred_check_branch
      %624 = sbr.rel (%p622) target = $region44
    $region43: #{discriminator_forward.8} parent=5 // pred_region
      %s625 = ssub.s32 %s11, 2
      // Predicated region
      $region45: #{discriminator_forward.8} parent=43 // pred_check
        %p626 = pneg %p132
      $region46: #{discriminator_forward.8} parent=43 // pred_check_branch
        %628 = sbr.rel (%p626) target = $region48
      $region47: #{discriminator_forward.8} parent=43 // pred_region
        %s629 = smul.u32 8, %s23
        %p630 = scmp.lt.s32.totalorder %s629, 15
        %s631 = scalar_select %p630, %s629, 15
        %p632 = scmp.lt.s32.totalorder %s22, 0
        %s633 = scalar_select %p632, %s22, 0
        %s634 = sadd.s32 %s633, %s631
        %s635 = smul.addr %s634, 4
        %s636 = scalar_lea.vmem %s3, %s635
      $region48: #{discriminator_forward.8} parent=43 // pred_fallthru
        _
      // Predicated region
      $region49: #{discriminator_forward.8} parent=43 // pred_check
        %p637 = pneg %p160
      $region50: #{discriminator_forward.8} parent=43 // pred_check_branch
        %639 = sbr.rel (%p637) target = $region52
      $region51: #{discriminator_forward.8} parent=43 // pred_region
        %p640 = scmp.lt.s32.totalorder %s23, 1
        %s641 = scalar_select %p640, %s23, 1
        %p642 = scmp.lt.s32.totalorder %s22, 0
        %s643 = scalar_select %p642, %s22, 0
        %s644 = sadd.s32 %s643, %s641
        %s645 = smul.addr %s644, 2
        %s646 = scalar_lea.vmem %s4, %s645
      $region52: #{discriminator_forward.8} parent=43 // pred_fallthru
        _
    $region44: #{discriminator_forward.8} parent=5 // pred_fallthru
      _
  $region6: #{discriminator_forward.8} parent=0 // loop_footer
    %s15 = sadd.s32 1, %s11
  $region7: #{discriminator_forward.8} parent=0 // loop_footer_branch
    %10 = sbr.rel target = $region3
  $region8: #{discriminator_forward.8} parent=0 // loop_exit
    _

// kernel: discriminator_forward.9
$region0: #{discriminator_forward.9}
  #allocation0 [shape = 'u32[]', space=smem, size = 0x4, offset = 0x4, fixed_abs, tag = 'smem constant byte address 0x4 - core index']
  #allocation1 [shape = 'u32[144,128]{1,0:T(1,128)}', space=vmem, size = 0x12000, scoped, tag = 'internal scratch']
  %s0 = inlined_call_operand.vmem [shape: bf16[128,128], index: 0, kind: input, shape index: {}]
  %s1 = inlined_call_operand.vmem [shape: f32[1,128], index: 1, kind: input, shape index: {}]
  %s2 = inlined_call_operand.vmem [shape: f32[1,128], index: 2, kind: input, shape index: {}]
  %s3 = inlined_call_operand.vmem [shape: bf16[128,128], index: 3, kind: output, shape index: {}]
  %s4 = sld [smem:[#allocation0]]
  $region45: #{discriminator_forward.9} parent=0
    _
  %s6 = ssub.s32 1, %s4
  %s7 = scalar_select 0, %s6, %s4
  loop: start=0, step=1, limit=4
  $region2: #{discriminator_forward.9} parent=0 // loop_pre_header
    _
  $region3: #{discriminator_forward.9} parent=0 // loop_header
    %s9 = sphi 0, %s13
    %p10 = scmp.ge.s32.totalorder %s9, 4
    %s19 = sphi 0, %s21
    %s22 = sphi 0, %s19
    %s23 = sphi 0, %s22
    %s39 = sphi 0, %s23
    %s43 = sphi 0, %s43
    %s45 = sphi 0, %s43
    %s46 = sphi 0, %s45
    %s60 = sphi 0, %s46
    %s64 = sphi 0, %s64
    %s66 = sphi 0, %s64
    %s67 = sphi 0, %s66
    %s81 = sphi 0, %s67
    %s87 = sphi 0, %s89
    %s90 = sphi 0, %s87
    %s91 = sphi 0, %s90
    %s107 = sphi 0, %s91
  $region4: #{discriminator_forward.9} parent=0 // loop_header_branch
    %12 = sbr.rel (%p10) target = $region8
  $region5: #{discriminator_forward.9} parent=0 // loop_body
    %s14 = ssub.s32 %s9, 1
    %s15 = ssub.s32 %s9, 2
    %s16 = sadd.s32 %s9, 1
    %s17 = ssub.s32 %s9, %s16
    %p18 = scmp.eq.s32.totalorder %s17, 0
    %s20 = sadd.s32 %s19, 1
    %s21 = scalar_select %p18, %s19, %s20
    %p24 = pneg %p18
    %p25 = scmp.eq.s32.totalorder %s9, 1
    %p26 = por %p24, %p25
    %p27 = scmp.ne.s32.totalorder %s19, %s22
    %p28 = scmp.eq.s32.totalorder %s9, 0
    %p29 = por %p27, %p28
    %p30 = scmp.ne.s32.totalorder %s19, %s22
    %p31 = scmp.eq.s32.totalorder %s14, 1
    %p32 = por %p30, %p31
    %p33 = scmp.ne.s32.totalorder %s22, %s23
    %p34 = scmp.eq.s32.totalorder %s14, 0
    %p35 = por %p33, %p34
    %p36 = scmp.ne.s32.totalorder %s22, %s23
    %p37 = scmp.eq.s32.totalorder %s15, 1
    %p38 = por %p36, %p37
    %p40 = scmp.ne.s32.totalorder %s23, %s39
    %p41 = scmp.eq.s32.totalorder %s15, 0
    %p42 = por %p40, %p41
    %s44 = sadd.s32 %s43, 1
    %p47 = scmp.eq.s32.totalorder %s9, 1
    %p48 = scmp.ne.s32.totalorder %s43, %s45
    %p49 = scmp.eq.s32.totalorder %s9, 0
    %p50 = por %p48, %p49
    %p51 = scmp.ne.s32.totalorder %s43, %s45
    %p52 = scmp.eq.s32.totalorder %s14, 1
    %p53 = por %p51, %p52
    %p54 = scmp.ne.s32.totalorder %s45, %s46
    %p55 = scmp.eq.s32.totalorder %s14, 0
    %p56 = por %p54, %p55
    %p57 = scmp.ne.s32.totalorder %s45, %s46
    %p58 = scmp.eq.s32.totalorder %s15, 1
    %p59 = por %p57, %p58
    %p61 = scmp.ne.s32.totalorder %s46, %s60
    %p62 = scmp.eq.s32.totalorder %s15, 0
    %p63 = por %p61, %p62
    %s65 = sadd.s32 %s64, 1
    %p68 = scmp.eq.s32.totalorder %s9, 1
    %p69 = scmp.ne.s32.totalorder %s64, %s66
    %p70 = scmp.eq.s32.totalorder %s9, 0
    %p71 = por %p69, %p70
    %p72 = scmp.ne.s32.totalorder %s64, %s66
    %p73 = scmp.eq.s32.totalorder %s14, 1
    %p74 = por %p72, %p73
    %p75 = scmp.ne.s32.totalorder %s66, %s67
    %p76 = scmp.eq.s32.totalorder %s14, 0
    %p77 = por %p75, %p76
    %p78 = scmp.ne.s32.totalorder %s66, %s67
    %p79 = scmp.eq.s32.totalorder %s15, 1
    %p80 = por %p78, %p79
    %p82 = scmp.ne.s32.totalorder %s67, %s81
    %p83 = scmp.eq.s32.totalorder %s15, 0
    %p84 = por %p82, %p83
    %s85 = ssub.s32 %s9, %s16
    %p86 = scmp.eq.s32.totalorder %s85, 0
    %s88 = sadd.s32 %s87, 1
    %s89 = scalar_select %p86, %s87, %s88
    %p92 = pneg %p86
    %p93 = scmp.eq.s32.totalorder %s9, 1
    %p94 = por %p92, %p93
    %p95 = scmp.ne.s32.totalorder %s87, %s90
    %p96 = scmp.eq.s32.totalorder %s9, 0
    %p97 = por %p95, %p96
    %p98 = scmp.ne.s32.totalorder %s87, %s90
    %p99 = scmp.eq.s32.totalorder %s14, 1
    %p100 = por %p98, %p99
    %p101 = scmp.ne.s32.totalorder %s90, %s91
    %p102 = scmp.eq.s32.totalorder %s14, 0
    %p103 = por %p101, %p102
    %p104 = scmp.ne.s32.totalorder %s90, %s91
    %p105 = scmp.eq.s32.totalorder %s15, 1
    %p106 = por %p104, %p105
    %p108 = scmp.ne.s32.totalorder %s91, %s107
    %p109 = scmp.eq.s32.totalorder %s15, 0
    %p110 = por %p108, %p109
    %p111 = scmp.le.s32.totalorder 1, %s9
    %p112 = scmp.lt.s32.totalorder %s9, 3
    %p113 = pnand %p111, %p112
    %p114 = pneg %p113
    // Predicated region
    $region9: #{discriminator_forward.9} parent=5 // pred_check
      _
    $region10: #{discriminator_forward.9} parent=5 // pred_check_branch
      %116 = sbr.rel (%p113) target = $region12
    $region11: #{discriminator_forward.9} parent=5 // pred_region
      %s117 = ssub.s32 %s9, 1
      // Predicated region
      $region13: #{discriminator_forward.9} parent=11 // pred_check
        %p118 = pneg %p56
      $region14: #{discriminator_forward.9} parent=11 // pred_check_branch
        %120 = sbr.rel (%p118) target = $region16
      $region15: #{discriminator_forward.9} parent=11 // pred_region
        _
      $region16: #{discriminator_forward.9} parent=11 // pred_fallthru
        _
      // Predicated region
      $region17: #{discriminator_forward.9} parent=11 // pred_check
        %p121 = pneg %p77
      $region18: #{discriminator_forward.9} parent=11 // pred_check_branch
        %123 = sbr.rel (%p121) target = $region20
      $region19: #{discriminator_forward.9} parent=11 // pred_region
        _
      $region20: #{discriminator_forward.9} parent=11 // pred_fallthru
        _
    $region12: #{discriminator_forward.9} parent=5 // pred_fallthru
      _
    %p124 = scmp.lt.s32.totalorder %s9, 2
    // Predicated region
    $region21: #{discriminator_forward.9} parent=5 // pred_check
      %p125 = pneg %p124
    $region22: #{discriminator_forward.9} parent=5 // pred_check_branch
      %127 = sbr.rel (%p125) target = $region24
    $region23: #{discriminator_forward.9} parent=5 // pred_region
      // Predicated region
      $region25: #{discriminator_forward.9} parent=23 // pred_check
        %p128 = pneg %p29
      $region26: #{discriminator_forward.9} parent=23 // pred_check_branch
        %130 = sbr.rel (%p128) target = $region28
      $region27: #{discriminator_forward.9} parent=23 // pred_region
        %s131 = smul.u32 8, %s9
        %p132 = scmp.lt.s32.totalorder %s131, 15
        %s133 = scalar_select %p132, %s131, 15
        %s134 = smul.addr %s133, 4
        %s135 = scalar_lea.vmem %s0, %s134
        %s136 = smul.u32 8, %s9
      $region28: #{discriminator_forward.9} parent=23 // pred_fallthru
        _
    $region24: #{discriminator_forward.9} parent=5 // pred_fallthru
      _
    %p137 = scmp.le.s32.totalorder 1, %s9
    %p138 = scmp.lt.s32.totalorder %s9, 3
    %p139 = pnand %p137, %p138
    %p140 = pneg %p139
    // Predicated region
    $region29: #{discriminator_forward.9} parent=5 // pred_check
      _
    $region30: #{discriminator_forward.9} parent=5 // pred_check_branch
      %142 = sbr.rel (%p139) target = $region32
    $region31: #{discriminator_forward.9} parent=5 // pred_region
      %s143 = ssub.s32 %s9, 1
      %s144 = smul.u32 8, %s14
      %p145 = scmp.lt.s32.totalorder %s144, 15
      %s146 = scalar_select %p145, %s144, 15
      %s147 = smul.addr %s146, 4
      %s148 = scalar_lea.vmem %s0, %s147
      %p149 = pneg %p35
      %p150 = pneg %p32
      %p151 = pneg %p56
      %p152 = pneg %p53
      %p153 = pneg %p77
      %p154 = pneg %p74
      %p155 = pneg %p103
      %p156 = pneg %p100
      %s157 = smul.u32 8, %s14
      %p158 = scmp.lt.s32.totalorder %s157, 15
      %s159 = scalar_select %p158, %s157, 15
      %s160 = smul.addr %s159, 4
      %s161 = scalar_lea.vmem %s3, %s160
      %s162 = smul.u32 8, %s14
      %p163 = scmp.lt.s32.totalorder %s162, 15
      %s164 = scalar_select %p163, %s162, 15
      %s165 = smul.addr %s164, 4
      %s166 = scalar_lea.vmem %s0, %s165
      %s167 = smul.u32 8, %s14
      %s168 = smul.u32 8, %s14
      %p169 = scmp.lt.s32.totalorder %s168, 15
      %s170 = scalar_select %p169, %s168, 15
      %s171 = smul.addr %s170, 4
      %s172 = scalar_lea.vmem %s3, %s171
      %s173 = smul.u32 8, %s14
      %v174 = vld [vmem:[%s166] sm:$0xf]
      %v175 = vld [vmem:[%s166 + $0x4] sm:$0xf]
      %v176 = vld [vmem:[%s166 + $0x8] sm:$0xf]
      %v177 = vld [vmem:[%s166 + $0xc] sm:$0xf]
      %v178 = vld [vmem:[%s166 + $0x10] sm:$0xf]
      %v179 = vld [vmem:[%s166 + $0x14] sm:$0xf]
      %v180 = vld [vmem:[%s166 + $0x18] sm:$0xf]
      %v181 = vld [vmem:[%s166 + $0x1c] sm:$0xf]
      %v182 = vunpack.c.l.bf16 %v174
      %v183 = vunpack.c.l.bf16 %v175
      %v184 = vunpack.c.l.bf16 %v176
      %v185 = vunpack.c.l.bf16 %v177
      %v186 = vunpack.c.l.bf16 %v178
      %v187 = vunpack.c.l.bf16 %v179
      %v188 = vunpack.c.l.bf16 %v180
      %v189 = vunpack.c.l.bf16 %v181
      %v190 = vld [vmem:[%s1] sm:$0x1]
      %v192 = vlaneseq
      %v193 = vshrl.u32 %v192, 7
      %v194 = vsub.s32 0, %v193
      %v195 = vrot.slane %v190, %v194
      %v197 = vmul.f32 %v182, %v195
      %v198 = vmul.f32 %v183, %v195
      %v199 = vmul.f32 %v184, %v195
      %v200 = vmul.f32 %v185, %v195
      %v201 = vmul.f32 %v186, %v195
      %v202 = vmul.f32 %v187, %v195
      %v203 = vmul.f32 %v188, %v195
      %v204 = vmul.f32 %v189, %v195
      %v205 = vld [vmem:[%s2] sm:$0x1]
      %v207 = vlaneseq
      %v208 = vshrl.u32 %v207, 7
      %v209 = vsub.s32 0, %v208
      %v210 = vrot.slane %v205, %v209
      %v212 = vadd.f32 %v197, %v210
      %v213 = vadd.f32 %v198, %v210
      %v214 = vadd.f32 %v199, %v210
      %v215 = vadd.f32 %v200, %v210
      %v216 = vadd.f32 %v201, %v210
      %v217 = vadd.f32 %v202, %v210
      %v218 = vadd.f32 %v203, %v210
      %v219 = vadd.f32 %v204, %v210
      %vm220 = vcmp.ge.f32.partialorder %v212, 0.0
      %vm221 = vcmp.ge.f32.partialorder %v213, 0.0
      %vm222 = vcmp.ge.f32.partialorder %v214, 0.0
      %vm223 = vcmp.ge.f32.partialorder %v215, 0.0
      %vm224 = vcmp.ge.f32.partialorder %v216, 0.0
      %vm225 = vcmp.ge.f32.partialorder %v217, 0.0
      %vm226 = vcmp.ge.f32.partialorder %v218, 0.0
      %vm227 = vcmp.ge.f32.partialorder %v219, 0.0
      %v228 = vmul.f32 %v212, 0.2
      %v229 = vmul.f32 %v213, 0.2
      %v230 = vmul.f32 %v214, 0.2
      %v231 = vmul.f32 %v215, 0.2
      %v232 = vmul.f32 %v216, 0.2
      %v233 = vmul.f32 %v217, 0.2
      %v234 = vmul.f32 %v218, 0.2
      %v235 = vmul.f32 %v219, 0.2
      %v236 = vsel %vm220, %v212, %v228
      %v237 = vsel %vm221, %v213, %v229
      %v238 = vsel %vm222, %v214, %v230
      %v239 = vsel %vm223, %v215, %v231
      %v240 = vsel %vm224, %v216, %v232
      %v241 = vsel %vm225, %v217, %v233
      %v242 = vsel %vm226, %v218, %v234
      %v243 = vsel %vm227, %v219, %v235
      %v244 = vpack.c.bf16 %v237, %v236
      %v245 = vpack.c.bf16 %v239, %v238
      %v246 = vpack.c.bf16 %v241, %v240
      %v247 = vpack.c.bf16 %v243, %v242
      %v252 = vunpack.c.l.b16 %v244
      %v253 = vunpack.c.h.b16 %v244
      %v254 = vunpack.c.l.b16 %v245
      %v255 = vunpack.c.h.b16 %v245
      %v256 = vunpack.c.l.b16 %v246
      %v257 = vunpack.c.h.b16 %v246
      %v258 = vunpack.c.l.b16 %v247
      %v259 = vunpack.c.h.b16 %v247
      %v260 = vpack.c.b16 %v252, %v252
      %v261 = vpack.c.b16 %v253, %v253
      %v262 = vpack.c.b16 %v254, %v254
      %v263 = vpack.c.b16 %v255, %v255
      %v264 = vpack.c.b16 %v256, %v256
      %v265 = vpack.c.b16 %v257, %v257
      %v266 = vpack.c.b16 %v258, %v258
      %v267 = vpack.c.b16 %v259, %v259
      %276 = vst [vmem:[%s172] sm:$0xf] %v260
      %277 = vst [vmem:[%s172 + $0x4] sm:$0xf] %v261
      %278 = vst [vmem:[%s172 + $0x8] sm:$0xf] %v262
      %279 = vst [vmem:[%s172 + $0xc] sm:$0xf] %v263
      %280 = vst [vmem:[%s172 + $0x10] sm:$0xf] %v264
      %281 = vst [vmem:[%s172 + $0x14] sm:$0xf] %v265
      %282 = vst [vmem:[%s172 + $0x18] sm:$0xf] %v266
      %283 = vst [vmem:[%s172 + $0x1c] sm:$0xf] %v267
      %s284 = smul.u32 8, %s14
      %p285 = scmp.lt.s32.totalorder %s284, 15
      %s286 = scalar_select %p285, %s284, 15
      %s287 = smul.addr %s286, 4
      %s288 = scalar_lea.vmem %s3, %s287
      // Predicated region
      $region33: #{discriminator_forward.9} parent=31 // pred_check
        %p289 = pneg %p100
      $region34: #{discriminator_forward.9} parent=31 // pred_check_branch
        %291 = sbr.rel (%p289) target = $region36
      $region35: #{discriminator_forward.9} parent=31 // pred_region
        %s292 = smul.u32 8, %s14
      $region36: #{discriminator_forward.9} parent=31 // pred_fallthru
        _
    $region32: #{discriminator_forward.9} parent=5 // pred_fallthru
      _
    %p293 = scmp.le.s32.totalorder 2, %s9
    // Predicated region
    $region37: #{discriminator_forward.9} parent=5 // pred_check
      %p294 = pneg %p293
    $region38: #{discriminator_forward.9} parent=5 // pred_check_branch
      %296 = sbr.rel (%p294) target = $region40
    $region39: #{discriminator_forward.9} parent=5 // pred_region
      %s297 = ssub.s32 %s9, 2
      // Predicated region
      $region41: #{discriminator_forward.9} parent=39 // pred_check
        %p298 = pneg %p106
      $region42: #{discriminator_forward.9} parent=39 // pred_check_branch
        %300 = sbr.rel (%p298) target = $region44
      $region43: #{discriminator_forward.9} parent=39 // pred_region
        %s301 = smul.u32 8, %s15
        %p302 = scmp.lt.s32.totalorder %s301, 15
        %s303 = scalar_select %p302, %s301, 15
        %s304 = smul.addr %s303, 4
        %s305 = scalar_lea.vmem %s3, %s304
      $region44: #{discriminator_forward.9} parent=39 // pred_fallthru
        _
    $region40: #{discriminator_forward.9} parent=5 // pred_fallthru
      _
  $region6: #{discriminator_forward.9} parent=0 // loop_footer
    %s13 = sadd.s32 1, %s9
  $region7: #{discriminator_forward.9} parent=0 // loop_footer_branch
    %8 = sbr.rel target = $region3
  $region8: #{discriminator_forward.9} parent=0 // loop_exit
    _

// kernel: discriminator_forward.11
$region0: #{discriminator_forward.11}
  #allocation0 [shape = 'u32[]', space=smem, size = 0x4, offset = 0x4, fixed_abs, tag = 'smem constant byte address 0x4 - core index']
  #allocation1 [shape = 'u32[144,128]{1,0:T(1,128)}', space=vmem, size = 0x12000, scoped, tag = 'internal scratch']
  %s0 = inlined_call_operand.vmem [shape: bf16[32,128], index: 0, kind: input, shape index: {}]
  %s1 = inlined_call_operand.vmem [shape: f32[1,128], index: 1, kind: input, shape index: {}]
  %s2 = inlined_call_operand.vmem [shape: f32[1,128], index: 2, kind: input, shape index: {}]
  %s3 = inlined_call_operand.vmem [shape: bf16[32,128], index: 3, kind: output, shape index: {}]
  %s4 = sld [smem:[#allocation0]]
  $region45: #{discriminator_forward.11} parent=0
    _
  %s6 = ssub.s32 1, %s4
  %s7 = scalar_select 0, %s6, %s4
  loop: start=0, step=1, limit=4
  $region2: #{discriminator_forward.11} parent=0 // loop_pre_header
    _
  $region3: #{discriminator_forward.11} parent=0 // loop_header
    %s9 = sphi 0, %s13
    %p10 = scmp.ge.s32.totalorder %s9, 4
    %s19 = sphi 0, %s21
    %s22 = sphi 0, %s19
    %s23 = sphi 0, %s22
    %s39 = sphi 0, %s23
    %s43 = sphi 0, %s43
    %s45 = sphi 0, %s43
    %s46 = sphi 0, %s45
    %s60 = sphi 0, %s46
    %s64 = sphi 0, %s64
    %s66 = sphi 0, %s64
    %s67 = sphi 0, %s66
    %s81 = sphi 0, %s67
    %s87 = sphi 0, %s89
    %s90 = sphi 0, %s87
    %s91 = sphi 0, %s90
    %s107 = sphi 0, %s91
  $region4: #{discriminator_forward.11} parent=0 // loop_header_branch
    %12 = sbr.rel (%p10) target = $region8
  $region5: #{discriminator_forward.11} parent=0 // loop_body
    %s14 = ssub.s32 %s9, 1
    %s15 = ssub.s32 %s9, 2
    %s16 = sadd.s32 %s9, 1
    %s17 = ssub.s32 %s9, %s16
    %p18 = scmp.eq.s32.totalorder %s17, 0
    %s20 = sadd.s32 %s19, 1
    %s21 = scalar_select %p18, %s19, %s20
    %p24 = pneg %p18
    %p25 = scmp.eq.s32.totalorder %s9, 1
    %p26 = por %p24, %p25
    %p27 = scmp.ne.s32.totalorder %s19, %s22
    %p28 = scmp.eq.s32.totalorder %s9, 0
    %p29 = por %p27, %p28
    %p30 = scmp.ne.s32.totalorder %s19, %s22
    %p31 = scmp.eq.s32.totalorder %s14, 1
    %p32 = por %p30, %p31
    %p33 = scmp.ne.s32.totalorder %s22, %s23
    %p34 = scmp.eq.s32.totalorder %s14, 0
    %p35 = por %p33, %p34
    %p36 = scmp.ne.s32.totalorder %s22, %s23
    %p37 = scmp.eq.s32.totalorder %s15, 1
    %p38 = por %p36, %p37
    %p40 = scmp.ne.s32.totalorder %s23, %s39
    %p41 = scmp.eq.s32.totalorder %s15, 0
    %p42 = por %p40, %p41
    %s44 = sadd.s32 %s43, 1
    %p47 = scmp.eq.s32.totalorder %s9, 1
    %p48 = scmp.ne.s32.totalorder %s43, %s45
    %p49 = scmp.eq.s32.totalorder %s9, 0
    %p50 = por %p48, %p49
    %p51 = scmp.ne.s32.totalorder %s43, %s45
    %p52 = scmp.eq.s32.totalorder %s14, 1
    %p53 = por %p51, %p52
    %p54 = scmp.ne.s32.totalorder %s45, %s46
    %p55 = scmp.eq.s32.totalorder %s14, 0
    %p56 = por %p54, %p55
    %p57 = scmp.ne.s32.totalorder %s45, %s46
    %p58 = scmp.eq.s32.totalorder %s15, 1
    %p59 = por %p57, %p58
    %p61 = scmp.ne.s32.totalorder %s46, %s60
    %p62 = scmp.eq.s32.totalorder %s15, 0
    %p63 = por %p61, %p62
    %s65 = sadd.s32 %s64, 1
    %p68 = scmp.eq.s32.totalorder %s9, 1
    %p69 = scmp.ne.s32.totalorder %s64, %s66
    %p70 = scmp.eq.s32.totalorder %s9, 0
    %p71 = por %p69, %p70
    %p72 = scmp.ne.s32.totalorder %s64, %s66
    %p73 = scmp.eq.s32.totalorder %s14, 1
    %p74 = por %p72, %p73
    %p75 = scmp.ne.s32.totalorder %s66, %s67
    %p76 = scmp.eq.s32.totalorder %s14, 0
    %p77 = por %p75, %p76
    %p78 = scmp.ne.s32.totalorder %s66, %s67
    %p79 = scmp.eq.s32.totalorder %s15, 1
    %p80 = por %p78, %p79
    %p82 = scmp.ne.s32.totalorder %s67, %s81
    %p83 = scmp.eq.s32.totalorder %s15, 0
    %p84 = por %p82, %p83
    %s85 = ssub.s32 %s9, %s16
    %p86 = scmp.eq.s32.totalorder %s85, 0
    %s88 = sadd.s32 %s87, 1
    %s89 = scalar_select %p86, %s87, %s88
    %p92 = pneg %p86
    %p93 = scmp.eq.s32.totalorder %s9, 1
    %p94 = por %p92, %p93
    %p95 = scmp.ne.s32.totalorder %s87, %s90
    %p96 = scmp.eq.s32.totalorder %s9, 0
    %p97 = por %p95, %p96
    %p98 = scmp.ne.s32.totalorder %s87, %s90
    %p99 = scmp.eq.s32.totalorder %s14, 1
    %p100 = por %p98, %p99
    %p101 = scmp.ne.s32.totalorder %s90, %s91
    %p102 = scmp.eq.s32.totalorder %s14, 0
    %p103 = por %p101, %p102
    %p104 = scmp.ne.s32.totalorder %s90, %s91
    %p105 = scmp.eq.s32.totalorder %s15, 1
    %p106 = por %p104, %p105
    %p108 = scmp.ne.s32.totalorder %s91, %s107
    %p109 = scmp.eq.s32.totalorder %s15, 0
    %p110 = por %p108, %p109
    %p111 = scmp.le.s32.totalorder 1, %s9
    %p112 = scmp.lt.s32.totalorder %s9, 3
    %p113 = pnand %p111, %p112
    %p114 = pneg %p113
    // Predicated region
    $region9: #{discriminator_forward.11} parent=5 // pred_check
      _
    $region10: #{discriminator_forward.11} parent=5 // pred_check_branch
      %116 = sbr.rel (%p113) target = $region12
    $region11: #{discriminator_forward.11} parent=5 // pred_region
      %s117 = ssub.s32 %s9, 1
      // Predicated region
      $region13: #{discriminator_forward.11} parent=11 // pred_check
        %p118 = pneg %p56
      $region14: #{discriminator_forward.11} parent=11 // pred_check_branch
        %120 = sbr.rel (%p118) target = $region16
      $region15: #{discriminator_forward.11} parent=11 // pred_region
        _
      $region16: #{discriminator_forward.11} parent=11 // pred_fallthru
        _
      // Predicated region
      $region17: #{discriminator_forward.11} parent=11 // pred_check
        %p121 = pneg %p77
      $region18: #{discriminator_forward.11} parent=11 // pred_check_branch
        %123 = sbr.rel (%p121) target = $region20
      $region19: #{discriminator_forward.11} parent=11 // pred_region
        _
      $region20: #{discriminator_forward.11} parent=11 // pred_fallthru
        _
    $region12: #{discriminator_forward.11} parent=5 // pred_fallthru
      _
    %p124 = scmp.lt.s32.totalorder %s9, 2
    // Predicated region
    $region21: #{discriminator_forward.11} parent=5 // pred_check
      %p125 = pneg %p124
    $region22: #{discriminator_forward.11} parent=5 // pred_check_branch
      %127 = sbr.rel (%p125) target = $region24
    $region23: #{discriminator_forward.11} parent=5 // pred_region
      // Predicated region
      $region25: #{discriminator_forward.11} parent=23 // pred_check
        %p128 = pneg %p29
      $region26: #{discriminator_forward.11} parent=23 // pred_check_branch
        %130 = sbr.rel (%p128) target = $region28
      $region27: #{discriminator_forward.11} parent=23 // pred_region
        %s131 = smul.u32 2, %s9
        %p132 = scmp.lt.s32.totalorder %s131, 3
        %s133 = scalar_select %p132, %s131, 3
        %s134 = smul.addr %s133, 4
        %s135 = scalar_lea.vmem %s0, %s134
        %s136 = smul.u32 2, %s9
      $region28: #{discriminator_forward.11} parent=23 // pred_fallthru
        _
    $region24: #{discriminator_forward.11} parent=5 // pred_fallthru
      _
    %p137 = scmp.le.s32.totalorder 1, %s9
    %p138 = scmp.lt.s32.totalorder %s9, 3
    %p139 = pnand %p137, %p138
    %p140 = pneg %p139
    // Predicated region
    $region29: #{discriminator_forward.11} parent=5 // pred_check
      _
    $region30: #{discriminator_forward.11} parent=5 // pred_check_branch
      %142 = sbr.rel (%p139) target = $region32
    $region31: #{discriminator_forward.11} parent=5 // pred_region
      %s143 = ssub.s32 %s9, 1
      %s144 = smul.u32 2, %s14
      %p145 = scmp.lt.s32.totalorder %s144, 3
      %s146 = scalar_select %p145, %s144, 3
      %s147 = smul.addr %s146, 4
      %s148 = scalar_lea.vmem %s0, %s147
      %p149 = pneg %p35
      %p150 = pneg %p32
      %p151 = pneg %p56
      %p152 = pneg %p53
      %p153 = pneg %p77
      %p154 = pneg %p74
      %p155 = pneg %p103
      %p156 = pneg %p100
      %s157 = smul.u32 2, %s14
      %p158 = scmp.lt.s32.totalorder %s157, 3
      %s159 = scalar_select %p158, %s157, 3
      %s160 = smul.addr %s159, 4
      %s161 = scalar_lea.vmem %s3, %s160
      %s162 = smul.u32 2, %s14
      %p163 = scmp.lt.s32.totalorder %s162, 3
      %s164 = scalar_select %p163, %s162, 3
      %s165 = smul.addr %s164, 4
      %s166 = scalar_lea.vmem %s0, %s165
      %s167 = smul.u32 2, %s14
      %s168 = smul.u32 2, %s14
      %p169 = scmp.lt.s32.totalorder %s168, 3
      %s170 = scalar_select %p169, %s168, 3
      %s171 = smul.addr %s170, 4
      %s172 = scalar_lea.vmem %s3, %s171
      %s173 = smul.u32 2, %s14
      %v174 = vld [vmem:[%s166] sm:$0xf]
      %v175 = vld [vmem:[%s166 + $0x4] sm:$0xf]
      %v176 = vunpack.c.l.bf16 %v174
      %v177 = vunpack.c.l.bf16 %v175
      %v178 = vld [vmem:[%s1] sm:$0x1]
      %v180 = vlaneseq
      %v181 = vshrl.u32 %v180, 7
      %v182 = vsub.s32 0, %v181
      %v183 = vrot.slane %v178, %v182
      %v185 = vmul.f32 %v176, %v183
      %v186 = vmul.f32 %v177, %v183
      %v187 = vld [vmem:[%s2] sm:$0x1]
      %v189 = vlaneseq
      %v190 = vshrl.u32 %v189, 7
      %v191 = vsub.s32 0, %v190
      %v192 = vrot.slane %v187, %v191
      %v194 = vadd.f32 %v185, %v192
      %v195 = vadd.f32 %v186, %v192
      %vm196 = vcmp.ge.f32.partialorder %v194, 0.0
      %vm197 = vcmp.ge.f32.partialorder %v195, 0.0
      %v198 = vmul.f32 %v194, 0.2
      %v199 = vmul.f32 %v195, 0.2
      %v200 = vsel %vm196, %v194, %v198
      %v201 = vsel %vm197, %v195, %v199
      %v202 = vpack.c.bf16 %v201, %v200
      %v204 = vunpack.c.l.b16 %v202
      %v205 = vunpack.c.h.b16 %v202
      %v206 = vpack.c.b16 %v204, %v204
      %v207 = vpack.c.b16 %v205, %v205
      %210 = vst [vmem:[%s172] sm:$0xf] %v206
      %211 = vst [vmem:[%s172 + $0x4] sm:$0xf] %v207
      %s212 = smul.u32 2, %s14
      %p213 = scmp.lt.s32.totalorder %s212, 3
      %s214 = scalar_select %p213, %s212, 3
      %s215 = smul.addr %s214, 4
      %s216 = scalar_lea.vmem %s3, %s215
      // Predicated region
      $region33: #{discriminator_forward.11} parent=31 // pred_check
        %p217 = pneg %p100
      $region34: #{discriminator_forward.11} parent=31 // pred_check_branch
        %219 = sbr.rel (%p217) target = $region36
      $region35: #{discriminator_forward.11} parent=31 // pred_region
        %s220 = smul.u32 2, %s14
      $region36: #{discriminator_forward.11} parent=31 // pred_fallthru
        _
    $region32: #{discriminator_forward.11} parent=5 // pred_fallthru
      _
    %p221 = scmp.le.s32.totalorder 2, %s9
    // Predicated region
    $region37: #{discriminator_forward.11} parent=5 // pred_check
      %p222 = pneg %p221
    $region38: #{discriminator_forward.11} parent=5 // pred_check_branch
      %224 = sbr.rel (%p222) target = $region40
    $region39: #{discriminator_forward.11} parent=5 // pred_region
      %s225 = ssub.s32 %s9, 2
      // Predicated region
      $region41: #{discriminator_forward.11} parent=39 // pred_check
        %p226 = pneg %p106
      $region42: #{discriminator_forward.11} parent=39 // pred_check_branch
        %228 = sbr.rel (%p226) target = $region44
      $region43: #{discriminator_forward.11} parent=39 // pred_region
        %s229 = smul.u32 2, %s15
        %p230 = scmp.lt.s32.totalorder %s229, 3
        %s231 = scalar_select %p230, %s229, 3
        %s232 = smul.addr %s231, 4
        %s233 = scalar_lea.vmem %s3, %s232
      $region44: #{discriminator_forward.11} parent=39 // pred_fallthru
        _
    $region40: #{discriminator_forward.11} parent=5 // pred_fallthru
      _
  $region6: #{discriminator_forward.11} parent=0 // loop_footer
    %s13 = sadd.s32 1, %s9
  $region7: #{discriminator_forward.11} parent=0 // loop_footer_branch
    %8 = sbr.rel target = $region3
  $region8: #{discriminator_forward.11} parent=0 // loop_exit
    _

// kernel: discriminator_forward.10
$region0: #{discriminator_forward.10}
  #allocation0 [shape = 'u32[]', space=smem, size = 0x4, offset = 0x4, fixed_abs, tag = 'smem constant byte address 0x4 - core index']
  #allocation1 [shape = 'u32[144,128]{1,0:T(1,128)}', space=vmem, size = 0x12000, scoped, tag = 'internal scratch']
  %s0 = inlined_call_operand.vmem [shape: bf16[32,512], index: 0, kind: input, shape index: {}]
  %s1 = inlined_call_operand.vmem [shape: bf16[512,128], index: 1, kind: input, shape index: {}]
  %s2 = inlined_call_operand.vmem [shape: f32[1,128], index: 2, kind: input, shape index: {}]
  %s3 = inlined_call_operand.vmem [shape: bf16[32,128], index: 3, kind: output, shape index: {0}]
  %s4 = inlined_call_operand.vmem [shape: f32[2,2,128], index: 4, kind: output, shape index: {1}]
  %5 = xla_tuple %s3, %s4
  %s6 = sld [smem:[#allocation0]]
  $region53: #{discriminator_forward.10} parent=0
    _
  %s8 = ssub.s32 1, %s6
  %s9 = scalar_select 0, %s8, %s6
  loop: start=0, step=1, limit=4
  $region2: #{discriminator_forward.10} parent=0 // loop_pre_header
    _
  $region3: #{discriminator_forward.10} parent=0 // loop_header
    %s11 = sphi 0, %s15
    %p12 = scmp.ge.s32.totalorder %s11, 4
    %s18 = sphi 0, %s30
    %s19 = sphi 0, %s26
    %s20 = sphi 0, %s18
    %s21 = sphi 0, %s19
    %s22 = sphi 0, %s20
    %s23 = sphi 0, %s21
    %s33 = sphi 0, %s35
    %s36 = sphi 0, %s33
    %s37 = sphi 0, %s36
    %s53 = sphi 0, %s37
    %s59 = sphi 0, %s61
    %s62 = sphi 0, %s59
    %s63 = sphi 0, %s62
    %s79 = sphi 0, %s63
    %s85 = sphi 0, %s87
    %s88 = sphi 0, %s85
    %s89 = sphi 0, %s88
    %s105 = sphi 0, %s89
    %s113 = sphi 0, %s115
    %s116 = sphi 0, %s113
    %s117 = sphi 0, %s116
    %s133 = sphi 0, %s117
    %s141 = sphi 0, %s143
    %s144 = sphi 0, %s141
    %s145 = sphi 0, %s144
    %s161 = sphi 0, %s145
  $region4: #{discriminator_forward.10} parent=0 // loop_header_branch
    %14 = sbr.rel (%p12) target = $region8
  $region5: #{discriminator_forward.10} parent=0 // loop_body
    %s16 = ssub.s32 %s11, 1
    %s17 = ssub.s32 %s11, 2
    %s24 = sadd.s32 1, %s19
    %p25 = scmp.ge.s32.totalorder %s24, 2
    %s26 = scalar_select %p25, 0, %s24
    %s27 = sadd.s32 1, %s18
    %s28 = scalar_select %p25, %s27, %s18
    %p29 = scmp.ge.s32.totalorder %s28, 1
    %s30 = scalar_select %p29, 0, %s28
    %s31 = ssub.s32 %s19, %s26
    %p32 = scmp.eq.s32.totalorder %s31, 0
    %s34 = sadd.s32 %s33, 1
    %s35 = scalar_select %p32, %s33, %s34
    %p38 = pneg %p32
    %p39 = scmp.eq.s32.totalorder %s11, 1
    %p40 = por %p38, %p39
    %p41 = scmp.ne.s32.totalorder %s33, %s36
    %p42 = scmp.eq.s32.totalorder %s11, 0
    %p43 = por %p41, %p42
    %p44 = scmp.ne.s32.totalorder %s33, %s36
    %p45 = scmp.eq.s32.totalorder %s16, 1
    %p46 = por %p44, %p45
    %p47 = scmp.ne.s32.totalorder %s36, %s37
    %p48 = scmp.eq.s32.totalorder %s16, 0
    %p49 = por %p47, %p48
    %p50 = scmp.ne.s32.totalorder %s36, %s37
    %p51 = scmp.eq.s32.totalorder %s17, 1
    %p52 = por %p50, %p51
    %p54 = scmp.ne.s32.totalorder %s37, %s53
    %p55 = scmp.eq.s32.totalorder %s17, 0
    %p56 = por %p54, %p55
    %s57 = ssub.s32 %s18, %s30
    %p58 = scmp.eq.s32.totalorder %s57, 0
    %s60 = sadd.s32 %s59, 1
    %s61 = scalar_select %p58, %s59, %s60
    %p64 = pneg %p58
    %p65 = scmp.eq.s32.totalorder %s11, 1
    %p66 = por %p64, %p65
    %p67 = scmp.ne.s32.totalorder %s59, %s62
    %p68 = scmp.eq.s32.totalorder %s11, 0
    %p69 = por %p67, %p68
    %p70 = scmp.ne.s32.totalorder %s59, %s62
    %p71 = scmp.eq.s32.totalorder %s16, 1
    %p72 = por %p70, %p71
    %p73 = scmp.ne.s32.totalorder %s62, %s63
    %p74 = scmp.eq.s32.totalorder %s16, 0
    %p75 = por %p73, %p74
    %p76 = scmp.ne.s32.totalorder %s62, %s63
    %p77 = scmp.eq.s32.totalorder %s17, 1
    %p78 = por %p76, %p77
    %p80 = scmp.ne.s32.totalorder %s63, %s79
    %p81 = scmp.eq.s32.totalorder %s17, 0
    %p82 = por %p80, %p81
    %s83 = ssub.s32 %s18, %s30
    %p84 = scmp.eq.s32.totalorder %s83, 0
    %s86 = sadd.s32 %s85, 1
    %s87 = scalar_select %p84, %s85, %s86
    %p90 = pneg %p84
    %p91 = scmp.eq.s32.totalorder %s11, 1
    %p92 = por %p90, %p91
    %p93 = scmp.ne.s32.totalorder %s85, %s88
    %p94 = scmp.eq.s32.totalorder %s11, 0
    %p95 = por %p93, %p94
    %p96 = scmp.ne.s32.totalorder %s85, %s88
    %p97 = scmp.eq.s32.totalorder %s16, 1
    %p98 = por %p96, %p97
    %p99 = scmp.ne.s32.totalorder %s88, %s89
    %p100 = scmp.eq.s32.totalorder %s16, 0
    %p101 = por %p99, %p100
    %p102 = scmp.ne.s32.totalorder %s88, %s89
    %p103 = scmp.eq.s32.totalorder %s17, 1
    %p104 = por %p102, %p103
    %p106 = scmp.ne.s32.totalorder %s89, %s105
    %p107 = scmp.eq.s32.totalorder %s17, 0
    %p108 = por %p106, %p107
    %s109 = ssub.s32 %s19, %s26
    %s110 = ssub.s32 %s18, %s30
    %s111 = sor.u32 %s109, %s110
    %p112 = scmp.eq.s32.totalorder %s111, 0
    %s114 = sadd.s32 %s113, 1
    %s115 = scalar_select %p112, %s113, %s114
    %p118 = pneg %p112
    %p119 = scmp.eq.s32.totalorder %s11, 1
    %p120 = por %p118, %p119
    %p121 = scmp.ne.s32.totalorder %s113, %s116
    %p122 = scmp.eq.s32.totalorder %s11, 0
    %p123 = por %p121, %p122
    %p124 = scmp.ne.s32.totalorder %s113, %s116
    %p125 = scmp.eq.s32.totalorder %s16, 1
    %p126 = por %p124, %p125
    %p127 = scmp.ne.s32.totalorder %s116, %s117
    %p128 = scmp.eq.s32.totalorder %s16, 0
    %p129 = por %p127, %p128
    %p130 = scmp.ne.s32.totalorder %s116, %s117
    %p131 = scmp.eq.s32.totalorder %s17, 1
    %p132 = por %p130, %p131
    %p134 = scmp.ne.s32.totalorder %s117, %s133
    %p135 = scmp.eq.s32.totalorder %s17, 0
    %p136 = por %p134, %p135
    %s137 = ssub.s32 %s19, %s26
    %s138 = ssub.s32 %s18, %s30
    %s139 = sor.u32 %s137, %s138
    %p140 = scmp.eq.s32.totalorder %s139, 0
    %s142 = sadd.s32 %s141, 1
    %s143 = scalar_select %p140, %s141, %s142
    %p146 = pneg %p140
    %p147 = scmp.eq.s32.totalorder %s11, 1
    %p148 = por %p146, %p147
    %p149 = scmp.ne.s32.totalorder %s141, %s144
    %p150 = scmp.eq.s32.totalorder %s11, 0
    %p151 = por %p149, %p150
    %p152 = scmp.ne.s32.totalorder %s141, %s144
    %p153 = scmp.eq.s32.totalorder %s16, 1
    %p154 = por %p152, %p153
    %p155 = scmp.ne.s32.totalorder %s144, %s145
    %p156 = scmp.eq.s32.totalorder %s16, 0
    %p157 = por %p155, %p156
    %p158 = scmp.ne.s32.totalorder %s144, %s145
    %p159 = scmp.eq.s32.totalorder %s17, 1
    %p160 = por %p158, %p159
    %p162 = scmp.ne.s32.totalorder %s145, %s161
    %p163 = scmp.eq.s32.totalorder %s17, 0
    %p164 = por %p162, %p163
    %p165 = scmp.le.s32.totalorder 1, %s11
    %p166 = scmp.lt.s32.totalorder %s11, 3
    %p167 = pnand %p165, %p166
    %p168 = pneg %p167
    // Predicated region
    $region9: #{discriminator_forward.10} parent=5 // pred_check
      _
    $region10: #{discriminator_forward.10} parent=5 // pred_check_branch
      %170 = sbr.rel (%p167) target = $region12
    $region11: #{discriminator_forward.10} parent=5 // pred_region
      %s171 = ssub.s32 %s11, 1
      // Predicated region
      $region13: #{discriminator_forward.10} parent=11 // pred_check
        %p172 = pneg %p75
      $region14: #{discriminator_forward.10} parent=11 // pred_check_branch
        %174 = sbr.rel (%p172) target = $region16
      $region15: #{discriminator_forward.10} parent=11 // pred_region
        %p175 = scmp.lt.s32.totalorder %s20, 0
        %s176 = scalar_select %p175, %s20, 0
        %s177 = smul.addr %s176, 4
        %s178 = scalar_lea.vmem %s1, %s177
      $region16: #{discriminator_forward.10} parent=11 // pred_fallthru
        _
      // Predicated region
      $region17: #{discriminator_forward.10} parent=11 // pred_check
        %p179 = pneg %p101
      $region18: #{discriminator_forward.10} parent=11 // pred_check_branch
        %181 = sbr.rel (%p179) target = $region20
      $region19: #{discriminator_forward.10} parent=11 // pred_region
        %p182 = scmp.lt.s32.totalorder %s20, 0
        %s183 = scalar_select %p182, %s20, 0
        %s184 = scalar_lea.vmem %s2, %s183
      $region20: #{discriminator_forward.10} parent=11 // pred_fallthru
        _
    $region12: #{discriminator_forward.10} parent=5 // pred_fallthru
      _
    %p185 = scmp.lt.s32.totalorder %s11, 2
    // Predicated region
    $region21: #{discriminator_forward.10} parent=5 // pred_check
      %p186 = pneg %p185
    $region22: #{discriminator_forward.10} parent=5 // pred_check_branch
      %188 = sbr.rel (%p186) target = $region24
    $region23: #{discriminator_forward.10} parent=5 // pred_region
      // Predicated region
      $region25: #{discriminator_forward.10} parent=23 // pred_check
        %p189 = pneg %p43
      $region26: #{discriminator_forward.10} parent=23 // pred_check_branch
        %191 = sbr.rel (%p189) target = $region28
      $region27: #{discriminator_forward.10} parent=23 // pred_region
        %s192 = smul.u32 2, %s19
        %p193 = scmp.lt.s32.totalorder %s192, 3
        %s194 = scalar_select %p193, %s192, 3
        %s195 = smul.addr %s194, 4
        %s196 = smul.addr %s195, 4
        %s197 = scalar_lea.vmem %s0, %s196
        %s198 = smul.u32 2, %s19
      $region28: #{discriminator_forward.10} parent=23 // pred_fallthru
        _
    $region24: #{discriminator_forward.10} parent=5 // pred_fallthru
      _
    %p199 = scmp.le.s32.totalorder 1, %s11
    %p200 = scmp.lt.s32.totalorder %s11, 3
    %p201 = pnand %p199, %p200
    %p202 = pneg %p201
    // Predicated region
    $region29: #{discriminator_forward.10} parent=5 // pred_check
      _
    $region30: #{discriminator_forward.10} parent=5 // pred_check_branch
      %204 = sbr.rel (%p201) target = $region32
    $region31: #{discriminator_forward.10} parent=5 // pred_region
      %s205 = ssub.s32 %s11, 1
      %s206 = smul.u32 2, %s21
      %p207 = scmp.lt.s32.totalorder %s206, 3
      %s208 = scalar_select %p207, %s206, 3
      %s209 = smul.addr %s208, 4
      %s210 = smul.addr %s209, 4
      %s211 = scalar_lea.vmem %s0, %s210
      %p212 = pneg %p49
      %p213 = pneg %p46
      %p214 = scmp.lt.s32.totalorder %s20, 0
      %s215 = scalar_select %p214, %s20, 0
      %s216 = smul.addr %s215, 4
      %s217 = scalar_lea.vmem %s1, %s216
      %p218 = pneg %p75
      %p219 = pneg %p72
      %p220 = scmp.lt.s32.totalorder %s20, 0
      %s221 = scalar_select %p220, %s20, 0
      %s222 = scalar_lea.vmem %s2, %s221
      %p223 = pneg %p101
      %p224 = pneg %p98
      %p225 = pneg %p129
      %p226 = pneg %p126
      %s227 = smul.u32 2, %s21
      %p228 = scmp.lt.s32.totalorder %s227, 3
      %s229 = scalar_select %p228, %s227, 3
      %p230 = scmp.lt.s32.totalorder %s20, 0
      %s231 = scalar_select %p230, %s20, 0
      %s232 = sadd.s32 %s231, %s229
      %s233 = smul.addr %s232, 4
      %s234 = scalar_lea.vmem %s3, %s233
      %p235 = pneg %p157
      %p236 = pneg %p154
      %p237 = scmp.lt.s32.totalorder %s21, 1
      %s238 = scalar_select %p237, %s21, 1
      %p239 = scmp.lt.s32.totalorder %s20, 0
      %s240 = scalar_select %p239, %s20, 0
      %s241 = sadd.s32 %s240, %s238
      %s242 = smul.addr %s241, 2
      %s243 = scalar_lea.vmem %s4, %s242
      %s244 = smul.u32 2, %s21
      %p245 = scmp.lt.s32.totalorder %s244, 3
      %s246 = scalar_select %p245, %s244, 3
      %s247 = smul.addr %s246, 4
      %s248 = smul.addr %s247, 4
      %s249 = scalar_lea.vmem %s0, %s248
      %s250 = smul.u32 2, %s21
      %p251 = scmp.lt.s32.totalorder %s20, 0
      %s252 = scalar_select %p251, %s20, 0
      %s253 = smul.addr %s252, 4
      %s254 = scalar_lea.vmem %s1, %s253
      %p255 = scmp.lt.s32.totalorder %s20, 0
      %s256 = scalar_select %p255, %s20, 0
      %s257 = scalar_lea.vmem %s2, %s256
      %s258 = smul.u32 2, %s21
      %p259 = scmp.lt.s32.totalorder %s258, 3
      %s260 = scalar_select %p259, %s258, 3
      %p261 = scmp.lt.s32.totalorder %s20, 0
      %s262 = scalar_select %p261, %s20, 0
      %s263 = sadd.s32 %s262, %s260
      %s264 = smul.addr %s263, 4
      %s265 = scalar_lea.vmem %s3, %s264
      %s266 = smul.u32 2, %s21
      %p267 = scmp.lt.s32.totalorder %s21, 1
      %s268 = scalar_select %p267, %s21, 1
      %p269 = scmp.lt.s32.totalorder %s20, 0
      %s270 = scalar_select %p269, %s20, 0
      %s271 = sadd.s32 %s270, %s268
      %s272 = smul.addr %s271, 2
      %s273 = scalar_lea.vmem %s4, %s272
      %v275 = vld [vmem:[%s249] sm:$0xff]
      %v276 = vld [vmem:[%s249 + $0x8] sm:$0xff]
      %v277 = vld [vmem:[%s249 + $0x10] sm:$0xff]
      %v278 = vld [vmem:[%s249 + $0x18] sm:$0xff]
      %v279 = vld [vmem:[%s254] sm:$0xf]
      %v280 = vld [vmem:[%s254 + $0x4] sm:$0xf]
      %v281 = vld [vmem:[%s254 + $0x8] sm:$0xf]
      %v282 = vld [vmem:[%s254 + $0xc] sm:$0xf]
      %v283 = vld [vmem:[%s254 + $0x10] sm:$0xf]
      %v284 = vld [vmem:[%s254 + $0x14] sm:$0xf]
      %v285 = vld [vmem:[%s254 + $0x18] sm:$0xf]
      %v286 = vld [vmem:[%s254 + $0x1c] sm:$0xf]
      %v287 = vld [vmem:[%s254 + $0x20] sm:$0xf]
      %v288 = vld [vmem:[%s254 + $0x24] sm:$0xf]
      %v289 = vld [vmem:[%s254 + $0x28] sm:$0xf]
      %v290 = vld [vmem:[%s254 + $0x2c] sm:$0xf]
      %v291 = vld [vmem:[%s254 + $0x30] sm:$0xf]
      %v292 = vld [vmem:[%s254 + $0x34] sm:$0xf]
      %v293 = vld [vmem:[%s254 + $0x38] sm:$0xf]
      %v294 = vld [vmem:[%s254 + $0x3c] sm:$0xf]
      %v295 = vld [vmem:[%s254 + $0x40] sm:$0xf]
      %v296 = vld [vmem:[%s254 + $0x44] sm:$0xf]
      %v297 = vld [vmem:[%s254 + $0x48] sm:$0xf]
      %v298 = vld [vmem:[%s254 + $0x4c] sm:$0xf]
      %v299 = vld [vmem:[%s254 + $0x50] sm:$0xf]
      %v300 = vld [vmem:[%s254 + $0x54] sm:$0xf]
      %v301 = vld [vmem:[%s254 + $0x58] sm:$0xf]
      %v302 = vld [vmem:[%s254 + $0x5c] sm:$0xf]
      %v303 = vld [vmem:[%s254 + $0x60] sm:$0xf]
      %v304 = vld [vmem:[%s254 + $0x64] sm:$0xf]
      %v305 = vld [vmem:[%s254 + $0x68] sm:$0xf]
      %v306 = vld [vmem:[%s254 + $0x6c] sm:$0xf]
      %v307 = vld [vmem:[%s254 + $0x70] sm:$0xf]
      %v308 = vld [vmem:[%s254 + $0x74] sm:$0xf]
      %v309 = vld [vmem:[%s254 + $0x78] sm:$0xf]
      %v310 = vld [vmem:[%s254 + $0x7c] sm:$0xf]
      %v311 = vld [vmem:[%s254 + $0x80] sm:$0xf]
      %v312 = vld [vmem:[%s254 + $0x84] sm:$0xf]
      %v313 = vld [vmem:[%s254 + $0x88] sm:$0xf]
      %v314 = vld [vmem:[%s254 + $0x8c] sm:$0xf]
      %v315 = vld [vmem:[%s254 + $0x90] sm:$0xf]
      %v316 = vld [vmem:[%s254 + $0x94] sm:$0xf]
      %v317 = vld [vmem:[%s254 + $0x98] sm:$0xf]
      %v318 = vld [vmem:[%s254 + $0x9c] sm:$0xf]
      %v319 = vld [vmem:[%s254 + $0xa0] sm:$0xf]
      %v320 = vld [vmem:[%s254 + $0xa4] sm:$0xf]
      %v321 = vld [vmem:[%s254 + $0xa8] sm:$0xf]
      %v322 = vld [vmem:[%s254 + $0xac] sm:$0xf]
      %v323 = vld [vmem:[%s254 + $0xb0] sm:$0xf]
      %v324 = vld [vmem:[%s254 + $0xb4] sm:$0xf]
      %v325 = vld [vmem:[%s254 + $0xb8] sm:$0xf]
      %v326 = vld [vmem:[%s254 + $0xbc] sm:$0xf]
      %v327 = vld [vmem:[%s254 + $0xc0] sm:$0xf]
      %v328 = vld [vmem:[%s254 + $0xc4] sm:$0xf]
      %v329 = vld [vmem:[%s254 + $0xc8] sm:$0xf]
      %v330 = vld [vmem:[%s254 + $0xcc] sm:$0xf]
      %v331 = vld [vmem:[%s254 + $0xd0] sm:$0xf]
      %v332 = vld [vmem:[%s254 + $0xd4] sm:$0xf]
      %v333 = vld [vmem:[%s254 + $0xd8] sm:$0xf]
      %v334 = vld [vmem:[%s254 + $0xdc] sm:$0xf]
      %v335 = vld [vmem:[%s254 + $0xe0] sm:$0xf]
      %v336 = vld [vmem:[%s254 + $0xe4] sm:$0xf]
      %v337 = vld [vmem:[%s254 + $0xe8] sm:$0xf]
      %v338 = vld [vmem:[%s254 + $0xec] sm:$0xf]
      %v339 = vld [vmem:[%s254 + $0xf0] sm:$0xf]
      %v340 = vld [vmem:[%s254 + $0xf4] sm:$0xf]
      %v341 = vld [vmem:[%s254 + $0xf8] sm:$0xf]
      %v342 = vld [vmem:[%s254 + $0xfc] sm:$0xf]
      %v343 = vld [vmem:[%s257] sm:$0x1]
      %v345 = vlaneseq
      %v346 = vshrl.u32 %v345, 7
      %v347 = vsub.s32 0, %v346
      %v348 = vrot.slane %v343, %v347
      %v354 = vunpack.c.l.b16 %v275
      %v355 = vunpack.c.h.b16 %v275
      %v356 = vunpack.c.l.b16 %v276
      %v357 = vunpack.c.h.b16 %v276
      %v358 = vunpack.c.l.b16 %v277
      %v359 = vunpack.c.h.b16 %v277
      %v360 = vunpack.c.l.b16 %v278
      %v361 = vunpack.c.h.b16 %v278
      %v362 = vpack.c.b16 %v358, %v354
      %v363 = vpack.c.b16 %v359, %v355
      %v364 = vpack.c.b16 %v360, %v356
      %v365 = vpack.c.b16 %v361, %v357
      %v434 = vunpack.c.l.b16 %v279
      %v435 = vunpack.c.l.b16 %v280
      %v436 = vunpack.c.l.b16 %v281
      %v437 = vunpack.c.l.b16 %v282
      %v438 = vunpack.c.l.b16 %v283
      %v439 = vunpack.c.l.b16 %v284
      %v440 = vunpack.c.l.b16 %v285
      %v441 = vunpack.c.l.b16 %v286
      %v442 = vunpack.c.l.b16 %v287
      %v443 = vunpack.c.l.b16 %v288
      %v444 = vunpack.c.l.b16 %v289
      %v445 = vunpack.c.l.b16 %v290
      %v446 = vunpack.c.l.b16 %v291
      %v447 = vunpack.c.l.b16 %v292
      %v448 = vunpack.c.l.b16 %v293
      %v449 = vunpack.c.l.b16 %v294
      %v450 = vunpack.c.l.b16 %v295
      %v451 = vunpack.c.l.b16 %v296
      %v452 = vunpack.c.l.b16 %v297
      %v453 = vunpack.c.l.b16 %v298
      %v454 = vunpack.c.l.b16 %v299
      %v455 = vunpack.c.l.b16 %v300
      %v456 = vunpack.c.l.b16 %v301
      %v457 = vunpack.c.l.b16 %v302
      %v458 = vunpack.c.l.b16 %v303
      %v459 = vunpack.c.l.b16 %v304
      %v460 = vunpack.c.l.b16 %v305
      %v461 = vunpack.c.l.b16 %v306
      %v462 = vunpack.c.l.b16 %v307
      %v463 = vunpack.c.l.b16 %v308
      %v464 = vunpack.c.l.b16 %v309
      %v465 = vunpack.c.l.b16 %v310
      %v466 = vunpack.c.l.b16 %v311
      %v467 = vunpack.c.l.b16 %v312
      %v468 = vunpack.c.l.b16 %v313
      %v469 = vunpack.c.l.b16 %v314
      %v470 = vunpack.c.l.b16 %v315
      %v471 = vunpack.c.l.b16 %v316
      %v472 = vunpack.c.l.b16 %v317
      %v473 = vunpack.c.l.b16 %v318
      %v474 = vunpack.c.l.b16 %v319
      %v475 = vunpack.c.l.b16 %v320
      %v476 = vunpack.c.l.b16 %v321
      %v477 = vunpack.c.l.b16 %v322
      %v478 = vunpack.c.l.b16 %v323
      %v479 = vunpack.c.l.b16 %v324
      %v480 = vunpack.c.l.b16 %v325
      %v481 = vunpack.c.l.b16 %v326
      %v482 = vunpack.c.l.b16 %v327
      %v483 = vunpack.c.l.b16 %v328
      %v484 = vunpack.c.l.b16 %v329
      %v485 = vunpack.c.l.b16 %v330
      %v486 = vunpack.c.l.b16 %v331
      %v487 = vunpack.c.l.b16 %v332
      %v488 = vunpack.c.l.b16 %v333
      %v489 = vunpack.c.l.b16 %v334
      %v490 = vunpack.c.l.b16 %v335
      %v491 = vunpack.c.l.b16 %v336
      %v492 = vunpack.c.l.b16 %v337
      %v493 = vunpack.c.l.b16 %v338
      %v494 = vunpack.c.l.b16 %v339
      %v495 = vunpack.c.l.b16 %v340
      %v496 = vunpack.c.l.b16 %v341
      %v497 = vunpack.c.l.b16 %v342
      %v498 = vpack.c.b16 %v435, %v434
      %v499 = vpack.c.b16 %v437, %v436
      %v500 = vpack.c.b16 %v439, %v438
      %v501 = vpack.c.b16 %v441, %v440
      %v502 = vpack.c.b16 %v443, %v442
      %v503 = vpack.c.b16 %v445, %v444
      %v504 = vpack.c.b16 %v447, %v446
      %v505 = vpack.c.b16 %v449, %v448
      %v506 = vpack.c.b16 %v451, %v450
      %v507 = vpack.c.b16 %v453, %v452
      %v508 = vpack.c.b16 %v455, %v454
      %v509 = vpack.c.b16 %v457, %v456
      %v510 = vpack.c.b16 %v459, %v458
      %v511 = vpack.c.b16 %v461, %v460
      %v512 = vpack.c.b16 %v463, %v462
      %v513 = vpack.c.b16 %v465, %v464
      %v514 = vpack.c.b16 %v467, %v466
      %v515 = vpack.c.b16 %v469, %v468
      %v516 = vpack.c.b16 %v471, %v470
      %v517 = vpack.c.b16 %v473, %v472
      %v518 = vpack.c.b16 %v475, %v474
      %v519 = vpack.c.b16 %v477, %v476
      %v520 = vpack.c.b16 %v479, %v478
      %v521 = vpack.c.b16 %v481, %v480
      %v522 = vpack.c.b16 %v483, %v482
      %v523 = vpack.c.b16 %v485, %v484
      %v524 = vpack.c.b16 %v487, %v486
      %v525 = vpack.c.b16 %v489, %v488
      %v526 = vpack.c.b16 %v491, %v490
      %v527 = vpack.c.b16 %v493, %v492
      %v528 = vpack.c.b16 %v495, %v494
      %v529 = vpack.c.b16 %v497, %v496
      %562 = vmatprep.subr.bf16.mxu0 0
      %563 = vmatpush1.bf16.msra.mxu0 %v498
      %564 = vmatprep.subr.bf16.mxu0 0
      %565 = vmatpush1.bf16.msra.mxu0 %v499
      %566 = vmatprep.subr.bf16.mxu0 0
      %567 = vmatpush1.bf16.msra.mxu0 %v500
      %568 = vmatprep.subr.bf16.mxu0 0
      %569 = vmatpush1.bf16.msra.mxu0 %v501
      %570 = vmatprep.subr.bf16.mxu0 0
      %571 = vmatpush1.bf16.msra.mxu0 %v502
      %572 = vmatprep.subr.bf16.mxu0 0
      %573 = vmatpush1.bf16.msra.mxu0 %v503
      %574 = vmatprep.subr.bf16.mxu0 0
      %575 = vmatpush1.bf16.msra.mxu0 %v504
      %576 = vmatprep.subr.bf16.mxu0 0
      %577 = vmatpush1.bf16.msra.mxu0 %v505
      %578 = vmatprep.subr.bf16.mxu0 0
      %579 = vmatpush1.bf16.msra.mxu0 %v506
      %580 = vmatprep.subr.bf16.mxu0 0
      %581 = vmatpush1.bf16.msra.mxu0 %v507
      %582 = vmatprep.subr.bf16.mxu0 0
      %583 = vmatpush1.bf16.msra.mxu0 %v508
      %584 = vmatprep.subr.bf16.mxu0 0
      %585 = vmatpush1.bf16.msra.mxu0 %v509
      %586 = vmatprep.subr.bf16.mxu0 0
      %587 = vmatpush1.bf16.msra.mxu0 %v510
      %588 = vmatprep.subr.bf16.mxu0 0
      %589 = vmatpush1.bf16.msra.mxu0 %v511
      %590 = vmatprep.subr.bf16.mxu0 0
      %591 = vmatpush1.bf16.msra.mxu0 %v512
      %592 = vmatprep.subr.bf16.mxu0 0
      %593 = vmatpush1.bf16.msra.mxu0 %v513
      %594 = vmatprep.mubr.bf16.mxu0 %v363
      %595 = vmatmul.mubr.bf16.gmra.mrb[0].mxu0 %v362
      %v596 = vpop.f32.mrb[0].mxu0
      %v597 = vadd.f32 %v348, %v596
      %v598 = vpop.f32.mrb[0].mxu0
      %v599 = vpop.f32.mrb[0].mxu0
      %v600 = vadd.f32 %v348, %v599
      %v601 = vpop.f32.mrb[0].mxu0
      %602 = vdwg.mxu0
      %603 = vmatprep.subr.bf16.mxu0 0
      %604 = vmatpush1.bf16.msra.mxu0 %v514
      %605 = vmatprep.subr.bf16.mxu0 0
      %606 = vmatpush1.bf16.msra.mxu0 %v515
      %607 = vmatprep.subr.bf16.mxu0 0
      %608 = vmatpush1.bf16.msra.mxu0 %v516
      %609 = vmatprep.subr.bf16.mxu0 0
      %610 = vmatpush1.bf16.msra.mxu0 %v517
      %611 = vmatprep.subr.bf16.mxu0 0
      %612 = vmatpush1.bf16.msra.mxu0 %v518
      %613 = vmatprep.subr.bf16.mxu0 0
      %614 = vmatpush1.bf16.msra.mxu0 %v519
      %615 = vmatprep.subr.bf16.mxu0 0
      %616 = vmatpush1.bf16.msra.mxu0 %v520
      %617 = vmatprep.subr.bf16.mxu0 0
      %618 = vmatpush1.bf16.msra.mxu0 %v521
      %619 = vmatprep.subr.bf16.mxu0 0
      %620 = vmatpush1.bf16.msra.mxu0 %v522
      %621 = vmatprep.subr.bf16.mxu0 0
      %622 = vmatpush1.bf16.msra.mxu0 %v523
      %623 = vmatprep.subr.bf16.mxu0 0
      %624 = vmatpush1.bf16.msra.mxu0 %v524
      %625 = vmatprep.subr.bf16.mxu0 0
      %626 = vmatpush1.bf16.msra.mxu0 %v525
      %627 = vmatprep.subr.bf16.mxu0 0
      %628 = vmatpush1.bf16.msra.mxu0 %v526
      %629 = vmatprep.subr.bf16.mxu0 0
      %630 = vmatpush1.bf16.msra.mxu0 %v527
      %631 = vmatprep.subr.bf16.mxu0 0
      %632 = vmatpush1.bf16.msra.mxu0 %v528
      %633 = vmatprep.subr.bf16.mxu0 0
      %634 = vmatpush1.bf16.msra.mxu0 %v529
      %635 = vmatprep.mubr.bf16.mxu0 %v365
      %636 = vmatmul.mubr.bf16.gmra.mrb[0].mxu0 %v364
      %v637 = vpop.f32.mrb[0].mxu0
      %v638 = vadd.f32 %v597, %v637
      %v639 = vpop.f32.mrb[0].mxu0
      %v640 = vpop.f32.mrb[0].mxu0
      %v641 = vadd.f32 %v600, %v640
      %v642 = vpop.f32.mrb[0].mxu0
      %643 = vdwg.mxu0
      %v644 = vadd.f32 %v638, %v641
      %v645 = vrot.slane %v644, 4
      %v646 = vadd.f32 %v644, %v645
      %v647 = vrot.slane %v646, 2
      %v648 = vadd.f32 %v646, %v647
      %v649 = vrot.slane %v648, 1
      %v650 = vadd.f32 %v648, %v649
      %651 = vst [vmem:[%s273] sm:$0x1] %v650
      %v652 = vmul.f32 %v638, %v638
      %v653 = vmul.f32 %v641, %v641
      %v654 = vadd.f32 %v652, %v653
      %v655 = vrot.slane %v654, 4
      %v656 = vadd.f32 %v654, %v655
      %v657 = vrot.slane %v656, 2
      %v658 = vadd.f32 %v656, %v657
      %v659 = vrot.slane %v658, 1
      %v660 = vadd.f32 %v658, %v659
      %661 = vst [vmem:[%s273 + $0x1] sm:$0x1] %v660
      %v662 = vpack.c.bf16 %v641, %v638
      %v664 = vunpack.c.l.b16 %v662
      %v665 = vunpack.c.h.b16 %v662
      %v666 = vpack.c.b16 %v664, %v664
      %v667 = vpack.c.b16 %v665, %v665
      %670 = vst [vmem:[%s265] sm:$0xf] %v666
      %671 = vst [vmem:[%s265 + $0x4] sm:$0xf] %v667
      %s672 = smul.u32 2, %s21
      %p673 = scmp.lt.s32.totalorder %s672, 3
      %s674 = scalar_select %p673, %s672, 3
      %p675 = scmp.lt.s32.totalorder %s20, 0
      %s676 = scalar_select %p675, %s20, 0
      %s677 = sadd.s32 %s676, %s674
      %s678 = smul.addr %s677, 4
      %s679 = scalar_lea.vmem %s3, %s678
      %p680 = scmp.lt.s32.totalorder %s21, 1
      %s681 = scalar_select %p680, %s21, 1
      %p682 = scmp.lt.s32.totalorder %s20, 0
      %s683 = scalar_select %p682, %s20, 0
      %s684 = sadd.s32 %s683, %s681
      %s685 = smul.addr %s684, 2
      %s686 = scalar_lea.vmem %s4, %s685
      // Predicated region
      $region33: #{discriminator_forward.10} parent=31 // pred_check
        %p687 = pneg %p126
      $region34: #{discriminator_forward.10} parent=31 // pred_check_branch
        %689 = sbr.rel (%p687) target = $region36
      $region35: #{discriminator_forward.10} parent=31 // pred_region
        %s690 = smul.u32 2, %s21
      $region36: #{discriminator_forward.10} parent=31 // pred_fallthru
        _
      // Predicated region
      $region37: #{discriminator_forward.10} parent=31 // pred_check
        %p691 = pneg %p154
      $region38: #{discriminator_forward.10} parent=31 // pred_check_branch
        %693 = sbr.rel (%p691) target = $region40
      $region39: #{discriminator_forward.10} parent=31 // pred_region
        _
      $region40: #{discriminator_forward.10} parent=31 // pred_fallthru
        _
    $region32: #{discriminator_forward.10} parent=5 // pred_fallthru
      _
    %p694 = scmp.le.s32.totalorder 2, %s11
    // Predicated region
    $region41: #{discriminator_forward.10} parent=5 // pred_check
      %p695 = pneg %p694
    $region42: #{discriminator_forward.10} parent=5 // pred_check_branch
      %697 = sbr.rel (%p695) target = $region44
    $region43: #{discriminator_forward.10} parent=5 // pred_region
      %s698 = ssub.s32 %s11, 2
      // Predicated region
      $region45: #{discriminator_forward.10} parent=43 // pred_check
        %p699 = pneg %p132
      $region46: #{discriminator_forward.10} parent=43 // pred_check_branch
        %701 = sbr.rel (%p699) target = $region48
      $region47: #{discriminator_forward.10} parent=43 // pred_region
        %s702 = smul.u32 2, %s23
        %p703 = scmp.lt.s32.totalorder %s702, 3
        %s704 = scalar_select %p703, %s702, 3
        %p705 = scmp.lt.s32.totalorder %s22, 0
        %s706 = scalar_select %p705, %s22, 0
        %s707 = sadd.s32 %s706, %s704
        %s708 = smul.addr %s707, 4
        %s709 = scalar_lea.vmem %s3, %s708
      $region48: #{discriminator_forward.10} parent=43 // pred_fallthru
        _
      // Predicated region
      $region49: #{discriminator_forward.10} parent=43 // pred_check
        %p710 = pneg %p160
      $region50: #{discriminator_forward.10} parent=43 // pred_check_branch
        %712 = sbr.rel (%p710) target = $region52
      $region51: #{discriminator_forward.10} parent=43 // pred_region
        %p713 = scmp.lt.s32.totalorder %s23, 1
        %s714 = scalar_select %p713, %s23, 1
        %p715 = scmp.lt.s32.totalorder %s22, 0
        %s716 = scalar_select %p715, %s22, 0
        %s717 = sadd.s32 %s716, %s714
        %s718 = smul.addr %s717, 2
        %s719 = scalar_lea.vmem %s4, %s718
      $region52: #{discriminator_forward.10} parent=43 // pred_fallthru
        _
    $region44: #{discriminator_forward.10} parent=5 // pred_fallthru
      _
  $region6: #{discriminator_forward.10} parent=0 // loop_footer
    %s15 = sadd.s32 1, %s11
  $region7: #{discriminator_forward.10} parent=0 // loop_footer_branch
    %10 = sbr.rel target = $region3
  $region8: #{discriminator_forward.10} parent=0 // loop_exit
    _

</llo_original>
